<compile_context>
chip_gen: v7x
topology: tpu7x:2x2x1
jax: 0.10.0
libtpu: 0.0.40
codegen_flags: <defaults>
</compile_context>

<pallas_src>
import functools
import math

import jax
import jax.numpy as jnp
from jax.experimental import pallas as pl
from jax.experimental.pallas import tpu as pltpu

_NEG_BIG = -1e30        # mask value for non-edges (must stay f32)
_VALID_THRESH = -1e29   # rows whose running max stays below this have no in-edges


def _round_up(x, m):
    return ((x + m - 1) // m) * m


def _bf16_exp_default():
    """Use bf16 exp only on chips with a bf16 EUP (v6e / v7x)."""
    try:
        kind = jax.devices()[0].device_kind.lower()
    except Exception:
        return False
    return ("v6" in kind) or ("v7" in kind)


def _gat_ln_kernel(cnt_ref,
                   er_ref, el_ref, zagg_ref, adj_ref,
                   bias_ref, gamma_ref, beta_ref,
                   o_ref,
                   m_sc, acc_sc,
                   *, num_heads, out_feats, negative_slope, ln_eps, exp_dtype):
    """One (dst-tile, src-tile) grid step of GATConv(num_heads) + LayerNorm.

    cnt_ref:  (n_i*n_k,)        i32  SMEM: edges per (dst,src) tile (prefetched)
    er_ref:   (H, TD, 1)        f32  dst-side attention terms (precomputed)
    el_ref:   (H, 1, TS)        f32  src-side attention terms (precomputed)
    zagg_ref: (H, TS, AGGW)     bf16 per-head [z_h | 1 | 0...] aggregation RHS
    adj_ref:  (TD, TS)          int8 adj[dst, src] != 0  <=>  edge src -> dst
    bias/gamma/beta: (1, H*D)   f32
    o_ref:    (TD, H*D)         f32  written only at the last src step
    m_sc:     (H, TD, 1)        f32  online-softmax running max
    acc_sc:   (H, TD, AGGW)     f32  running [weighted-feature | denom | 0] acc
    """
    i = pl.program_id(0)
    k = pl.program_id(1)
    nk = pl.num_programs(1)
    d = out_feats

    # ---- first src tile: reset accumulators -------------------------------
    @pl.when(k == 0)
    def _init():
        for hh in range(num_heads):
            m_sc[hh] = jnp.full(m_sc.shape[1:], -jnp.inf, jnp.float32)
            acc_sc[hh] = jnp.zeros(acc_sc.shape[1:], jnp.float32)

    # ---- online (flash-style) edge softmax + aggregation ------------------
    # Skip all compute for (dst,src) tiles that contain no edges.
    @pl.when(cnt_ref[i * nk + k] > 0)
    def _compute():
        mask = adj_ref[...] != 0                               # (TD, TS)
        neg_big = jnp.float32(_NEG_BIG)

        for hh in range(num_heads):
            e = er_ref[hh] + el_ref[hh]                        # (TD,1)+(1,TS)
            e = jnp.maximum(e, negative_slope * e)             # leaky relu
            e = jnp.where(mask, e, neg_big)

            m_prev = m_sc[hh]                                  # (TD, 1)
            m_new = jnp.maximum(m_prev, jnp.max(e, axis=1, keepdims=True))
            corr = jnp.exp(m_prev - m_new)                     # (TD, 1), f32
            # Subtraction stays f32 so masked entries saturate and underflow
            # to 0; fully isolated rows are zeroed by the validity fixup.
            p = jnp.exp((e - m_new).astype(exp_dtype))         # (TD, TS)
            p_mxu = p if p.dtype == jnp.bfloat16 else p.astype(jnp.bfloat16)

            # RHS column `d` is all-ones, so the softmax denominator increment
            # comes out of the same MXU matmul (column d of the result).
            acc_sc[hh] = corr * acc_sc[hh] + jnp.dot(
                p_mxu, zagg_ref[hh], preferred_element_type=jnp.float32)
            m_sc[hh] = m_new

    # ---- last src tile: normalize, bias, LayerNorm, lane-dense store ------
    @pl.when(k == nk - 1)
    def _finalize():
        cols = []
        for hh in range(num_heads):
            a = acc_sc[hh]                                     # (TD, AGGW)
            l = a[:, d:d + 1]                                  # denominator
            valid = m_sc[hh] > jnp.float32(_VALID_THRESH)      # row has in-edges
            inv_l = pl.reciprocal(jnp.maximum(l, jnp.float32(1e-20)),
                                  approx=True)                 # EUP slot
            scale = jnp.where(valid, inv_l, jnp.float32(0.0))
            cols.append(a[:, :d] * scale)                      # (TD, D)
        x = jnp.concatenate(cols, axis=-1) + bias_ref[...]     # (TD, H*D)

        mu = jnp.mean(x, axis=-1, keepdims=True)
        xc = x - mu
        var = jnp.mean(xc * xc, axis=-1, keepdims=True)
        inv = jax.lax.rsqrt(var + ln_eps)
        o_ref[...] = (xc * inv * gamma_ref[...] + beta_ref[...]).astype(o_ref.dtype)


def gat_layer_forward(h, w, attn_l, attn_r, bias, adj, gamma, beta,
                      *, num_heads, out_feats, negative_slope=0.2, ln_eps=1e-5,
                      tile_d=256, tile_s=512, bf16_exp=None):
    """GATConv(num_heads) + head-concat + LayerNorm over a dense adjacency.

    tile_d / tile_s should be powers of two (>= 8 / >= 128).
    """
    n, nfeat = h.shape
    nhid = num_heads * out_feats
    if bf16_exp is None:
        bf16_exp = _bf16_exp_default()
    exp_dtype = jnp.bfloat16 if bf16_exp else jnp.float32

    # ---- hoisted projection + attention scalars (one XLA matmul) ----------
    z = jnp.dot(h.astype(jnp.bfloat16), w.astype(jnp.bfloat16),
                preferred_element_type=jnp.float32)             # (N, H*D)
    zh = z.reshape(n, num_heads, out_feats)
    el = jnp.einsum('nhd,hd->hn', zh, attn_l.astype(jnp.float32))   # (H, N) src
    er = jnp.einsum('nhd,hd->hn', zh, attn_r.astype(jnp.float32))   # (H, N) dst

    # ---- tiling / padding --------------------------------------------------
    np2 = pl.next_power_of_2(max(n, 1))
    tile_d = int(min(tile_d, max(8, np2)))
    tile_s = int(min(tile_s, max(128, np2)))
    n_pad = _round_up(n, max(tile_d, tile_s) * tile_d * tile_s
                      // (tile_d * tile_s))  # = round_up(n, max) for pow2 tiles
    n_pad = _round_up(n_pad, tile_d * tile_s // math.gcd(tile_d, tile_s))
    n_i = n_pad // tile_d
    n_k = n_pad // tile_s
    pad = n_pad - n

    adj_i8 = (adj != 0).astype(jnp.int8)
    if pad:
        adj_i8 = jnp.pad(adj_i8, ((0, pad), (0, pad)))
        el = jnp.pad(el, ((0, 0), (0, pad)))
        er = jnp.pad(er, ((0, 0), (0, pad)))
    el = el.reshape(num_heads, 1, n_pad)
    er = er.reshape(num_heads, n_pad, 1)

    # Per-head aggregation RHS [z_h | 1 | 0...]: the ones column makes the
    # softmax row-sum free MXU filler (column `out_feats` of the accumulator).
    agg_w = _round_up(out_feats + 1, 128)
    zagg = jnp.zeros((num_heads, n_pad, agg_w), jnp.bfloat16)
    zagg = zagg.at[:, :n, :out_feats].set(
        jnp.transpose(zh, (1, 0, 2)).astype(jnp.bfloat16))
    zagg = zagg.at[:, :, out_feats].set(1.0)

    # Per-(dst-tile, src-tile) edge counts for block-sparsity skipping (SMEM).
    counts = adj_i8.reshape(n_i, tile_d, n_k, tile_s).astype(jnp.int32)
    counts = counts.sum(axis=(1, 3)).reshape(-1)               # (n_i * n_k,)

    bias2 = bias.reshape(1, nhid).astype(jnp.float32)
    gamma2 = gamma.reshape(1, nhid).astype(jnp.float32)
    beta2 = beta.reshape(1, nhid).astype(jnp.float32)

    kernel = functools.partial(
        _gat_ln_kernel,
        num_heads=num_heads, out_feats=out_feats,
        negative_slope=negative_slope, ln_eps=ln_eps, exp_dtype=exp_dtype)

    cost = pl.CostEstimate(
        flops=int(2 * n_pad * n_pad * num_heads * agg_w        # aggregation MXU
                  + 8 * num_heads * n_pad * n_pad),            # softmax VALU-ish
        transcendentals=int(num_heads * n_pad * n_pad),
        bytes_accessed=int(n_pad * n_pad                       # int8 adjacency
                           + n_i * num_heads * n_pad * agg_w * 2   # bf16 z stream
                           + 4 * n_pad * nhid))                # f32 output

    out = pl.pallas_call(
        kernel,
        out_shape=jax.ShapeDtypeStruct((n_pad, nhid), jnp.float32),
        grid_spec=pltpu.PrefetchScalarGridSpec(
            num_scalar_prefetch=1,
            grid=(n_i, n_k),
            in_specs=[
                pl.BlockSpec((num_heads, tile_d, 1),
                             lambda i, k, c: (0, i, 0)),        # er (dst terms)
                pl.BlockSpec((num_heads, 1, tile_s),
                             lambda i, k, c: (0, 0, k)),        # el (src terms)
                pl.BlockSpec((num_heads, tile_s, agg_w),
                             lambda i, k, c: (0, k, 0)),        # z agg RHS
                pl.BlockSpec((tile_d, tile_s),
                             lambda i, k, c: (i, k)),           # adjacency int8
                pl.BlockSpec((1, nhid), lambda i, k, c: (0, 0)),  # bias
                pl.BlockSpec((1, nhid), lambda i, k, c: (0, 0)),  # gamma
                pl.BlockSpec((1, nhid), lambda i, k, c: (0, 0)),  # beta
            ],
            out_specs=pl.BlockSpec((tile_d, nhid), lambda i, k, c: (i, 0)),
            scratch_shapes=[
                pltpu.VMEM((num_heads, tile_d, 1), jnp.float32),      # running max
                pltpu.VMEM((num_heads, tile_d, agg_w), jnp.float32),  # acc (+denom)
            ]),
        compiler_params=pltpu.CompilerParams(
            dimension_semantics=("parallel", "arbitrary")),
        cost_estimate=cost,
    )(counts, er, el, zagg, adj_i8, bias2, gamma2, beta2)

    return out[:n]


def gat_layer_reference(h, w, attn_l, attn_r, bias, adj, gamma, beta,
                        *, num_heads, out_feats, negative_slope=0.2, ln_eps=1e-5):
    """Pure-JAX reference with matching bf16 matmul precision."""
    z = jnp.dot(h.astype(jnp.bfloat16), w.astype(jnp.bfloat16),
                preferred_element_type=jnp.float32)           # (N, H*D)
    mask = adj != 0
    outs = []
    for hh in range(num_heads):
        zh = z[:, hh * out_feats:(hh + 1) * out_feats]
        el = jnp.sum(zh * attn_l[hh][None, :], axis=-1, keepdims=True)  # src term
        er = jnp.sum(zh * attn_r[hh][None, :], axis=-1, keepdims=True)  # dst term
        e = er + el.T                                          # e[dst, src]
        e = jnp.where(e >= 0.0, e, negative_slope * e)
        e = jnp.where(mask, e, _NEG_BIG)
        m = jnp.max(e, axis=1, keepdims=True)
        p = jnp.where(mask, jnp.exp(e - m), 0.0)
        denom = jnp.maximum(jnp.sum(p, axis=1, keepdims=True), 1e-20)
        alpha = (p / denom).astype(jnp.bfloat16)
        outs.append(jnp.dot(alpha, zh.astype(jnp.bfloat16),
                            preferred_element_type=jnp.float32))
    x = jnp.concatenate(outs, axis=-1) + bias[None, :]
    mu = jnp.mean(x, axis=-1, keepdims=True)
    xc = x - mu
    var = jnp.mean(xc * xc, axis=-1, keepdims=True)
    return xc * jax.lax.rsqrt(var + ln_eps) * gamma[None, :] + beta[None, :]


if __name__ == "__main__":
    # GATConv(nfeat, nhid // 2, num_heads=2) followed by LayerNorm(nhid).
    # nhid = 128 keeps output stores lane-dense; tile_d=128 keeps >= 2 dst tiles
    # (v7x megacore), tile_s=256 exercises the online-softmax reduction.
    N = 512
    nfeat = 64
    nhid = 128
    num_heads = 2
    out_feats = nhid // num_heads   # 64

    key = jax.random.PRNGKey(0)
    k_h, k_w, k_al, k_ar, k_adj = jax.random.split(key, 5)

    h = jax.random.normal(k_h, (N, nfeat), dtype=jnp.float32)
    w = jax.random.normal(k_w, (nfeat, nhid), dtype=jnp.float32) * 0.1
    attn_l = jax.random.normal(k_al, (num_heads, out_feats), dtype=jnp.float32) * 0.1
    attn_r = jax.random.normal(k_ar, (num_heads, out_feats), dtype=jnp.float32) * 0.1
    bias = jnp.zeros((nhid,), dtype=jnp.float32)      # GATConv bias init
    gamma = jnp.ones((nhid,), dtype=jnp.float32)      # LayerNorm defaults
    beta = jnp.zeros((nhid,), dtype=jnp.float32)

    # Dense adjacency adj[dst, src]; include a zero in-degree node
    # (allow_zero_in_degree=True -> that row aggregates to zero + bias).
    adj = (jax.random.uniform(k_adj, (N, N)) < 0.05).astype(jnp.float32)
    adj = adj.at[0, :].set(0.0)

    out = gat_layer_forward(h, w, attn_l, attn_r, bias, adj, gamma, beta,
                            num_heads=num_heads, out_feats=out_feats,
                            tile_d=128, tile_s=256)
    out = jax.block_until_ready(out)

    ref = gat_layer_reference(h, w, attn_l, attn_r, bias, adj, gamma, beta,
                              num_heads=num_heads, out_feats=out_feats)
    err = float(jnp.max(jnp.abs(out - ref)))

    assert out.shape == (N, nhid)
    assert bool(jnp.all(jnp.isfinite(out)))
    assert err < 0.25, f"max abs error vs reference: {err}"
    print("KERNEL_OK")
</pallas_src>

<mosaic_0001>
module attributes {stable_mosaic.version = 11 : i64} {
  func.func @_gat_ln_kernel(%arg0: i32, %arg1: i32, %arg2: memref<8xi32, #tpu.memory_space<smem>>, %arg3: memref<2x128x1xf32, #tpu.memory_space<vmem>>, %arg4: memref<2x1x256xf32, #tpu.memory_space<vmem>>, %arg5: memref<2x256x128xbf16, #tpu.memory_space<vmem>>, %arg6: memref<128x256xi8, #tpu.memory_space<vmem>>, %arg7: memref<1x128xf32, #tpu.memory_space<vmem>>, %arg8: memref<1x128xf32, #tpu.memory_space<vmem>>, %arg9: memref<1x128xf32, #tpu.memory_space<vmem>>, %arg10: memref<128x128xf32, #tpu.memory_space<vmem>>, %arg11: memref<2x128x1xf32, #tpu.memory_space<vmem>>, %arg12: memref<2x128x128xf32, #tpu.memory_space<vmem>>) attributes {dimension_semantics = [#tpu.dimension_semantics<parallel>, #tpu.dimension_semantics<arbitrary>], iteration_bounds = array<i64: 4, 2>, scalar_prefetch = 1 : i64, scratch_operands = 2 : i64, tpu.core_type = #tpu.core_type<tc>, window_params = [{transform_indices = @transform_0, window_bounds = array<i64: 2, 128, 1>}, {transform_indices = @transform_1, window_bounds = array<i64: 2, 1, 256>}, {transform_indices = @transform_2, window_bounds = array<i64: 2, 256, 128>}, {transform_indices = @transform_3, window_bounds = array<i64: 128, 256>}, {pipeline_mode = #tpu.pipeline_mode<synchronous>, transform_indices = @transform_4, window_bounds = array<i64: 1, 128>}, {pipeline_mode = #tpu.pipeline_mode<synchronous>, transform_indices = @transform_5, window_bounds = array<i64: 1, 128>}, {pipeline_mode = #tpu.pipeline_mode<synchronous>, transform_indices = @transform_6, window_bounds = array<i64: 1, 128>}, {transform_indices = @transform_7, window_bounds = array<i64: 128, 128>}]} {
    %c0_i32 = arith.constant 0 : i32
    %0 = arith.cmpi eq, %arg1, %c0_i32 : i32
    %1 = arith.extui %0 : i1 to i32
    %c0_i32_0 = arith.constant 0 : i32
    %2 = arith.cmpi ne, %1, %c0_i32_0 : i32
    scf.if %2 {
      %cst = arith.constant 0xFF800000 : f32
      %13 = vector.broadcast %cst : f32 to vector<128x1xf32>
      %c0 = arith.constant 0 : index
      %c0_4 = arith.constant 0 : index
      %c0_5 = arith.constant 0 : index
      %14 = vector.load %arg11[%c0, %c0_4, %c0_5] : memref<2x128x1xf32, #tpu.memory_space<vmem>>, vector<1x128x1xf32>
      %15 = vector.shape_cast %14 : vector<1x128x1xf32> to vector<128x1xf32>
      %16 = vector.shape_cast %13 : vector<128x1xf32> to vector<1x128x1xf32>
      tpu.vector_store %arg11[%c0, %c0_4, %c0_5], %16 {strides = array<i32>} : memref<2x128x1xf32, #tpu.memory_space<vmem>>, vector<1x128x1xf32>,
      %cst_6 = arith.constant 0.000000e+00 : f32
      %17 = vector.broadcast %cst_6 : f32 to vector<128x128xf32>
      %c0_7 = arith.constant 0 : index
      %c0_8 = arith.constant 0 : index
      %c0_9 = arith.constant 0 : index
      %18 = vector.load %arg12[%c0_7, %c0_8, %c0_9] : memref<2x128x128xf32, #tpu.memory_space<vmem>>, vector<1x128x128xf32>
      %19 = vector.shape_cast %18 : vector<1x128x128xf32> to vector<128x128xf32>
      %20 = vector.shape_cast %17 : vector<128x128xf32> to vector<1x128x128xf32>
      tpu.vector_store %arg12[%c0_7, %c0_8, %c0_9], %20 {strides = array<i32>} : memref<2x128x128xf32, #tpu.memory_space<vmem>>, vector<1x128x128xf32>,
      %cst_10 = arith.constant 0xFF800000 : f32
      %21 = vector.broadcast %cst_10 : f32 to vector<128x1xf32>
      %c1 = arith.constant 1 : index
      %c0_11 = arith.constant 0 : index
      %c0_12 = arith.constant 0 : index
      %22 = vector.load %arg11[%c1, %c0_11, %c0_12] : memref<2x128x1xf32, #tpu.memory_space<vmem>>, vector<1x128x1xf32>
      %23 = vector.shape_cast %22 : vector<1x128x1xf32> to vector<128x1xf32>
      %24 = vector.shape_cast %21 : vector<128x1xf32> to vector<1x128x1xf32>
      tpu.vector_store %arg11[%c1, %c0_11, %c0_12], %24 {strides = array<i32>} : memref<2x128x1xf32, #tpu.memory_space<vmem>>, vector<1x128x1xf32>,
      %cst_13 = arith.constant 0.000000e+00 : f32
      %25 = vector.broadcast %cst_13 : f32 to vector<128x128xf32>
      %c1_14 = arith.constant 1 : index
      %c0_15 = arith.constant 0 : index
      %c0_16 = arith.constant 0 : index
      %26 = vector.load %arg12[%c1_14, %c0_15, %c0_16] : memref<2x128x128xf32, #tpu.memory_space<vmem>>, vector<1x128x128xf32>
      %27 = vector.shape_cast %26 : vector<1x128x128xf32> to vector<128x128xf32>
      %28 = vector.shape_cast %25 : vector<128x128xf32> to vector<1x128x128xf32>
      tpu.vector_store %arg12[%c1_14, %c0_15, %c0_16], %28 {strides = array<i32>} : memref<2x128x128xf32, #tpu.memory_space<vmem>>, vector<1x128x128xf32>,
    } else {
    }
    %c2_i32 = arith.constant 2 : i32
    %3 = arith.muli %arg0, %c2_i32 : i32
    %4 = arith.addi %3, %arg1 : i32
    %5 = arith.index_cast %4 : i32 to index
    %6 = memref.load %arg2[%5] : memref<8xi32, #tpu.memory_space<smem>>
    %c0_i32_1 = arith.constant 0 : i32
    %7 = arith.cmpi sgt, %6, %c0_i32_1 : i32
    %8 = arith.extui %7 : i1 to i32
    %c0_i32_2 = arith.constant 0 : i32
    %9 = arith.cmpi ne, %8, %c0_i32_2 : i32
    scf.if %9 {
      %c0 = arith.constant 0 : index
      %c0_4 = arith.constant 0 : index
      %13 = vector.load %arg6[%c0, %c0_4] : memref<128x256xi8, #tpu.memory_space<vmem>>, vector<128x256xi8>
      %c0_i8 = arith.constant 0 : i8
      %14 = vector.broadcast %c0_i8 : i8 to vector<128x256xi8>
      %15 = arith.cmpi ne, %13, %14 : vector<128x256xi8>
      %c0_5 = arith.constant 0 : index
      %c0_6 = arith.constant 0 : index
      %c0_7 = arith.constant 0 : index
      %16 = vector.load %arg3[%c0_5, %c0_6, %c0_7] : memref<2x128x1xf32, #tpu.memory_space<vmem>>, vector<1x128x1xf32>
      %17 = vector.shape_cast %16 : vector<1x128x1xf32> to vector<128x1xf32>
      %c0_8 = arith.constant 0 : index
      %c0_9 = arith.constant 0 : index
      %c0_10 = arith.constant 0 : index
      %18 = vector.load %arg4[%c0_8, %c0_9, %c0_10] : memref<2x1x256xf32, #tpu.memory_space<vmem>>, vector<1x1x256xf32>
      %19 = vector.shape_cast %18 : vector<1x1x256xf32> to vector<1x256xf32>
      %20 = vector.broadcast %17 : vector<128x1xf32> to vector<128x256xf32>
      %21 = vector.broadcast %19 : vector<1x256xf32> to vector<128x256xf32>
      %22 = arith.addf %20, %21 : vector<128x256xf32>
      %cst = arith.constant 2.000000e-01 : f32
      %23 = vector.broadcast %cst : f32 to vector<128x256xf32>
      %24 = arith.mulf %23, %22 : vector<128x256xf32>
      %25 = arith.maximumf %22, %24 : vector<128x256xf32>
      %cst_11 = arith.constant -1.000000e+30 : f32
      %26 = vector.broadcast %cst_11 : f32 to vector<128x256xf32>
      %27 = arith.select %15, %25, %26 : vector<128x256xi1>, vector<128x256xf32>
      %c0_12 = arith.constant 0 : index
      %c0_13 = arith.constant 0 : index
      %c0_14 = arith.constant 0 : index
      %28 = vector.load %arg11[%c0_12, %c0_13, %c0_14] : memref<2x128x1xf32, #tpu.memory_space<vmem>>, vector<1x128x1xf32>
      %29 = vector.shape_cast %28 : vector<1x128x1xf32> to vector<128x1xf32>
      %cst_15 = arith.constant dense<0xFF800000> : vector<128xf32>
      %30 = vector.multi_reduction <maximumf>, %27, %cst_15 [1] : vector<128x256xf32> to vector<128xf32>
      %31 = vector.shape_cast %30 : vector<128xf32> to vector<128x1xf32>
      %32 = arith.maximumf %29, %31 : vector<128x1xf32>
      %33 = arith.subf %29, %32 : vector<128x1xf32>
      %34 = math.exp %33 : vector<128x1xf32>
      %35 = vector.broadcast %32 : vector<128x1xf32> to vector<128x256xf32>
      %36 = arith.subf %27, %35 : vector<128x256xf32>
      %37 = math.exp %36 : vector<128x256xf32>
      %38 = arith.truncf %37 : vector<128x256xf32> to vector<128x256xbf16>
      %c0_16 = arith.constant 0 : index
      %c0_17 = arith.constant 0 : index
      %c0_18 = arith.constant 0 : index
      %39 = vector.load %arg12[%c0_16, %c0_17, %c0_18] : memref<2x128x128xf32, #tpu.memory_space<vmem>>, vector<1x128x128xf32>
      %40 = vector.shape_cast %39 : vector<1x128x128xf32> to vector<128x128xf32>
      %41 = vector.broadcast %34 : vector<128x1xf32> to vector<128x128xf32>
      %42 = arith.mulf %41, %40 : vector<128x128xf32>
      %c0_19 = arith.constant 0 : index
      %c0_20 = arith.constant 0 : index
      %c0_21 = arith.constant 0 : index
      %43 = vector.load %arg5[%c0_19, %c0_20, %c0_21] : memref<2x256x128xbf16, #tpu.memory_space<vmem>>, vector<1x256x128xbf16>
      %44 = vector.shape_cast %43 : vector<1x256x128xbf16> to vector<256x128xbf16>
      %cst_22 = arith.constant dense<0.000000e+00> : vector<128x128xf32>
      %45 = tpu.matmul %38, %44, %cst_22 {dimension_numbers = #tpu.dot_dimension_numbers<[1], [0], [0], [1], [0, 0, 1, 1], [], []>} : vector<128x256xbf16>, vector<256x128xbf16>, vector<128x128xf32> -> vector<128x128xf32>
      %46 = arith.addf %42, %45 : vector<128x128xf32>
      %c0_23 = arith.constant 0 : index
      %c0_24 = arith.constant 0 : index
      %c0_25 = arith.constant 0 : index
      %47 = vector.load %arg12[%c0_23, %c0_24, %c0_25] : memref<2x128x128xf32, #tpu.memory_space<vmem>>, vector<1x128x128xf32>
      %48 = vector.shape_cast %47 : vector<1x128x128xf32> to vector<128x128xf32>
      %49 = vector.shape_cast %46 : vector<128x128xf32> to vector<1x128x128xf32>
      tpu.vector_store %arg12[%c0_23, %c0_24, %c0_25], %49 {strides = array<i32>} : memref<2x128x128xf32, #tpu.memory_space<vmem>>, vector<1x128x128xf32>,
      %c0_26 = arith.constant 0 : index
      %c0_27 = arith.constant 0 : index
      %c0_28 = arith.constant 0 : index
      %50 = vector.load %arg11[%c0_26, %c0_27, %c0_28] : memref<2x128x1xf32, #tpu.memory_space<vmem>>, vector<1x128x1xf32>
      %51 = vector.shape_cast %50 : vector<1x128x1xf32> to vector<128x1xf32>
      %52 = vector.shape_cast %32 : vector<128x1xf32> to vector<1x128x1xf32>
      tpu.vector_store %arg11[%c0_26, %c0_27, %c0_28], %52 {strides = array<i32>} : memref<2x128x1xf32, #tpu.memory_space<vmem>>, vector<1x128x1xf32>,
      %c1 = arith.constant 1 : index
      %c0_29 = arith.constant 0 : index
      %c0_30 = arith.constant 0 : index
      %53 = vector.load %arg3[%c1, %c0_29, %c0_30] : memref<2x128x1xf32, #tpu.memory_space<vmem>>, vector<1x128x1xf32>
      %54 = vector.shape_cast %53 : vector<1x128x1xf32> to vector<128x1xf32>
      %c1_31 = arith.constant 1 : index
      %c0_32 = arith.constant 0 : index
      %c0_33 = arith.constant 0 : index
      %55 = vector.load %arg4[%c1_31, %c0_32, %c0_33] : memref<2x1x256xf32, #tpu.memory_space<vmem>>, vector<1x1x256xf32>
      %56 = vector.shape_cast %55 : vector<1x1x256xf32> to vector<1x256xf32>
      %57 = vector.broadcast %54 : vector<128x1xf32> to vector<128x256xf32>
      %58 = vector.broadcast %56 : vector<1x256xf32> to vector<128x256xf32>
      %59 = arith.addf %57, %58 : vector<128x256xf32>
      %cst_34 = arith.constant 2.000000e-01 : f32
      %60 = vector.broadcast %cst_34 : f32 to vector<128x256xf32>
      %61 = arith.mulf %60, %59 : vector<128x256xf32>
      %62 = arith.maximumf %59, %61 : vector<128x256xf32>
      %cst_35 = arith.constant -1.000000e+30 : f32
      %63 = vector.broadcast %cst_35 : f32 to vector<128x256xf32>
      %64 = arith.select %15, %62, %63 : vector<128x256xi1>, vector<128x256xf32>
      %c1_36 = arith.constant 1 : index
      %c0_37 = arith.constant 0 : index
      %c0_38 = arith.constant 0 : index
      %65 = vector.load %arg11[%c1_36, %c0_37, %c0_38] : memref<2x128x1xf32, #tpu.memory_space<vmem>>, vector<1x128x1xf32>
      %66 = vector.shape_cast %65 : vector<1x128x1xf32> to vector<128x1xf32>
      %cst_39 = arith.constant dense<0xFF800000> : vector<128xf32>
      %67 = vector.multi_reduction <maximumf>, %64, %cst_39 [1] : vector<128x256xf32> to vector<128xf32>
      %68 = vector.shape_cast %67 : vector<128xf32> to vector<128x1xf32>
      %69 = arith.maximumf %66, %68 : vector<128x1xf32>
      %70 = arith.subf %66, %69 : vector<128x1xf32>
      %71 = math.exp %70 : vector<128x1xf32>
      %72 = vector.broadcast %69 : vector<128x1xf32> to vector<128x256xf32>
      %73 = arith.subf %64, %72 : vector<128x256xf32>
      %74 = math.exp %73 : vector<128x256xf32>
      %75 = arith.truncf %74 : vector<128x256xf32> to vector<128x256xbf16>
      %c1_40 = arith.constant 1 : index
      %c0_41 = arith.constant 0 : index
      %c0_42 = arith.constant 0 : index
      %76 = vector.load %arg12[%c1_40, %c0_41, %c0_42] : memref<2x128x128xf32, #tpu.memory_space<vmem>>, vector<1x128x128xf32>
      %77 = vector.shape_cast %76 : vector<1x128x128xf32> to vector<128x128xf32>
      %78 = vector.broadcast %71 : vector<128x1xf32> to vector<128x128xf32>
      %79 = arith.mulf %78, %77 : vector<128x128xf32>
      %c1_43 = arith.constant 1 : index
      %c0_44 = arith.constant 0 : index
      %c0_45 = arith.constant 0 : index
      %80 = vector.load %arg5[%c1_43, %c0_44, %c0_45] : memref<2x256x128xbf16, #tpu.memory_space<vmem>>, vector<1x256x128xbf16>
      %81 = vector.shape_cast %80 : vector<1x256x128xbf16> to vector<256x128xbf16>
      %cst_46 = arith.constant dense<0.000000e+00> : vector<128x128xf32>
      %82 = tpu.matmul %75, %81, %cst_46 {dimension_numbers = #tpu.dot_dimension_numbers<[1], [0], [0], [1], [0, 0, 1, 1], [], []>} : vector<128x256xbf16>, vector<256x128xbf16>, vector<128x128xf32> -> vector<128x128xf32>
      %83 = arith.addf %79, %82 : vector<128x128xf32>
      %c1_47 = arith.constant 1 : index
      %c0_48 = arith.constant 0 : index
      %c0_49 = arith.constant 0 : index
      %84 = vector.load %arg12[%c1_47, %c0_48, %c0_49] : memref<2x128x128xf32, #tpu.memory_space<vmem>>, vector<1x128x128xf32>
      %85 = vector.shape_cast %84 : vector<1x128x128xf32> to vector<128x128xf32>
      %86 = vector.shape_cast %83 : vector<128x128xf32> to vector<1x128x128xf32>
      tpu.vector_store %arg12[%c1_47, %c0_48, %c0_49], %86 {strides = array<i32>} : memref<2x128x128xf32, #tpu.memory_space<vmem>>, vector<1x128x128xf32>,
      %c1_50 = arith.constant 1 : index
      %c0_51 = arith.constant 0 : index
      %c0_52 = arith.constant 0 : index
      %87 = vector.load %arg11[%c1_50, %c0_51, %c0_52] : memref<2x128x1xf32, #tpu.memory_space<vmem>>, vector<1x128x1xf32>
      %88 = vector.shape_cast %87 : vector<1x128x1xf32> to vector<128x1xf32>
      %89 = vector.shape_cast %69 : vector<128x1xf32> to vector<1x128x1xf32>
      tpu.vector_store %arg11[%c1_50, %c0_51, %c0_52], %89 {strides = array<i32>} : memref<2x128x1xf32, #tpu.memory_space<vmem>>, vector<1x128x1xf32>,
    } else {
    }
    %c1_i32 = arith.constant 1 : i32
    %10 = arith.cmpi eq, %arg1, %c1_i32 : i32
    %11 = arith.extui %10 : i1 to i32
    %c0_i32_3 = arith.constant 0 : i32
    %12 = arith.cmpi ne, %11, %c0_i32_3 : i32
    scf.if %12 {
      %c0 = arith.constant 0 : index
      %c0_4 = arith.constant 0 : index
      %c0_5 = arith.constant 0 : index
      %13 = vector.load %arg12[%c0, %c0_4, %c0_5] : memref<2x128x128xf32, #tpu.memory_space<vmem>>, vector<1x128x128xf32>
      %14 = vector.shape_cast %13 : vector<1x128x128xf32> to vector<128x128xf32>
      %15 = vector.extract_strided_slice %14 {offsets = [0, 64], sizes = [128, 1], strides = [1, 1]} : vector<128x128xf32> to vector<128x1xf32>
      %c0_6 = arith.constant 0 : index
      %c0_7 = arith.constant 0 : index
      %c0_8 = arith.constant 0 : index
      %16 = vector.load %arg11[%c0_6, %c0_7, %c0_8] : memref<2x128x1xf32, #tpu.memory_space<vmem>>, vector<1x128x1xf32>
      %17 = vector.shape_cast %16 : vector<1x128x1xf32> to vector<128x1xf32>
      %cst = arith.constant -1.000000e+29 : f32
      %18 = vector.broadcast %cst : f32 to vector<128x1xf32>
      %19 = arith.cmpf ogt, %17, %18 : vector<128x1xf32>
      %cst_9 = arith.constant 9.99999968E-21 : f32
      %20 = vector.broadcast %cst_9 : f32 to vector<128x1xf32>
      %21 = arith.maximumf %15, %20 : vector<128x1xf32>
      %22 = tpu.reciprocal %21 {approx = true} : vector<128x1xf32> -> vector<128x1xf32>
      %cst_10 = arith.constant 0.000000e+00 : f32
      %23 = vector.broadcast %cst_10 : f32 to vector<128x1xf32>
      %24 = arith.select %19, %22, %23 : vector<128x1xi1>, vector<128x1xf32>
      %25 = vector.extract_strided_slice %14 {offsets = [0, 0], sizes = [128, 64], strides = [1, 1]} : vector<128x128xf32> to vector<128x64xf32>
      %26 = vector.broadcast %24 : vector<128x1xf32> to vector<128x64xf32>
      %27 = arith.mulf %25, %26 : vector<128x64xf32>
      %c1 = arith.constant 1 : index
      %c0_11 = arith.constant 0 : index
      %c0_12 = arith.constant 0 : index
      %28 = vector.load %arg12[%c1, %c0_11, %c0_12] : memref<2x128x128xf32, #tpu.memory_space<vmem>>, vector<1x128x128xf32>
      %29 = vector.shape_cast %28 : vector<1x128x128xf32> to vector<128x128xf32>
      %30 = vector.extract_strided_slice %29 {offsets = [0, 64], sizes = [128, 1], strides = [1, 1]} : vector<128x128xf32> to vector<128x1xf32>
      %c1_13 = arith.constant 1 : index
      %c0_14 = arith.constant 0 : index
      %c0_15 = arith.constant 0 : index
      %31 = vector.load %arg11[%c1_13, %c0_14, %c0_15] : memref<2x128x1xf32, #tpu.memory_space<vmem>>, vector<1x128x1xf32>
      %32 = vector.shape_cast %31 : vector<1x128x1xf32> to vector<128x1xf32>
      %cst_16 = arith.constant -1.000000e+29 : f32
      %33 = vector.broadcast %cst_16 : f32 to vector<128x1xf32>
      %34 = arith.cmpf ogt, %32, %33 : vector<128x1xf32>
      %cst_17 = arith.constant 9.99999968E-21 : f32
      %35 = vector.broadcast %cst_17 : f32 to vector<128x1xf32>
      %36 = arith.maximumf %30, %35 : vector<128x1xf32>
      %37 = tpu.reciprocal %36 {approx = true} : vector<128x1xf32> -> vector<128x1xf32>
      %cst_18 = arith.constant 0.000000e+00 : f32
      %38 = vector.broadcast %cst_18 : f32 to vector<128x1xf32>
      %39 = arith.select %34, %37, %38 : vector<128x1xi1>, vector<128x1xf32>
      %40 = vector.extract_strided_slice %29 {offsets = [0, 0], sizes = [128, 64], strides = [1, 1]} : vector<128x128xf32> to vector<128x64xf32>
      %41 = vector.broadcast %39 : vector<128x1xf32> to vector<128x64xf32>
      %42 = arith.mulf %40, %41 : vector<128x64xf32>
      %43 = tpu.concatenate %27, %42 in 1 : vector<128x64xf32>, vector<128x64xf32> -> vector<128x128xf32>
      %c0_19 = arith.constant 0 : index
      %c0_20 = arith.constant 0 : index
      %44 = vector.load %arg7[%c0_19, %c0_20] : memref<1x128xf32, #tpu.memory_space<vmem>>, vector<1x128xf32>
      %45 = vector.broadcast %44 : vector<1x128xf32> to vector<128x128xf32>
      %46 = arith.addf %43, %45 : vector<128x128xf32>
      %cst_21 = arith.constant dense<0.000000e+00> : vector<128xf32>
      %47 = vector.multi_reduction <add>, %46, %cst_21 [1] : vector<128x128xf32> to vector<128xf32>
      %48 = vector.shape_cast %47 : vector<128xf32> to vector<128x1xf32>
      %cst_22 = arith.constant 1.280000e+02 : f32
      %49 = vector.broadcast %cst_22 : f32 to vector<128x1xf32>
      %50 = arith.divf %48, %49 : vector<128x1xf32>
      %51 = vector.broadcast %50 : vector<128x1xf32> to vector<128x128xf32>
      %52 = arith.subf %46, %51 : vector<128x128xf32>
      %53 = arith.mulf %52, %52 : vector<128x128xf32>
      %cst_23 = arith.constant dense<0.000000e+00> : vector<128xf32>
      %54 = vector.multi_reduction <add>, %53, %cst_23 [1] : vector<128x128xf32> to vector<128xf32>
      %55 = vector.shape_cast %54 : vector<128xf32> to vector<128x1xf32>
      %cst_24 = arith.constant 1.280000e+02 : f32
      %56 = vector.broadcast %cst_24 : f32 to vector<128x1xf32>
      %57 = arith.divf %55, %56 : vector<128x1xf32>
      %cst_25 = arith.constant 9.99999974E-6 : f32
      %58 = vector.broadcast %cst_25 : f32 to vector<128x1xf32>
      %59 = arith.addf %57, %58 : vector<128x1xf32>
      %60 = math.rsqrt %59 : vector<128x1xf32>
      %61 = vector.broadcast %60 : vector<128x1xf32> to vector<128x128xf32>
      %62 = arith.mulf %52, %61 : vector<128x128xf32>
      %c0_26 = arith.constant 0 : index
      %c0_27 = arith.constant 0 : index
      %63 = vector.load %arg8[%c0_26, %c0_27] : memref<1x128xf32, #tpu.memory_space<vmem>>, vector<1x128xf32>
      %64 = vector.broadcast %63 : vector<1x128xf32> to vector<128x128xf32>
      %65 = arith.mulf %62, %64 : vector<128x128xf32>
      %c0_28 = arith.constant 0 : index
      %c0_29 = arith.constant 0 : index
      %66 = vector.load %arg9[%c0_28, %c0_29] : memref<1x128xf32, #tpu.memory_space<vmem>>, vector<1x128xf32>
      %67 = vector.broadcast %66 : vector<1x128xf32> to vector<128x128xf32>
      %68 = arith.addf %65, %67 : vector<128x128xf32>
      %c0_30 = arith.constant 0 : index
      %c0_31 = arith.constant 0 : index
      %69 = vector.load %arg10[%c0_30, %c0_31] : memref<128x128xf32, #tpu.memory_space<vmem>>, vector<128x128xf32>
      tpu.vector_store %arg10[%c0_30, %c0_31], %68 {strides = array<i32>} : memref<128x128xf32, #tpu.memory_space<vmem>>, vector<128x128xf32>,
    } else {
    }
    return
  }
  func.func @transform_0(%arg0: i32, %arg1: i32, %arg2: memref<8xi32, #tpu.memory_space<smem>>) -> (i32, i32, i32) {
    %c0_i32 = arith.constant 0 : i32
    %c0_i32_0 = arith.constant 0 : i32
    %c0_i32_1 = arith.constant 0 : i32
    return %c0_i32, %arg0, %c0_i32_0 : i32, i32, i32
  }
  func.func @transform_1(%arg0: i32, %arg1: i32, %arg2: memref<8xi32, #tpu.memory_space<smem>>) -> (i32, i32, i32) {
    %c0_i32 = arith.constant 0 : i32
    %c0_i32_0 = arith.constant 0 : i32
    %c0_i32_1 = arith.constant 0 : i32
    return %c0_i32, %c0_i32_0, %arg1 : i32, i32, i32
  }
  func.func @transform_2(%arg0: i32, %arg1: i32, %arg2: memref<8xi32, #tpu.memory_space<smem>>) -> (i32, i32, i32) {
    %c0_i32 = arith.constant 0 : i32
    %c0_i32_0 = arith.constant 0 : i32
    %c0_i32_1 = arith.constant 0 : i32
    return %c0_i32, %arg1, %c0_i32_0 : i32, i32, i32
  }
  func.func @transform_3(%arg0: i32, %arg1: i32, %arg2: memref<8xi32, #tpu.memory_space<smem>>) -> (i32, i32) {
    %c0_i32 = arith.constant 0 : i32
    return %arg0, %arg1 : i32, i32
  }
  func.func @transform_4(%arg0: i32, %arg1: i32, %arg2: memref<8xi32, #tpu.memory_space<smem>>) -> (i32, i32) {
    %c0_i32 = arith.constant 0 : i32
    %c0_i32_0 = arith.constant 0 : i32
    %c0_i32_1 = arith.constant 0 : i32
    return %c0_i32, %c0_i32_0 : i32, i32
  }
  func.func @transform_5(%arg0: i32, %arg1: i32, %arg2: memref<8xi32, #tpu.memory_space<smem>>) -> (i32, i32) {
    %c0_i32 = arith.constant 0 : i32
    %c0_i32_0 = arith.constant 0 : i32
    %c0_i32_1 = arith.constant 0 : i32
    return %c0_i32, %c0_i32_0 : i32, i32
  }
  func.func @transform_6(%arg0: i32, %arg1: i32, %arg2: memref<8xi32, #tpu.memory_space<smem>>) -> (i32, i32) {
    %c0_i32 = arith.constant 0 : i32
    %c0_i32_0 = arith.constant 0 : i32
    %c0_i32_1 = arith.constant 0 : i32
    return %c0_i32, %c0_i32_0 : i32, i32
  }
  func.func @transform_7(%arg0: i32, %arg1: i32, %arg2: memref<8xi32, #tpu.memory_space<smem>>) -> (i32, i32) {
    %c0_i32 = arith.constant 0 : i32
    %c0_i32_0 = arith.constant 0 : i32
    return %arg0, %c0_i32 : i32, i32
  }
}

</mosaic_0001>

<llo_original>
// kernel: tpu_custom_call.1
$region0: #{tpu_custom_call.1}
  #allocation0 [shape = 'u32[]', space=smem, size = 0x4, offset = 0x4, fixed_abs, tag = 'smem constant byte address 0x4 - core index']
  #allocation1 [shape = 'u32[144,128]{1,0:T(1,128)}', space=vmem, size = 0x12000, scoped, tag = 'internal scratch']
  #allocation2 [shape = 'f32[2,128,1]{2,1,0:T(8,128)}', space=vmem, size = 0x20000, scoped, tag = 'scratch operand']
  #allocation3 [shape = 'f32[2,128,128]{2,1,0:T(8,128)}', space=vmem, size = 0x20000, scoped, tag = 'scratch operand']
  #allocation4 [shape = 's32[1]{0}', space=sflag, size = 0x4, scoped, tag = 'scoped memory for tpu_custom_call.1']
  #allocation5 [shape = 'u8[512]{0}', space=smem, size = 0x200, scoped, tag = 'prefetched SMEM operand 0']
  %s0 = inlined_call_operand.hbm [shape: s32[8], index: 0, kind: input, shape index: {}]
  %s1 = inlined_call_operand.vmem [shape: f32[2,512,1], index: 1, kind: input, shape index: {}]
  %s2 = inlined_call_operand.vmem [shape: f32[2,1,512], index: 2, kind: input, shape index: {}]
  %s3 = inlined_call_operand.vmem [shape: bf16[2,512,128], index: 3, kind: input, shape index: {}]
  %s4 = inlined_call_operand.vmem [shape: s8[512,512], index: 4, kind: input, shape index: {}]
  %s5 = inlined_call_operand.vmem [shape: f32[1,128], index: 5, kind: input, shape index: {}]
  %s6 = inlined_call_operand.vmem [shape: f32[1,128], index: 6, kind: input, shape index: {}]
  %s7 = inlined_call_operand.vmem [shape: f32[1,128], index: 7, kind: input, shape index: {}]
  %s8 = inlined_call_operand.hbm [shape: f32[512,128], index: 8, kind: output, shape index: {}]
  %s9 = sld [smem:[#allocation0]]
  $region209: #{tpu_custom_call.1} parent=0
    _
  %s11 = ssub.s32 1, %s9
  %s12 = scalar_select 0, %s11, %s9
  %14 = dma.hbm_to_smem %s0, 16, [#allocation5], [#allocation4]
  %15 = dma.done [#allocation4], 16
  %16 = sfence
  $region1: #{tpu_custom_call.1} parent=0
    #allocation6 [shape = 'u8[262144]{0}', space=vmem, size = 0x40000, scoped, tag = 'input window, operand 1']
    #allocation7 [shape = 'u8[4096]{0}', space=vmem, size = 0x1000, scoped, tag = 'input window, operand 2']
    #allocation8 [shape = 'u8[262144]{0}', space=vmem, size = 0x40000, scoped, tag = 'input window, operand 3']
    #allocation9 [shape = 'u8[65536]{0}', space=vmem, size = 0x10000, scoped, tag = 'input window, operand 4']
    #allocation10 [shape = 'u8[131072]{0}', space=vmem, size = 0x20000, scoped, tag = 'output window, operand 0']
    #allocation11 [shape = 's32[2]{0}', space=sflag, size = 0x8, scoped, tag = 'scoped memory for tpu_custom_call.1']
    %17 = vsyncpa [#allocation11], 0
    %s18 = scalar_lea.sflag [#allocation11], 1
    %19 = vsyncpa %s18, 0
    loop: start=0, step=1, limit=10
    $region2: #{tpu_custom_call.1} parent=1 // loop_pre_header
      _
    $region3: #{tpu_custom_call.1} parent=1 // loop_header
      %s21 = sphi 0, %s25
      %p22 = scmp.ge.s32.totalorder %s21, 10
      %s28 = sphi 0, %s40
      %s29 = sphi 0, %s36
      %s30 = sphi 0, %s28
      %s31 = sphi 0, %s29
      %s32 = sphi 0, %s30
      %s33 = sphi 0, %s31
      %s43 = sphi 0, %s45
      %s46 = sphi 0, %s43
      %s47 = sphi 0, %s46
      %s63 = sphi 0, %s47
      %s69 = sphi 0, %s71
      %s72 = sphi 0, %s69
      %s73 = sphi 0, %s72
      %s89 = sphi 0, %s73
      %s95 = sphi 0, %s97
      %s98 = sphi 0, %s95
      %s99 = sphi 0, %s98
      %s115 = sphi 0, %s99
      %s123 = sphi 0, %s125
      %s126 = sphi 0, %s123
      %s127 = sphi 0, %s126
      %s143 = sphi 0, %s127
      %s147 = sphi 0, %s147
      %s149 = sphi 0, %s147
      %s150 = sphi 0, %s149
      %s164 = sphi 0, %s150
      %s168 = sphi 0, %s168
      %s170 = sphi 0, %s168
      %s171 = sphi 0, %s170
      %s185 = sphi 0, %s171
      %s189 = sphi 0, %s189
      %s191 = sphi 0, %s189
      %s192 = sphi 0, %s191
      %s206 = sphi 0, %s192
      %s212 = sphi 0, %s214
      %s215 = sphi 0, %s212
      %s216 = sphi 0, %s215
      %s232 = sphi 0, %s216
    $region4: #{tpu_custom_call.1} parent=1 // loop_header_branch
      %24 = sbr.rel (%p22) target = $region8
    $region5: #{tpu_custom_call.1} parent=1 // loop_body
      %s26 = ssub.s32 %s21, 1
      %s27 = ssub.s32 %s21, 2
      %s34 = sadd.s32 1, %s29
      %p35 = scmp.ge.s32.totalorder %s34, 2
      %s36 = scalar_select %p35, 0, %s34
      %s37 = sadd.s32 1, %s28
      %s38 = scalar_select %p35, %s37, %s28
      %p39 = scmp.ge.s32.totalorder %s38, 4
      %s40 = scalar_select %p39, 0, %s38
      %s41 = ssub.s32 %s28, %s40
      %p42 = scmp.eq.s32.totalorder %s41, 0
      %s44 = sadd.s32 %s43, 1
      %s45 = scalar_select %p42, %s43, %s44
      %p48 = pneg %p42
      %p49 = scmp.eq.s32.totalorder %s21, 7
      %p50 = por %p48, %p49
      %p51 = scmp.ne.s32.totalorder %s43, %s46
      %p52 = scmp.eq.s32.totalorder %s21, 0
      %p53 = por %p51, %p52
      %p54 = scmp.ne.s32.totalorder %s43, %s46
      %p55 = scmp.eq.s32.totalorder %s26, 7
      %p56 = por %p54, %p55
      %p57 = scmp.ne.s32.totalorder %s46, %s47
      %p58 = scmp.eq.s32.totalorder %s26, 0
      %p59 = por %p57, %p58
      %p60 = scmp.ne.s32.totalorder %s46, %s47
      %p61 = scmp.eq.s32.totalorder %s27, 7
      %p62 = por %p60, %p61
      %p64 = scmp.ne.s32.totalorder %s47, %s63
      %p65 = scmp.eq.s32.totalorder %s27, 0
      %p66 = por %p64, %p65
      %s67 = ssub.s32 %s29, %s36
      %p68 = scmp.eq.s32.totalorder %s67, 0
      %s70 = sadd.s32 %s69, 1
      %s71 = scalar_select %p68, %s69, %s70
      %p74 = pneg %p68
      %p75 = scmp.eq.s32.totalorder %s21, 7
      %p76 = por %p74, %p75
      %p77 = scmp.ne.s32.totalorder %s69, %s72
      %p78 = scmp.eq.s32.totalorder %s21, 0
      %p79 = por %p77, %p78
      %p80 = scmp.ne.s32.totalorder %s69, %s72
      %p81 = scmp.eq.s32.totalorder %s26, 7
      %p82 = por %p80, %p81
      %p83 = scmp.ne.s32.totalorder %s72, %s73
      %p84 = scmp.eq.s32.totalorder %s26, 0
      %p85 = por %p83, %p84
      %p86 = scmp.ne.s32.totalorder %s72, %s73
      %p87 = scmp.eq.s32.totalorder %s27, 7
      %p88 = por %p86, %p87
      %p90 = scmp.ne.s32.totalorder %s73, %s89
      %p91 = scmp.eq.s32.totalorder %s27, 0
      %p92 = por %p90, %p91
      %s93 = ssub.s32 %s29, %s36
      %p94 = scmp.eq.s32.totalorder %s93, 0
      %s96 = sadd.s32 %s95, 1
      %s97 = scalar_select %p94, %s95, %s96
      %p100 = pneg %p94
      %p101 = scmp.eq.s32.totalorder %s21, 7
      %p102 = por %p100, %p101
      %p103 = scmp.ne.s32.totalorder %s95, %s98
      %p104 = scmp.eq.s32.totalorder %s21, 0
      %p105 = por %p103, %p104
      %p106 = scmp.ne.s32.totalorder %s95, %s98
      %p107 = scmp.eq.s32.totalorder %s26, 7
      %p108 = por %p106, %p107
      %p109 = scmp.ne.s32.totalorder %s98, %s99
      %p110 = scmp.eq.s32.totalorder %s26, 0
      %p111 = por %p109, %p110
      %p112 = scmp.ne.s32.totalorder %s98, %s99
      %p113 = scmp.eq.s32.totalorder %s27, 7
      %p114 = por %p112, %p113
      %p116 = scmp.ne.s32.totalorder %s99, %s115
      %p117 = scmp.eq.s32.totalorder %s27, 0
      %p118 = por %p116, %p117
      %s119 = ssub.s32 %s28, %s40
      %s120 = ssub.s32 %s29, %s36
      %s121 = sor.u32 %s119, %s120
      %p122 = scmp.eq.s32.totalorder %s121, 0
      %s124 = sadd.s32 %s123, 1
      %s125 = scalar_select %p122, %s123, %s124
      %p128 = pneg %p122
      %p129 = scmp.eq.s32.totalorder %s21, 7
      %p130 = por %p128, %p129
      %p131 = scmp.ne.s32.totalorder %s123, %s126
      %p132 = scmp.eq.s32.totalorder %s21, 0
      %p133 = por %p131, %p132
      %p134 = scmp.ne.s32.totalorder %s123, %s126
      %p135 = scmp.eq.s32.totalorder %s26, 7
      %p136 = por %p134, %p135
      %p137 = scmp.ne.s32.totalorder %s126, %s127
      %p138 = scmp.eq.s32.totalorder %s26, 0
      %p139 = por %p137, %p138
      %p140 = scmp.ne.s32.totalorder %s126, %s127
      %p141 = scmp.eq.s32.totalorder %s27, 7
      %p142 = por %p140, %p141
      %p144 = scmp.ne.s32.totalorder %s127, %s143
      %p145 = scmp.eq.s32.totalorder %s27, 0
      %p146 = por %p144, %p145
      %s148 = sadd.s32 %s147, 1
      %p151 = scmp.eq.s32.totalorder %s21, 7
      %p152 = scmp.ne.s32.totalorder %s147, %s149
      %p153 = scmp.eq.s32.totalorder %s21, 0
      %p154 = por %p152, %p153
      %p155 = scmp.ne.s32.totalorder %s147, %s149
      %p156 = scmp.eq.s32.totalorder %s26, 7
      %p157 = por %p155, %p156
      %p158 = scmp.ne.s32.totalorder %s149, %s150
      %p159 = scmp.eq.s32.totalorder %s26, 0
      %p160 = por %p158, %p159
      %p161 = scmp.ne.s32.totalorder %s149, %s150
      %p162 = scmp.eq.s32.totalorder %s27, 7
      %p163 = por %p161, %p162
      %p165 = scmp.ne.s32.totalorder %s150, %s164
      %p166 = scmp.eq.s32.totalorder %s27, 0
      %p167 = por %p165, %p166
      %s169 = sadd.s32 %s168, 1
      %p172 = scmp.eq.s32.totalorder %s21, 7
      %p173 = scmp.ne.s32.totalorder %s168, %s170
      %p174 = scmp.eq.s32.totalorder %s21, 0
      %p175 = por %p173, %p174
      %p176 = scmp.ne.s32.totalorder %s168, %s170
      %p177 = scmp.eq.s32.totalorder %s26, 7
      %p178 = por %p176, %p177
      %p179 = scmp.ne.s32.totalorder %s170, %s171
      %p180 = scmp.eq.s32.totalorder %s26, 0
      %p181 = por %p179, %p180
      %p182 = scmp.ne.s32.totalorder %s170, %s171
      %p183 = scmp.eq.s32.totalorder %s27, 7
      %p184 = por %p182, %p183
      %p186 = scmp.ne.s32.totalorder %s171, %s185
      %p187 = scmp.eq.s32.totalorder %s27, 0
      %p188 = por %p186, %p187
      %s190 = sadd.s32 %s189, 1
      %p193 = scmp.eq.s32.totalorder %s21, 7
      %p194 = scmp.ne.s32.totalorder %s189, %s191
      %p195 = scmp.eq.s32.totalorder %s21, 0
      %p196 = por %p194, %p195
      %p197 = scmp.ne.s32.totalorder %s189, %s191
      %p198 = scmp.eq.s32.totalorder %s26, 7
      %p199 = por %p197, %p198
      %p200 = scmp.ne.s32.totalorder %s191, %s192
      %p201 = scmp.eq.s32.totalorder %s26, 0
      %p202 = por %p200, %p201
      %p203 = scmp.ne.s32.totalorder %s191, %s192
      %p204 = scmp.eq.s32.totalorder %s27, 7
      %p205 = por %p203, %p204
      %p207 = scmp.ne.s32.totalorder %s192, %s206
      %p208 = scmp.eq.s32.totalorder %s27, 0
      %p209 = por %p207, %p208
      %s210 = ssub.s32 %s28, %s40
      %p211 = scmp.eq.s32.totalorder %s210, 0
      %s213 = sadd.s32 %s212, 1
      %s214 = scalar_select %p211, %s212, %s213
      %p217 = pneg %p211
      %p218 = scmp.eq.s32.totalorder %s21, 7
      %p219 = por %p217, %p218
      %p220 = scmp.ne.s32.totalorder %s212, %s215
      %p221 = scmp.eq.s32.totalorder %s21, 0
      %p222 = por %p220, %p221
      %p223 = scmp.ne.s32.totalorder %s212, %s215
      %p224 = scmp.eq.s32.totalorder %s26, 7
      %p225 = por %p223, %p224
      %p226 = scmp.ne.s32.totalorder %s215, %s216
      %p227 = scmp.eq.s32.totalorder %s26, 0
      %p228 = por %p226, %p227
      %p229 = scmp.ne.s32.totalorder %s215, %s216
      %p230 = scmp.eq.s32.totalorder %s27, 7
      %p231 = por %p229, %p230
      %p233 = scmp.ne.s32.totalorder %s216, %s232
      %p234 = scmp.eq.s32.totalorder %s27, 0
      %p235 = por %p233, %p234
      %p236 = scmp.le.s32.totalorder 1, %s21
      %p237 = scmp.lt.s32.totalorder %s21, 9
      %p238 = pnand %p236, %p237
      %p239 = pneg %p238
      // Predicated region
      $region9: #{tpu_custom_call.1} parent=5 // pred_check
        _
      $region10: #{tpu_custom_call.1} parent=5 // pred_check_branch
        %241 = sbr.rel (%p238) target = $region12
      $region11: #{tpu_custom_call.1} parent=5 // pred_region
        %s242 = ssub.s32 %s21, 1
        // Predicated region
        $region13: #{tpu_custom_call.1} parent=11 // pred_check
          %p243 = pneg %p160
        $region14: #{tpu_custom_call.1} parent=11 // pred_check_branch
          %245 = sbr.rel (%p243) target = $region16
        $region15: #{tpu_custom_call.1} parent=11 // pred_region
          _
        $region16: #{tpu_custom_call.1} parent=11 // pred_fallthru
          _
        // Predicated region
        $region17: #{tpu_custom_call.1} parent=11 // pred_check
          %p246 = pneg %p181
        $region18: #{tpu_custom_call.1} parent=11 // pred_check_branch
          %248 = sbr.rel (%p246) target = $region20
        $region19: #{tpu_custom_call.1} parent=11 // pred_region
          _
        $region20: #{tpu_custom_call.1} parent=11 // pred_fallthru
          _
        // Predicated region
        $region21: #{tpu_custom_call.1} parent=11 // pred_check
          %p249 = pneg %p202
        $region22: #{tpu_custom_call.1} parent=11 // pred_check_branch
          %251 = sbr.rel (%p249) target = $region24
        $region23: #{tpu_custom_call.1} parent=11 // pred_region
          _
        $region24: #{tpu_custom_call.1} parent=11 // pred_fallthru
          _
      $region12: #{tpu_custom_call.1} parent=5 // pred_fallthru
        _
      %p252 = scmp.lt.s32.totalorder %s21, 8
      // Predicated region
      $region25: #{tpu_custom_call.1} parent=5 // pred_check
        %p253 = pneg %p252
      $region26: #{tpu_custom_call.1} parent=5 // pred_check_branch
        %255 = sbr.rel (%p253) target = $region28
      $region27: #{tpu_custom_call.1} parent=5 // pred_region
        // Predicated region
        $region29: #{tpu_custom_call.1} parent=27 // pred_check
          %p256 = pneg %p53
        $region30: #{tpu_custom_call.1} parent=27 // pred_check_branch
          %258 = sbr.rel (%p256) target = $region32
        $region31: #{tpu_custom_call.1} parent=27 // pred_region
          %s259 = sand.u32 %s43, 1
          %s260 = sand.u32 %s43, 1
          %s261 = smul.addr %s260, 256
          %s262 = scalar_lea.vmem [#allocation6], %s261
          %s263 = smul.u32 16, %s28
          %s264 = smul.addr %s263, 8
          %s265 = scalar_lea.vmem %s1, %s264
          // Predicated region
          $region33: #{tpu_custom_call.1} parent=31 // pred_check
            _
          $region34: #{tpu_custom_call.1} parent=31 // pred_check_branch
            %267 = sbr.rel (0) target = $region36
          $region35: #{tpu_custom_call.1} parent=31 // pred_region
            // Predicated region
            $region37: #{tpu_custom_call.1} parent=35 // pred_check
              _
            $region38: #{tpu_custom_call.1} parent=35 // pred_check_branch
              %269 = sbr.rel (0) target = $region40
            $region39: #{tpu_custom_call.1} parent=35 // pred_region
              // Predicated region
              $region52: #{tpu_custom_call.1} parent=39 // pred_check
                _
              $region53: #{tpu_custom_call.1} parent=39 // pred_check_branch
                %346 = sbr.rel (0) target = $region55
              $region54: #{tpu_custom_call.1} parent=39 // pred_region
                loop: start=0, step=1, limit=1
                $region56: #{tpu_custom_call.1} parent=54 // loop_pre_header
                  _
                $region57: #{tpu_custom_call.1} parent=54 // loop_header
                  %s348 = sphi 0, %s352
                  %p349 = scmp.ge.s32.totalorder %s348, 1
                  %s353 = sphi %s265, %s265
                  %s354 = sphi %s262, %s262
                $region58: #{tpu_custom_call.1} parent=54 // loop_header_branch
                  %351 = sbr.rel (%p349) target = $region62
                $region59: #{tpu_custom_call.1} parent=54 // loop_body
                  %v355 = vld [vmem:[%s353] sm:$0xff]
                  %356 = vst [vmem:[%s354] sm:$0xff] %v355
                  %v357 = vld [vmem:[%s353 + $0x8] sm:$0xff]
                  %358 = vst [vmem:[%s354 + $0x8] sm:$0xff] %v357
                  %v359 = vld [vmem:[%s353 + $0x10] sm:$0xff]
                  %360 = vst [vmem:[%s354 + $0x10] sm:$0xff] %v359
                  %v361 = vld [vmem:[%s353 + $0x18] sm:$0xff]
                  %362 = vst [vmem:[%s354 + $0x18] sm:$0xff] %v361
                  %v363 = vld [vmem:[%s353 + $0x20] sm:$0xff]
                  %364 = vst [vmem:[%s354 + $0x20] sm:$0xff] %v363
                  %v365 = vld [vmem:[%s353 + $0x28] sm:$0xff]
                  %366 = vst [vmem:[%s354 + $0x28] sm:$0xff] %v365
                  %v367 = vld [vmem:[%s353 + $0x30] sm:$0xff]
                  %368 = vst [vmem:[%s354 + $0x30] sm:$0xff] %v367
                  %v369 = vld [vmem:[%s353 + $0x38] sm:$0xff]
                  %370 = vst [vmem:[%s354 + $0x38] sm:$0xff] %v369
                  %v371 = vld [vmem:[%s353 + $0x40] sm:$0xff]
                  %372 = vst [vmem:[%s354 + $0x40] sm:$0xff] %v371
                  %v373 = vld [vmem:[%s353 + $0x48] sm:$0xff]
                  %374 = vst [vmem:[%s354 + $0x48] sm:$0xff] %v373
                  %v375 = vld [vmem:[%s353 + $0x50] sm:$0xff]
                  %376 = vst [vmem:[%s354 + $0x50] sm:$0xff] %v375
                  %v377 = vld [vmem:[%s353 + $0x58] sm:$0xff]
                  %378 = vst [vmem:[%s354 + $0x58] sm:$0xff] %v377
                  %v379 = vld [vmem:[%s353 + $0x60] sm:$0xff]
                  %380 = vst [vmem:[%s354 + $0x60] sm:$0xff] %v379
                  %v381 = vld [vmem:[%s353 + $0x68] sm:$0xff]
                  %382 = vst [vmem:[%s354 + $0x68] sm:$0xff] %v381
                  %v383 = vld [vmem:[%s353 + $0x70] sm:$0xff]
                  %384 = vst [vmem:[%s354 + $0x70] sm:$0xff] %v383
                  %v385 = vld [vmem:[%s353 + $0x78] sm:$0xff]
                  %386 = vst [vmem:[%s354 + $0x78] sm:$0xff] %v385
                  %v387 = vld [vmem:[%s353 + $0x200] sm:$0xff]
                  %388 = vst [vmem:[%s354 + $0x80] sm:$0xff] %v387
                  %v389 = vld [vmem:[%s353 + $0x208] sm:$0xff]
                  %390 = vst [vmem:[%s354 + $0x88] sm:$0xff] %v389
                  %v391 = vld [vmem:[%s353 + $0x210] sm:$0xff]
                  %392 = vst [vmem:[%s354 + $0x90] sm:$0xff] %v391
                  %v393 = vld [vmem:[%s353 + $0x218] sm:$0xff]
                  %394 = vst [vmem:[%s354 + $0x98] sm:$0xff] %v393
                  %v395 = vld [vmem:[%s353 + $0x220] sm:$0xff]
                  %396 = vst [vmem:[%s354 + $0xa0] sm:$0xff] %v395
                  %v397 = vld [vmem:[%s353 + $0x228] sm:$0xff]
                  %398 = vst [vmem:[%s354 + $0xa8] sm:$0xff] %v397
                  %v399 = vld [vmem:[%s353 + $0x230] sm:$0xff]
                  %400 = vst [vmem:[%s354 + $0xb0] sm:$0xff] %v399
                  %v401 = vld [vmem:[%s353 + $0x238] sm:$0xff]
                  %402 = vst [vmem:[%s354 + $0xb8] sm:$0xff] %v401
                  %v403 = vld [vmem:[%s353 + $0x240] sm:$0xff]
                  %404 = vst [vmem:[%s354 + $0xc0] sm:$0xff] %v403
                  %v405 = vld [vmem:[%s353 + $0x248] sm:$0xff]
                  %406 = vst [vmem:[%s354 + $0xc8] sm:$0xff] %v405
                  %v407 = vld [vmem:[%s353 + $0x250] sm:$0xff]
                  %408 = vst [vmem:[%s354 + $0xd0] sm:$0xff] %v407
                  %v409 = vld [vmem:[%s353 + $0x258] sm:$0xff]
                  %410 = vst [vmem:[%s354 + $0xd8] sm:$0xff] %v409
                  %v411 = vld [vmem:[%s353 + $0x260] sm:$0xff]
                  %412 = vst [vmem:[%s354 + $0xe0] sm:$0xff] %v411
                  %v413 = vld [vmem:[%s353 + $0x268] sm:$0xff]
                  %414 = vst [vmem:[%s354 + $0xe8] sm:$0xff] %v413
                  %v415 = vld [vmem:[%s353 + $0x270] sm:$0xff]
                  %416 = vst [vmem:[%s354 + $0xf0] sm:$0xff] %v415
                  %v417 = vld [vmem:[%s353 + $0x278] sm:$0xff]
                  %418 = vst [vmem:[%s354 + $0xf8] sm:$0xff] %v417
                $region60: #{tpu_custom_call.1} parent=54 // loop_footer
                  %s352 = sadd.s32 1, %s348
                $region61: #{tpu_custom_call.1} parent=54 // loop_footer_branch
                  %347 = sbr.rel target = $region57
                $region62: #{tpu_custom_call.1} parent=54 // loop_exit
                  _
              $region55: #{tpu_custom_call.1} parent=39 // pred_fallthru
                _
              // Predicated region
              $region63: #{tpu_custom_call.1} parent=39 // pred_check
                _
              $region64: #{tpu_custom_call.1} parent=39 // pred_check_branch
                %420 = sbr.rel target = $region66
              $region65: #{tpu_custom_call.1} parent=39 // pred_region
                _
              $region66: #{tpu_custom_call.1} parent=39 // pred_fallthru
                _
            $region40: #{tpu_custom_call.1} parent=35 // pred_fallthru
              _
            // Predicated region
            $region41: #{tpu_custom_call.1} parent=35 // pred_check
              _
            $region42: #{tpu_custom_call.1} parent=35 // pred_check_branch
              %271 = sbr.rel target = $region44
            $region43: #{tpu_custom_call.1} parent=35 // pred_region
              loop: start=0, step=1, limit=1
              $region45: #{tpu_custom_call.1} parent=43 // loop_pre_header
                _
              $region46: #{tpu_custom_call.1} parent=43 // loop_header
                %s274 = sphi 0, %s278
                %p275 = scmp.ge.s32.totalorder %s274, 1
                %s279 = sphi %s265, %s265
                %s280 = sphi %s262, %s262
              $region47: #{tpu_custom_call.1} parent=43 // loop_header_branch
                %277 = sbr.rel (%p275) target = $region51
              $region48: #{tpu_custom_call.1} parent=43 // loop_body
                %v281 = vld [vmem:[%s279] sm:$0xff]
                %282 = vst [vmem:[%s280] sm:$0xff] %v281
                %v283 = vld [vmem:[%s279 + $0x8] sm:$0xff]
                %284 = vst [vmem:[%s280 + $0x8] sm:$0xff] %v283
                %v285 = vld [vmem:[%s279 + $0x10] sm:$0xff]
                %286 = vst [vmem:[%s280 + $0x10] sm:$0xff] %v285
                %v287 = vld [vmem:[%s279 + $0x18] sm:$0xff]
                %288 = vst [vmem:[%s280 + $0x18] sm:$0xff] %v287
                %v289 = vld [vmem:[%s279 + $0x20] sm:$0xff]
                %290 = vst [vmem:[%s280 + $0x20] sm:$0xff] %v289
                %v291 = vld [vmem:[%s279 + $0x28] sm:$0xff]
                %292 = vst [vmem:[%s280 + $0x28] sm:$0xff] %v291
                %v293 = vld [vmem:[%s279 + $0x30] sm:$0xff]
                %294 = vst [vmem:[%s280 + $0x30] sm:$0xff] %v293
                %v295 = vld [vmem:[%s279 + $0x38] sm:$0xff]
                %296 = vst [vmem:[%s280 + $0x38] sm:$0xff] %v295
                %v297 = vld [vmem:[%s279 + $0x40] sm:$0xff]
                %298 = vst [vmem:[%s280 + $0x40] sm:$0xff] %v297
                %v299 = vld [vmem:[%s279 + $0x48] sm:$0xff]
                %300 = vst [vmem:[%s280 + $0x48] sm:$0xff] %v299
                %v301 = vld [vmem:[%s279 + $0x50] sm:$0xff]
                %302 = vst [vmem:[%s280 + $0x50] sm:$0xff] %v301
                %v303 = vld [vmem:[%s279 + $0x58] sm:$0xff]
                %304 = vst [vmem:[%s280 + $0x58] sm:$0xff] %v303
                %v305 = vld [vmem:[%s279 + $0x60] sm:$0xff]
                %306 = vst [vmem:[%s280 + $0x60] sm:$0xff] %v305
                %v307 = vld [vmem:[%s279 + $0x68] sm:$0xff]
                %308 = vst [vmem:[%s280 + $0x68] sm:$0xff] %v307
                %v309 = vld [vmem:[%s279 + $0x70] sm:$0xff]
                %310 = vst [vmem:[%s280 + $0x70] sm:$0xff] %v309
                %v311 = vld [vmem:[%s279 + $0x78] sm:$0xff]
                %312 = vst [vmem:[%s280 + $0x78] sm:$0xff] %v311
                %v313 = vld [vmem:[%s279 + $0x200] sm:$0xff]
                %314 = vst [vmem:[%s280 + $0x80] sm:$0xff] %v313
                %v315 = vld [vmem:[%s279 + $0x208] sm:$0xff]
                %316 = vst [vmem:[%s280 + $0x88] sm:$0xff] %v315
                %v317 = vld [vmem:[%s279 + $0x210] sm:$0xff]
                %318 = vst [vmem:[%s280 + $0x90] sm:$0xff] %v317
                %v319 = vld [vmem:[%s279 + $0x218] sm:$0xff]
                %320 = vst [vmem:[%s280 + $0x98] sm:$0xff] %v319
                %v321 = vld [vmem:[%s279 + $0x220] sm:$0xff]
                %322 = vst [vmem:[%s280 + $0xa0] sm:$0xff] %v321
                %v323 = vld [vmem:[%s279 + $0x228] sm:$0xff]
                %324 = vst [vmem:[%s280 + $0xa8] sm:$0xff] %v323
                %v325 = vld [vmem:[%s279 + $0x230] sm:$0xff]
                %326 = vst [vmem:[%s280 + $0xb0] sm:$0xff] %v325
                %v327 = vld [vmem:[%s279 + $0x238] sm:$0xff]
                %328 = vst [vmem:[%s280 + $0xb8] sm:$0xff] %v327
                %v329 = vld [vmem:[%s279 + $0x240] sm:$0xff]
                %330 = vst [vmem:[%s280 + $0xc0] sm:$0xff] %v329
                %v331 = vld [vmem:[%s279 + $0x248] sm:$0xff]
                %332 = vst [vmem:[%s280 + $0xc8] sm:$0xff] %v331
                %v333 = vld [vmem:[%s279 + $0x250] sm:$0xff]
                %334 = vst [vmem:[%s280 + $0xd0] sm:$0xff] %v333
                %v335 = vld [vmem:[%s279 + $0x258] sm:$0xff]
                %336 = vst [vmem:[%s280 + $0xd8] sm:$0xff] %v335
                %v337 = vld [vmem:[%s279 + $0x260] sm:$0xff]
                %338 = vst [vmem:[%s280 + $0xe0] sm:$0xff] %v337
                %v339 = vld [vmem:[%s279 + $0x268] sm:$0xff]
                %340 = vst [vmem:[%s280 + $0xe8] sm:$0xff] %v339
                %v341 = vld [vmem:[%s279 + $0x270] sm:$0xff]
                %342 = vst [vmem:[%s280 + $0xf0] sm:$0xff] %v341
                %v343 = vld [vmem:[%s279 + $0x278] sm:$0xff]
                %344 = vst [vmem:[%s280 + $0xf8] sm:$0xff] %v343
              $region49: #{tpu_custom_call.1} parent=43 // loop_footer
                %s278 = sadd.s32 1, %s274
              $region50: #{tpu_custom_call.1} parent=43 // loop_footer_branch
                %273 = sbr.rel target = $region46
              $region51: #{tpu_custom_call.1} parent=43 // loop_exit
                _
            $region44: #{tpu_custom_call.1} parent=35 // pred_fallthru
              _
          $region36: #{tpu_custom_call.1} parent=31 // pred_fallthru
            _
          %421 = vnop
        $region32: #{tpu_custom_call.1} parent=27 // pred_fallthru
          _
        // Predicated region
        $region67: #{tpu_custom_call.1} parent=27 // pred_check
          %p422 = pneg %p79
        $region68: #{tpu_custom_call.1} parent=27 // pred_check_branch
          %424 = sbr.rel (%p422) target = $region70
        $region69: #{tpu_custom_call.1} parent=27 // pred_region
          %s425 = sand.u32 %s69, 1
          %s426 = sand.u32 %s69, 1
          %s427 = smul.addr %s426, 4
          %s428 = scalar_lea.vmem [#allocation7], %s427
          %s429 = smul.u32 2, %s29
          %s430 = scalar_lea.vmem %s2, %s429
          // Predicated region
          $region71: #{tpu_custom_call.1} parent=69 // pred_check
            _
          $region72: #{tpu_custom_call.1} parent=69 // pred_check_branch
            %432 = sbr.rel (0) target = $region74
          $region73: #{tpu_custom_call.1} parent=69 // pred_region
            // Predicated region
            $region75: #{tpu_custom_call.1} parent=73 // pred_check
              _
            $region76: #{tpu_custom_call.1} parent=73 // pred_check_branch
              %434 = sbr.rel target = $region78
            $region77: #{tpu_custom_call.1} parent=73 // pred_region
              // Predicated region
              $region90: #{tpu_custom_call.1} parent=77 // pred_check
                _
              $region91: #{tpu_custom_call.1} parent=77 // pred_check_branch
                %451 = sbr.rel (0) target = $region93
              $region92: #{tpu_custom_call.1} parent=77 // pred_region
                loop: start=0, step=1, limit=1
                $region94: #{tpu_custom_call.1} parent=92 // loop_pre_header
                  _
                $region95: #{tpu_custom_call.1} parent=92 // loop_header
                  %s454 = sphi 0, %s458
                  %p455 = scmp.ge.s32.totalorder %s454, 1
                  %s459 = sphi %s430, %s430
                  %s460 = sphi %s428, %s428
                $region96: #{tpu_custom_call.1} parent=92 // loop_header_branch
                  %457 = sbr.rel (%p455) target = $region100
                $region97: #{tpu_custom_call.1} parent=92 // loop_body
                  %v461 = vld [vmem:[%s459] sm:$0x3]
                  %462 = vst [vmem:[%s460] sm:$0x3] %v461
                  %v463 = vld [vmem:[%s459 + $0x4] sm:$0x3]
                  %464 = vst [vmem:[%s460 + $0x2] sm:$0x3] %v463
                $region98: #{tpu_custom_call.1} parent=92 // loop_footer
                  %s458 = sadd.s32 1, %s454
                $region99: #{tpu_custom_call.1} parent=92 // loop_footer_branch
                  %453 = sbr.rel target = $region95
                $region100: #{tpu_custom_call.1} parent=92 // loop_exit
                  _
              $region93: #{tpu_custom_call.1} parent=77 // pred_fallthru
                _
            $region78: #{tpu_custom_call.1} parent=73 // pred_fallthru
              _
            // Predicated region
            $region79: #{tpu_custom_call.1} parent=73 // pred_check
              _
            $region80: #{tpu_custom_call.1} parent=73 // pred_check_branch
              %436 = sbr.rel (0) target = $region82
            $region81: #{tpu_custom_call.1} parent=73 // pred_region
              loop: start=0, step=1, limit=1
              $region83: #{tpu_custom_call.1} parent=81 // loop_pre_header
                _
              $region84: #{tpu_custom_call.1} parent=81 // loop_header
                %s439 = sphi 0, %s443
                %p440 = scmp.ge.s32.totalorder %s439, 1
                %s444 = sphi %s430, %s430
                %s445 = sphi %s428, %s428
              $region85: #{tpu_custom_call.1} parent=81 // loop_header_branch
                %442 = sbr.rel (%p440) target = $region89
              $region86: #{tpu_custom_call.1} parent=81 // loop_body
                %v446 = vld [vmem:[%s444] sm:$0x3]
                %447 = vst [vmem:[%s445] sm:$0x3] %v446
                %v448 = vld [vmem:[%s444 + $0x4] sm:$0x3]
                %449 = vst [vmem:[%s445 + $0x2] sm:$0x3] %v448
              $region87: #{tpu_custom_call.1} parent=81 // loop_footer
                %s443 = sadd.s32 1, %s439
              $region88: #{tpu_custom_call.1} parent=81 // loop_footer_branch
                %438 = sbr.rel target = $region84
              $region89: #{tpu_custom_call.1} parent=81 // loop_exit
                _
            $region82: #{tpu_custom_call.1} parent=73 // pred_fallthru
              _
          $region74: #{tpu_custom_call.1} parent=69 // pred_fallthru
            _
          %465 = vnop
        $region70: #{tpu_custom_call.1} parent=27 // pred_fallthru
          _
        // Predicated region
        $region101: #{tpu_custom_call.1} parent=27 // pred_check
          %p466 = pneg %p105
        $region102: #{tpu_custom_call.1} parent=27 // pred_check_branch
          %468 = sbr.rel (%p466) target = $region104
        $region103: #{tpu_custom_call.1} parent=27 // pred_region
          %s469 = sand.u32 %s95, 1
          %s470 = sand.u32 %s95, 1
          %s471 = smul.addr %s470, 256
          %s472 = scalar_lea.vmem [#allocation8], %s471
          %s473 = smul.u32 32, %s29
          %s474 = smul.addr %s473, 4
          %s475 = scalar_lea.vmem %s3, %s474
          // Predicated region
          $region105: #{tpu_custom_call.1} parent=103 // pred_check
            _
          $region106: #{tpu_custom_call.1} parent=103 // pred_check_branch
            %477 = sbr.rel (0) target = $region108
          $region107: #{tpu_custom_call.1} parent=103 // pred_region
            // Predicated region
            $region109: #{tpu_custom_call.1} parent=107 // pred_check
              _
            $region110: #{tpu_custom_call.1} parent=107 // pred_check_branch
              %479 = sbr.rel target = $region112
            $region111: #{tpu_custom_call.1} parent=107 // pred_region
              // Predicated region
              $region124: #{tpu_custom_call.1} parent=111 // pred_check
                _
              $region125: #{tpu_custom_call.1} parent=111 // pred_check_branch
                %620 = sbr.rel (0) target = $region127
              $region126: #{tpu_custom_call.1} parent=111 // pred_region
                loop: start=0, step=1, limit=1
                $region128: #{tpu_custom_call.1} parent=126 // loop_pre_header
                  _
                $region129: #{tpu_custom_call.1} parent=126 // loop_header
                  %s622 = sphi 0, %s626
                  %p623 = scmp.ge.s32.totalorder %s622, 1
                  %s627 = sphi %s475, %s475
                  %s628 = sphi %s472, %s472
                $region130: #{tpu_custom_call.1} parent=126 // loop_header_branch
                  %625 = sbr.rel (%p623) target = $region134
                $region131: #{tpu_custom_call.1} parent=126 // loop_body
                  _
                $region132: #{tpu_custom_call.1} parent=126 // loop_footer
                  %s626 = sadd.s32 1, %s622
                $region133: #{tpu_custom_call.1} parent=126 // loop_footer_branch
                  %621 = sbr.rel target = $region129
                $region134: #{tpu_custom_call.1} parent=126 // loop_exit
                  _
                loop: start=0, step=1, limit=1
                $region135: #{tpu_custom_call.1} parent=126 // loop_pre_header
                  _
                $region136: #{tpu_custom_call.1} parent=126 // loop_header
                  %s631 = sphi 0, %s635
                  %p632 = scmp.ge.s32.totalorder %s631, 1
                  %s636 = sphi %s475, %s475
                  %s637 = sphi %s472, %s472
                $region137: #{tpu_custom_call.1} parent=126 // loop_header_branch
                  %634 = sbr.rel (%p632) target = $region141
                $region138: #{tpu_custom_call.1} parent=126 // loop_body
                  %v638 = vld [vmem:[%s636] sm:$0xf]
                  %639 = vst [vmem:[%s637] sm:$0xf] %v638
                  %v640 = vld [vmem:[%s636 + $0x4] sm:$0xf]
                  %641 = vst [vmem:[%s637 + $0x4] sm:$0xf] %v640
                  %v642 = vld [vmem:[%s636 + $0x8] sm:$0xf]
                  %643 = vst [vmem:[%s637 + $0x8] sm:$0xf] %v642
                  %v644 = vld [vmem:[%s636 + $0xc] sm:$0xf]
                  %645 = vst [vmem:[%s637 + $0xc] sm:$0xf] %v644
                  %v646 = vld [vmem:[%s636 + $0x10] sm:$0xf]
                  %647 = vst [vmem:[%s637 + $0x10] sm:$0xf] %v646
                  %v648 = vld [vmem:[%s636 + $0x14] sm:$0xf]
                  %649 = vst [vmem:[%s637 + $0x14] sm:$0xf] %v648
                  %v650 = vld [vmem:[%s636 + $0x18] sm:$0xf]
                  %651 = vst [vmem:[%s637 + $0x18] sm:$0xf] %v650
                  %v652 = vld [vmem:[%s636 + $0x1c] sm:$0xf]
                  %653 = vst [vmem:[%s637 + $0x1c] sm:$0xf] %v652
                  %v654 = vld [vmem:[%s636 + $0x20] sm:$0xf]
                  %655 = vst [vmem:[%s637 + $0x20] sm:$0xf] %v654
                  %v656 = vld [vmem:[%s636 + $0x24] sm:$0xf]
                  %657 = vst [vmem:[%s637 + $0x24] sm:$0xf] %v656
                  %v658 = vld [vmem:[%s636 + $0x28] sm:$0xf]
                  %659 = vst [vmem:[%s637 + $0x28] sm:$0xf] %v658
                  %v660 = vld [vmem:[%s636 + $0x2c] sm:$0xf]
                  %661 = vst [vmem:[%s637 + $0x2c] sm:$0xf] %v660
                  %v662 = vld [vmem:[%s636 + $0x30] sm:$0xf]
                  %663 = vst [vmem:[%s637 + $0x30] sm:$0xf] %v662
                  %v664 = vld [vmem:[%s636 + $0x34] sm:$0xf]
                  %665 = vst [vmem:[%s637 + $0x34] sm:$0xf] %v664
                  %v666 = vld [vmem:[%s636 + $0x38] sm:$0xf]
                  %667 = vst [vmem:[%s637 + $0x38] sm:$0xf] %v666
                  %v668 = vld [vmem:[%s636 + $0x3c] sm:$0xf]
                  %669 = vst [vmem:[%s637 + $0x3c] sm:$0xf] %v668
                  %v670 = vld [vmem:[%s636 + $0x40] sm:$0xf]
                  %671 = vst [vmem:[%s637 + $0x40] sm:$0xf] %v670
                  %v672 = vld [vmem:[%s636 + $0x44] sm:$0xf]
                  %673 = vst [vmem:[%s637 + $0x44] sm:$0xf] %v672
                  %v674 = vld [vmem:[%s636 + $0x48] sm:$0xf]
                  %675 = vst [vmem:[%s637 + $0x48] sm:$0xf] %v674
                  %v676 = vld [vmem:[%s636 + $0x4c] sm:$0xf]
                  %677 = vst [vmem:[%s637 + $0x4c] sm:$0xf] %v676
                  %v678 = vld [vmem:[%s636 + $0x50] sm:$0xf]
                  %679 = vst [vmem:[%s637 + $0x50] sm:$0xf] %v678
                  %v680 = vld [vmem:[%s636 + $0x54] sm:$0xf]
                  %681 = vst [vmem:[%s637 + $0x54] sm:$0xf] %v680
                  %v682 = vld [vmem:[%s636 + $0x58] sm:$0xf]
                  %683 = vst [vmem:[%s637 + $0x58] sm:$0xf] %v682
                  %v684 = vld [vmem:[%s636 + $0x5c] sm:$0xf]
                  %685 = vst [vmem:[%s637 + $0x5c] sm:$0xf] %v684
                  %v686 = vld [vmem:[%s636 + $0x60] sm:$0xf]
                  %687 = vst [vmem:[%s637 + $0x60] sm:$0xf] %v686
                  %v688 = vld [vmem:[%s636 + $0x64] sm:$0xf]
                  %689 = vst [vmem:[%s637 + $0x64] sm:$0xf] %v688
                  %v690 = vld [vmem:[%s636 + $0x68] sm:$0xf]
                  %691 = vst [vmem:[%s637 + $0x68] sm:$0xf] %v690
                  %v692 = vld [vmem:[%s636 + $0x6c] sm:$0xf]
                  %693 = vst [vmem:[%s637 + $0x6c] sm:$0xf] %v692
                  %v694 = vld [vmem:[%s636 + $0x70] sm:$0xf]
                  %695 = vst [vmem:[%s637 + $0x70] sm:$0xf] %v694
                  %v696 = vld [vmem:[%s636 + $0x74] sm:$0xf]
                  %697 = vst [vmem:[%s637 + $0x74] sm:$0xf] %v696
                  %v698 = vld [vmem:[%s636 + $0x78] sm:$0xf]
                  %699 = vst [vmem:[%s637 + $0x78] sm:$0xf] %v698
                  %v700 = vld [vmem:[%s636 + $0x7c] sm:$0xf]
                  %701 = vst [vmem:[%s637 + $0x7c] sm:$0xf] %v700
                  %v702 = vld [vmem:[%s636 + $0x100] sm:$0xf]
                  %703 = vst [vmem:[%s637 + $0x80] sm:$0xf] %v702
                  %v704 = vld [vmem:[%s636 + $0x104] sm:$0xf]
                  %705 = vst [vmem:[%s637 + $0x84] sm:$0xf] %v704
                  %v706 = vld [vmem:[%s636 + $0x108] sm:$0xf]
                  %707 = vst [vmem:[%s637 + $0x88] sm:$0xf] %v706
                  %v708 = vld [vmem:[%s636 + $0x10c] sm:$0xf]
                  %709 = vst [vmem:[%s637 + $0x8c] sm:$0xf] %v708
                  %v710 = vld [vmem:[%s636 + $0x110] sm:$0xf]
                  %711 = vst [vmem:[%s637 + $0x90] sm:$0xf] %v710
                  %v712 = vld [vmem:[%s636 + $0x114] sm:$0xf]
                  %713 = vst [vmem:[%s637 + $0x94] sm:$0xf] %v712
                  %v714 = vld [vmem:[%s636 + $0x118] sm:$0xf]
                  %715 = vst [vmem:[%s637 + $0x98] sm:$0xf] %v714
                  %v716 = vld [vmem:[%s636 + $0x11c] sm:$0xf]
                  %717 = vst [vmem:[%s637 + $0x9c] sm:$0xf] %v716
                  %v718 = vld [vmem:[%s636 + $0x120] sm:$0xf]
                  %719 = vst [vmem:[%s637 + $0xa0] sm:$0xf] %v718
                  %v720 = vld [vmem:[%s636 + $0x124] sm:$0xf]
                  %721 = vst [vmem:[%s637 + $0xa4] sm:$0xf] %v720
                  %v722 = vld [vmem:[%s636 + $0x128] sm:$0xf]
                  %723 = vst [vmem:[%s637 + $0xa8] sm:$0xf] %v722
                  %v724 = vld [vmem:[%s636 + $0x12c] sm:$0xf]
                  %725 = vst [vmem:[%s637 + $0xac] sm:$0xf] %v724
                  %v726 = vld [vmem:[%s636 + $0x130] sm:$0xf]
                  %727 = vst [vmem:[%s637 + $0xb0] sm:$0xf] %v726
                  %v728 = vld [vmem:[%s636 + $0x134] sm:$0xf]
                  %729 = vst [vmem:[%s637 + $0xb4] sm:$0xf] %v728
                  %v730 = vld [vmem:[%s636 + $0x138] sm:$0xf]
                  %731 = vst [vmem:[%s637 + $0xb8] sm:$0xf] %v730
                  %v732 = vld [vmem:[%s636 + $0x13c] sm:$0xf]
                  %733 = vst [vmem:[%s637 + $0xbc] sm:$0xf] %v732
                  %v734 = vld [vmem:[%s636 + $0x140] sm:$0xf]
                  %735 = vst [vmem:[%s637 + $0xc0] sm:$0xf] %v734
                  %v736 = vld [vmem:[%s636 + $0x144] sm:$0xf]
                  %737 = vst [vmem:[%s637 + $0xc4] sm:$0xf] %v736
                  %v738 = vld [vmem:[%s636 + $0x148] sm:$0xf]
                  %739 = vst [vmem:[%s637 + $0xc8] sm:$0xf] %v738
                  %v740 = vld [vmem:[%s636 + $0x14c] sm:$0xf]
                  %741 = vst [vmem:[%s637 + $0xcc] sm:$0xf] %v740
                  %v742 = vld [vmem:[%s636 + $0x150] sm:$0xf]
                  %743 = vst [vmem:[%s637 + $0xd0] sm:$0xf] %v742
                  %v744 = vld [vmem:[%s636 + $0x154] sm:$0xf]
                  %745 = vst [vmem:[%s637 + $0xd4] sm:$0xf] %v744
                  %v746 = vld [vmem:[%s636 + $0x158] sm:$0xf]
                  %747 = vst [vmem:[%s637 + $0xd8] sm:$0xf] %v746
                  %v748 = vld [vmem:[%s636 + $0x15c] sm:$0xf]
                  %749 = vst [vmem:[%s637 + $0xdc] sm:$0xf] %v748
                  %v750 = vld [vmem:[%s636 + $0x160] sm:$0xf]
                  %751 = vst [vmem:[%s637 + $0xe0] sm:$0xf] %v750
                  %v752 = vld [vmem:[%s636 + $0x164] sm:$0xf]
                  %753 = vst [vmem:[%s637 + $0xe4] sm:$0xf] %v752
                  %v754 = vld [vmem:[%s636 + $0x168] sm:$0xf]
                  %755 = vst [vmem:[%s637 + $0xe8] sm:$0xf] %v754
                  %v756 = vld [vmem:[%s636 + $0x16c] sm:$0xf]
                  %757 = vst [vmem:[%s637 + $0xec] sm:$0xf] %v756
                  %v758 = vld [vmem:[%s636 + $0x170] sm:$0xf]
                  %759 = vst [vmem:[%s637 + $0xf0] sm:$0xf] %v758
                  %v760 = vld [vmem:[%s636 + $0x174] sm:$0xf]
                  %761 = vst [vmem:[%s637 + $0xf4] sm:$0xf] %v760
                  %v762 = vld [vmem:[%s636 + $0x178] sm:$0xf]
                  %763 = vst [vmem:[%s637 + $0xf8] sm:$0xf] %v762
                  %v764 = vld [vmem:[%s636 + $0x17c] sm:$0xf]
                  %765 = vst [vmem:[%s637 + $0xfc] sm:$0xf] %v764
                $region139: #{tpu_custom_call.1} parent=126 // loop_footer
                  %s635 = sadd.s32 1, %s631
                $region140: #{tpu_custom_call.1} parent=126 // loop_footer_branch
                  %630 = sbr.rel target = $region136
                $region141: #{tpu_custom_call.1} parent=126 // loop_exit
                  _
              $region127: #{tpu_custom_call.1} parent=111 // pred_fallthru
                _
            $region112: #{tpu_custom_call.1} parent=107 // pred_fallthru
              _
            // Predicated region
            $region113: #{tpu_custom_call.1} parent=107 // pred_check
              _
            $region114: #{tpu_custom_call.1} parent=107 // pred_check_branch
              %481 = sbr.rel (0) target = $region116
            $region115: #{tpu_custom_call.1} parent=107 // pred_region
              loop: start=0, step=1, limit=1
              $region117: #{tpu_custom_call.1} parent=115 // loop_pre_header
                _
              $region118: #{tpu_custom_call.1} parent=115 // loop_header
                %s484 = sphi 0, %s488
                %p485 = scmp.ge.s32.totalorder %s484, 1
                %s489 = sphi %s475, %s475
                %s490 = sphi %s472, %s472
              $region119: #{tpu_custom_call.1} parent=115 // loop_header_branch
                %487 = sbr.rel (%p485) target = $region123
              $region120: #{tpu_custom_call.1} parent=115 // loop_body
                %v491 = vld [vmem:[%s489] sm:$0xf]
                %492 = vst [vmem:[%s490] sm:$0xf] %v491
                %v493 = vld [vmem:[%s489 + $0x4] sm:$0xf]
                %494 = vst [vmem:[%s490 + $0x4] sm:$0xf] %v493
                %v495 = vld [vmem:[%s489 + $0x8] sm:$0xf]
                %496 = vst [vmem:[%s490 + $0x8] sm:$0xf] %v495
                %v497 = vld [vmem:[%s489 + $0xc] sm:$0xf]
                %498 = vst [vmem:[%s490 + $0xc] sm:$0xf] %v497
                %v499 = vld [vmem:[%s489 + $0x10] sm:$0xf]
                %500 = vst [vmem:[%s490 + $0x10] sm:$0xf] %v499
                %v501 = vld [vmem:[%s489 + $0x14] sm:$0xf]
                %502 = vst [vmem:[%s490 + $0x14] sm:$0xf] %v501
                %v503 = vld [vmem:[%s489 + $0x18] sm:$0xf]
                %504 = vst [vmem:[%s490 + $0x18] sm:$0xf] %v503
                %v505 = vld [vmem:[%s489 + $0x1c] sm:$0xf]
                %506 = vst [vmem:[%s490 + $0x1c] sm:$0xf] %v505
                %v507 = vld [vmem:[%s489 + $0x20] sm:$0xf]
                %508 = vst [vmem:[%s490 + $0x20] sm:$0xf] %v507
                %v509 = vld [vmem:[%s489 + $0x24] sm:$0xf]
                %510 = vst [vmem:[%s490 + $0x24] sm:$0xf] %v509
                %v511 = vld [vmem:[%s489 + $0x28] sm:$0xf]
                %512 = vst [vmem:[%s490 + $0x28] sm:$0xf] %v511
                %v513 = vld [vmem:[%s489 + $0x2c] sm:$0xf]
                %514 = vst [vmem:[%s490 + $0x2c] sm:$0xf] %v513
                %v515 = vld [vmem:[%s489 + $0x30] sm:$0xf]
                %516 = vst [vmem:[%s490 + $0x30] sm:$0xf] %v515
                %v517 = vld [vmem:[%s489 + $0x34] sm:$0xf]
                %518 = vst [vmem:[%s490 + $0x34] sm:$0xf] %v517
                %v519 = vld [vmem:[%s489 + $0x38] sm:$0xf]
                %520 = vst [vmem:[%s490 + $0x38] sm:$0xf] %v519
                %v521 = vld [vmem:[%s489 + $0x3c] sm:$0xf]
                %522 = vst [vmem:[%s490 + $0x3c] sm:$0xf] %v521
                %v523 = vld [vmem:[%s489 + $0x40] sm:$0xf]
                %524 = vst [vmem:[%s490 + $0x40] sm:$0xf] %v523
                %v525 = vld [vmem:[%s489 + $0x44] sm:$0xf]
                %526 = vst [vmem:[%s490 + $0x44] sm:$0xf] %v525
                %v527 = vld [vmem:[%s489 + $0x48] sm:$0xf]
                %528 = vst [vmem:[%s490 + $0x48] sm:$0xf] %v527
                %v529 = vld [vmem:[%s489 + $0x4c] sm:$0xf]
                %530 = vst [vmem:[%s490 + $0x4c] sm:$0xf] %v529
                %v531 = vld [vmem:[%s489 + $0x50] sm:$0xf]
                %532 = vst [vmem:[%s490 + $0x50] sm:$0xf] %v531
                %v533 = vld [vmem:[%s489 + $0x54] sm:$0xf]
                %534 = vst [vmem:[%s490 + $0x54] sm:$0xf] %v533
                %v535 = vld [vmem:[%s489 + $0x58] sm:$0xf]
                %536 = vst [vmem:[%s490 + $0x58] sm:$0xf] %v535
                %v537 = vld [vmem:[%s489 + $0x5c] sm:$0xf]
                %538 = vst [vmem:[%s490 + $0x5c] sm:$0xf] %v537
                %v539 = vld [vmem:[%s489 + $0x60] sm:$0xf]
                %540 = vst [vmem:[%s490 + $0x60] sm:$0xf] %v539
                %v541 = vld [vmem:[%s489 + $0x64] sm:$0xf]
                %542 = vst [vmem:[%s490 + $0x64] sm:$0xf] %v541
                %v543 = vld [vmem:[%s489 + $0x68] sm:$0xf]
                %544 = vst [vmem:[%s490 + $0x68] sm:$0xf] %v543
                %v545 = vld [vmem:[%s489 + $0x6c] sm:$0xf]
                %546 = vst [vmem:[%s490 + $0x6c] sm:$0xf] %v545
                %v547 = vld [vmem:[%s489 + $0x70] sm:$0xf]
                %548 = vst [vmem:[%s490 + $0x70] sm:$0xf] %v547
                %v549 = vld [vmem:[%s489 + $0x74] sm:$0xf]
                %550 = vst [vmem:[%s490 + $0x74] sm:$0xf] %v549
                %v551 = vld [vmem:[%s489 + $0x78] sm:$0xf]
                %552 = vst [vmem:[%s490 + $0x78] sm:$0xf] %v551
                %v553 = vld [vmem:[%s489 + $0x7c] sm:$0xf]
                %554 = vst [vmem:[%s490 + $0x7c] sm:$0xf] %v553
                %v555 = vld [vmem:[%s489 + $0x100] sm:$0xf]
                %556 = vst [vmem:[%s490 + $0x80] sm:$0xf] %v555
                %v557 = vld [vmem:[%s489 + $0x104] sm:$0xf]
                %558 = vst [vmem:[%s490 + $0x84] sm:$0xf] %v557
                %v559 = vld [vmem:[%s489 + $0x108] sm:$0xf]
                %560 = vst [vmem:[%s490 + $0x88] sm:$0xf] %v559
                %v561 = vld [vmem:[%s489 + $0x10c] sm:$0xf]
                %562 = vst [vmem:[%s490 + $0x8c] sm:$0xf] %v561
                %v563 = vld [vmem:[%s489 + $0x110] sm:$0xf]
                %564 = vst [vmem:[%s490 + $0x90] sm:$0xf] %v563
                %v565 = vld [vmem:[%s489 + $0x114] sm:$0xf]
                %566 = vst [vmem:[%s490 + $0x94] sm:$0xf] %v565
                %v567 = vld [vmem:[%s489 + $0x118] sm:$0xf]
                %568 = vst [vmem:[%s490 + $0x98] sm:$0xf] %v567
                %v569 = vld [vmem:[%s489 + $0x11c] sm:$0xf]
                %570 = vst [vmem:[%s490 + $0x9c] sm:$0xf] %v569
                %v571 = vld [vmem:[%s489 + $0x120] sm:$0xf]
                %572 = vst [vmem:[%s490 + $0xa0] sm:$0xf] %v571
                %v573 = vld [vmem:[%s489 + $0x124] sm:$0xf]
                %574 = vst [vmem:[%s490 + $0xa4] sm:$0xf] %v573
                %v575 = vld [vmem:[%s489 + $0x128] sm:$0xf]
                %576 = vst [vmem:[%s490 + $0xa8] sm:$0xf] %v575
                %v577 = vld [vmem:[%s489 + $0x12c] sm:$0xf]
                %578 = vst [vmem:[%s490 + $0xac] sm:$0xf] %v577
                %v579 = vld [vmem:[%s489 + $0x130] sm:$0xf]
                %580 = vst [vmem:[%s490 + $0xb0] sm:$0xf] %v579
                %v581 = vld [vmem:[%s489 + $0x134] sm:$0xf]
                %582 = vst [vmem:[%s490 + $0xb4] sm:$0xf] %v581
                %v583 = vld [vmem:[%s489 + $0x138] sm:$0xf]
                %584 = vst [vmem:[%s490 + $0xb8] sm:$0xf] %v583
                %v585 = vld [vmem:[%s489 + $0x13c] sm:$0xf]
                %586 = vst [vmem:[%s490 + $0xbc] sm:$0xf] %v585
                %v587 = vld [vmem:[%s489 + $0x140] sm:$0xf]
                %588 = vst [vmem:[%s490 + $0xc0] sm:$0xf] %v587
                %v589 = vld [vmem:[%s489 + $0x144] sm:$0xf]
                %590 = vst [vmem:[%s490 + $0xc4] sm:$0xf] %v589
                %v591 = vld [vmem:[%s489 + $0x148] sm:$0xf]
                %592 = vst [vmem:[%s490 + $0xc8] sm:$0xf] %v591
                %v593 = vld [vmem:[%s489 + $0x14c] sm:$0xf]
                %594 = vst [vmem:[%s490 + $0xcc] sm:$0xf] %v593
                %v595 = vld [vmem:[%s489 + $0x150] sm:$0xf]
                %596 = vst [vmem:[%s490 + $0xd0] sm:$0xf] %v595
                %v597 = vld [vmem:[%s489 + $0x154] sm:$0xf]
                %598 = vst [vmem:[%s490 + $0xd4] sm:$0xf] %v597
                %v599 = vld [vmem:[%s489 + $0x158] sm:$0xf]
                %600 = vst [vmem:[%s490 + $0xd8] sm:$0xf] %v599
                %v601 = vld [vmem:[%s489 + $0x15c] sm:$0xf]
                %602 = vst [vmem:[%s490 + $0xdc] sm:$0xf] %v601
                %v603 = vld [vmem:[%s489 + $0x160] sm:$0xf]
                %604 = vst [vmem:[%s490 + $0xe0] sm:$0xf] %v603
                %v605 = vld [vmem:[%s489 + $0x164] sm:$0xf]
                %606 = vst [vmem:[%s490 + $0xe4] sm:$0xf] %v605
                %v607 = vld [vmem:[%s489 + $0x168] sm:$0xf]
                %608 = vst [vmem:[%s490 + $0xe8] sm:$0xf] %v607
                %v609 = vld [vmem:[%s489 + $0x16c] sm:$0xf]
                %610 = vst [vmem:[%s490 + $0xec] sm:$0xf] %v609
                %v611 = vld [vmem:[%s489 + $0x170] sm:$0xf]
                %612 = vst [vmem:[%s490 + $0xf0] sm:$0xf] %v611
                %v613 = vld [vmem:[%s489 + $0x174] sm:$0xf]
                %614 = vst [vmem:[%s490 + $0xf4] sm:$0xf] %v613
                %v615 = vld [vmem:[%s489 + $0x178] sm:$0xf]
                %616 = vst [vmem:[%s490 + $0xf8] sm:$0xf] %v615
                %v617 = vld [vmem:[%s489 + $0x17c] sm:$0xf]
                %618 = vst [vmem:[%s490 + $0xfc] sm:$0xf] %v617
              $region121: #{tpu_custom_call.1} parent=115 // loop_footer
                %s488 = sadd.s32 1, %s484
              $region122: #{tpu_custom_call.1} parent=115 // loop_footer_branch
                %483 = sbr.rel target = $region118
              $region123: #{tpu_custom_call.1} parent=115 // loop_exit
                _
            $region116: #{tpu_custom_call.1} parent=107 // pred_fallthru
              _
          $region108: #{tpu_custom_call.1} parent=103 // pred_fallthru
            _
          %766 = vnop
        $region104: #{tpu_custom_call.1} parent=27 // pred_fallthru
          _
        // Predicated region
        $region142: #{tpu_custom_call.1} parent=27 // pred_check
          %p767 = pneg %p133
        $region143: #{tpu_custom_call.1} parent=27 // pred_check_branch
          %769 = sbr.rel (%p767) target = $region145
        $region144: #{tpu_custom_call.1} parent=27 // pred_region
          %s770 = sand.u32 %s123, 1
          %s771 = sand.u32 %s123, 1
          %s772 = smul.addr %s771, 64
          %s773 = scalar_lea.vmem [#allocation9], %s772
          %s774 = smul.u32 4, %s28
          %s775 = smul.u32 2, %s29
          %s776 = smul.addr %s774, 4
          %s777 = sadd.s32 %s775, %s776
          %s778 = smul.addr %s777, 8
          %s779 = scalar_lea.vmem %s4, %s778
          // Predicated region
          $region146: #{tpu_custom_call.1} parent=144 // pred_check
            _
          $region147: #{tpu_custom_call.1} parent=144 // pred_check_branch
            %781 = sbr.rel (0) target = $region149
          $region148: #{tpu_custom_call.1} parent=144 // pred_region
            // Predicated region
            $region150: #{tpu_custom_call.1} parent=148 // pred_check
              _
            $region151: #{tpu_custom_call.1} parent=148 // pred_check_branch
              %783 = sbr.rel (0) target = $region153
            $region152: #{tpu_custom_call.1} parent=148 // pred_region
              loop: start=0, step=1, limit=1
              $region154: #{tpu_custom_call.1} parent=152 // loop_pre_header
                _
              $region155: #{tpu_custom_call.1} parent=152 // loop_header
                %s785 = sphi 0, %s789
                %p786 = scmp.ge.s32.totalorder %s785, 1
                %s790 = sphi %s779, %s779
                %s791 = sphi %s773, %s773
              $region156: #{tpu_custom_call.1} parent=152 // loop_header_branch
                %788 = sbr.rel (%p786) target = $region160
              $region157: #{tpu_custom_call.1} parent=152 // loop_body
                %v792 = vld [vmem:[%s790] sm:$0xff]
                %793 = vst [vmem:[%s791] sm:$0xff] %v792
                %v794 = vld [vmem:[%s790 + $0x8] sm:$0xff]
                %795 = vst [vmem:[%s791 + $0x8] sm:$0xff] %v794
                %v796 = vld [vmem:[%s790 + $0x20] sm:$0xff]
                %797 = vst [vmem:[%s791 + $0x10] sm:$0xff] %v796
                %v798 = vld [vmem:[%s790 + $0x28] sm:$0xff]
                %799 = vst [vmem:[%s791 + $0x18] sm:$0xff] %v798
                %v800 = vld [vmem:[%s790 + $0x40] sm:$0xff]
                %801 = vst [vmem:[%s791 + $0x20] sm:$0xff] %v800
                %v802 = vld [vmem:[%s790 + $0x48] sm:$0xff]
                %803 = vst [vmem:[%s791 + $0x28] sm:$0xff] %v802
                %v804 = vld [vmem:[%s790 + $0x60] sm:$0xff]
                %805 = vst [vmem:[%s791 + $0x30] sm:$0xff] %v804
                %v806 = vld [vmem:[%s790 + $0x68] sm:$0xff]
                %807 = vst [vmem:[%s791 + $0x38] sm:$0xff] %v806
              $region158: #{tpu_custom_call.1} parent=152 // loop_footer
                %s789 = sadd.s32 1, %s785
              $region159: #{tpu_custom_call.1} parent=152 // loop_footer_branch
                %784 = sbr.rel target = $region155
              $region160: #{tpu_custom_call.1} parent=152 // loop_exit
                _
            $region153: #{tpu_custom_call.1} parent=148 // pred_fallthru
              _
            // Predicated region
            $region161: #{tpu_custom_call.1} parent=148 // pred_check
              _
            $region162: #{tpu_custom_call.1} parent=148 // pred_check_branch
              %809 = sbr.rel target = $region164
            $region163: #{tpu_custom_call.1} parent=148 // pred_region
              _
            $region164: #{tpu_custom_call.1} parent=148 // pred_fallthru
              _
          $region149: #{tpu_custom_call.1} parent=144 // pred_fallthru
            _
          %810 = vnop
        $region145: #{tpu_custom_call.1} parent=27 // pred_fallthru
          _
      $region28: #{tpu_custom_call.1} parent=5 // pred_fallthru
        _
      %p811 = scmp.le.s32.totalorder 1, %s21
      %p812 = scmp.lt.s32.totalorder %s21, 9
      %p813 = pnand %p811, %p812
      %p814 = pneg %p813
      // Predicated region
      $region165: #{tpu_custom_call.1} parent=5 // pred_check
        _
      $region166: #{tpu_custom_call.1} parent=5 // pred_check_branch
        %816 = sbr.rel (%p813) target = $region168
      $region167: #{tpu_custom_call.1} parent=5 // pred_region
        %s817 = ssub.s32 %s21, 1
        %s818 = sand.u32 %s46, 1
        %s819 = sand.u32 %s46, 1
        %s820 = smul.addr %s819, 256
        %s821 = scalar_lea.vmem [#allocation6], %s820
        // Predicated region
        $region169: #{tpu_custom_call.1} parent=167 // pred_check
          %p822 = pneg %p59
        $region170: #{tpu_custom_call.1} parent=167 // pred_check_branch
          %824 = sbr.rel (%p822) target = $region172
        $region171: #{tpu_custom_call.1} parent=167 // pred_region
          _
        $region172: #{tpu_custom_call.1} parent=167 // pred_fallthru
          _
        %s825 = sand.u32 %s72, 1
        %s826 = sand.u32 %s72, 1
        %s827 = smul.addr %s826, 4
        %s828 = scalar_lea.vmem [#allocation7], %s827
        // Predicated region
        $region173: #{tpu_custom_call.1} parent=167 // pred_check
          %p829 = pneg %p85
        $region174: #{tpu_custom_call.1} parent=167 // pred_check_branch
          %831 = sbr.rel (%p829) target = $region176
        $region175: #{tpu_custom_call.1} parent=167 // pred_region
          _
        $region176: #{tpu_custom_call.1} parent=167 // pred_fallthru
          _
        %s832 = sand.u32 %s98, 1
        %s833 = sand.u32 %s98, 1
        %s834 = smul.addr %s833, 256
        %s835 = scalar_lea.vmem [#allocation8], %s834
        // Predicated region
        $region177: #{tpu_custom_call.1} parent=167 // pred_check
          %p836 = pneg %p111
        $region178: #{tpu_custom_call.1} parent=167 // pred_check_branch
          %838 = sbr.rel (%p836) target = $region180
        $region179: #{tpu_custom_call.1} parent=167 // pred_region
          _
        $region180: #{tpu_custom_call.1} parent=167 // pred_fallthru
          _
        %s839 = sand.u32 %s126, 1
        %s840 = sand.u32 %s126, 1
        %s841 = smul.addr %s840, 64
        %s842 = scalar_lea.vmem [#allocation9], %s841
        // Predicated region
        $region181: #{tpu_custom_call.1} parent=167 // pred_check
          %p843 = pneg %p139
        $region182: #{tpu_custom_call.1} parent=167 // pred_check_branch
          %845 = sbr.rel (%p843) target = $region184
        $region183: #{tpu_custom_call.1} parent=167 // pred_region
          _
        $region184: #{tpu_custom_call.1} parent=167 // pred_fallthru
          _
        %s846 = sand.u32 %s46, 1
        %s847 = sand.u32 %s46, 1
        %s848 = smul.addr %s847, 256
        %s849 = scalar_lea.vmem [#allocation6], %s848
        %p850 = pneg %p59
        %p851 = pneg %p56
        %s852 = sand.u32 %s72, 1
        %s853 = sand.u32 %s72, 1
        %s854 = smul.addr %s853, 4
        %s855 = scalar_lea.vmem [#allocation7], %s854
        %p856 = pneg %p85
        %p857 = pneg %p82
        %s858 = sand.u32 %s98, 1
        %s859 = sand.u32 %s98, 1
        %s860 = smul.addr %s859, 256
        %s861 = scalar_lea.vmem [#allocation8], %s860
        %p862 = pneg %p111
        %p863 = pneg %p108
        %s864 = sand.u32 %s126, 1
        %s865 = sand.u32 %s126, 1
        %s866 = smul.addr %s865, 64
        %s867 = scalar_lea.vmem [#allocation9], %s866
        %p868 = pneg %p139
        %p869 = pneg %p136
        %p870 = pneg %p160
        %p871 = pneg %p157
        %p872 = pneg %p181
        %p873 = pneg %p178
        %p874 = pneg %p202
        %p875 = pneg %p199
        %p876 = pneg %p228
        %p877 = pneg %p225
        %s878 = sand.u32 %s215, 1
        %s879 = scalar_lea.sflag [#allocation11], %s878
        %s880 = sand.u32 %s215, 1
        %s881 = smul.addr %s880, 128
        %s882 = scalar_lea.vmem [#allocation10], %s881
        %s883 = smul.u32 16, %s30
        %s884 = smul.u32 2, %s31
        %s885 = smul.u32 32, %s31
        %s886 = smul.u32 4, %s30
        %s887 = smul.u32 2, %s31
        %s888 = smul.u32 16, %s30
        %p892 = scmp.eq.s32.totalorder %s31, 0
        // Predicated region
        $region185: #{tpu_custom_call.1} parent=167 // pred_check
          %p893 = pneg %p892
        $region186: #{tpu_custom_call.1} parent=167 // pred_check_branch
          %895 = sbr.rel (%p893) target = $region188
        $region187: #{tpu_custom_call.1} parent=167 // pred_region
          %vm896 = vcmask 7168
          %897 = vst.msk [vmem:[#allocation2] sm:$0xff] %vm896, -inf
          %898 = vst.msk [vmem:[#allocation2 + $0x8] sm:$0xff] %vm896, -inf
          %899 = vst.msk [vmem:[#allocation2 + $0x10] sm:$0xff] %vm896, -inf
          %900 = vst.msk [vmem:[#allocation2 + $0x18] sm:$0xff] %vm896, -inf
          %901 = vst.msk [vmem:[#allocation2 + $0x20] sm:$0xff] %vm896, -inf
          %902 = vst.msk [vmem:[#allocation2 + $0x28] sm:$0xff] %vm896, -inf
          %903 = vst.msk [vmem:[#allocation2 + $0x30] sm:$0xff] %vm896, -inf
          %904 = vst.msk [vmem:[#allocation2 + $0x38] sm:$0xff] %vm896, -inf
          %905 = vst.msk [vmem:[#allocation2 + $0x40] sm:$0xff] %vm896, -inf
          %906 = vst.msk [vmem:[#allocation2 + $0x48] sm:$0xff] %vm896, -inf
          %907 = vst.msk [vmem:[#allocation2 + $0x50] sm:$0xff] %vm896, -inf
          %908 = vst.msk [vmem:[#allocation2 + $0x58] sm:$0xff] %vm896, -inf
          %909 = vst.msk [vmem:[#allocation2 + $0x60] sm:$0xff] %vm896, -inf
          %910 = vst.msk [vmem:[#allocation2 + $0x68] sm:$0xff] %vm896, -inf
          %911 = vst.msk [vmem:[#allocation2 + $0x70] sm:$0xff] %vm896, -inf
          %912 = vst.msk [vmem:[#allocation2 + $0x78] sm:$0xff] %vm896, -inf
          %913 = vst [vmem:[#allocation3] sm:$0xff] 0.0
          %914 = vst [vmem:[#allocation3 + $0x8] sm:$0xff] 0.0
          %915 = vst [vmem:[#allocation3 + $0x10] sm:$0xff] 0.0
          %916 = vst [vmem:[#allocation3 + $0x18] sm:$0xff] 0.0
          %917 = vst [vmem:[#allocation3 + $0x20] sm:$0xff] 0.0
          %918 = vst [vmem:[#allocation3 + $0x28] sm:$0xff] 0.0
          %919 = vst [vmem:[#allocation3 + $0x30] sm:$0xff] 0.0
          %920 = vst [vmem:[#allocation3 + $0x38] sm:$0xff] 0.0
          %921 = vst [vmem:[#allocation3 + $0x40] sm:$0xff] 0.0
          %922 = vst [vmem:[#allocation3 + $0x48] sm:$0xff] 0.0
          %923 = vst [vmem:[#allocation3 + $0x50] sm:$0xff] 0.0
          %924 = vst [vmem:[#allocation3 + $0x58] sm:$0xff] 0.0
          %925 = vst [vmem:[#allocation3 + $0x60] sm:$0xff] 0.0
          %926 = vst [vmem:[#allocation3 + $0x68] sm:$0xff] 0.0
          %927 = vst [vmem:[#allocation3 + $0x70] sm:$0xff] 0.0
          %928 = vst [vmem:[#allocation3 + $0x78] sm:$0xff] 0.0
          %s929 = scalar_lea.vmem [#allocation2], 128
          %930 = vst.msk [vmem:[%s929] sm:$0xff] %vm896, -inf
          %931 = vst.msk [vmem:[%s929 + $0x8] sm:$0xff] %vm896, -inf
          %932 = vst.msk [vmem:[%s929 + $0x10] sm:$0xff] %vm896, -inf
          %933 = vst.msk [vmem:[%s929 + $0x18] sm:$0xff] %vm896, -inf
          %934 = vst.msk [vmem:[%s929 + $0x20] sm:$0xff] %vm896, -inf
          %935 = vst.msk [vmem:[%s929 + $0x28] sm:$0xff] %vm896, -inf
          %936 = vst.msk [vmem:[%s929 + $0x30] sm:$0xff] %vm896, -inf
          %937 = vst.msk [vmem:[%s929 + $0x38] sm:$0xff] %vm896, -inf
          %938 = vst.msk [vmem:[%s929 + $0x40] sm:$0xff] %vm896, -inf
          %939 = vst.msk [vmem:[%s929 + $0x48] sm:$0xff] %vm896, -inf
          %940 = vst.msk [vmem:[%s929 + $0x50] sm:$0xff] %vm896, -inf
          %941 = vst.msk [vmem:[%s929 + $0x58] sm:$0xff] %vm896, -inf
          %942 = vst.msk [vmem:[%s929 + $0x60] sm:$0xff] %vm896, -inf
          %943 = vst.msk [vmem:[%s929 + $0x68] sm:$0xff] %vm896, -inf
          %944 = vst.msk [vmem:[%s929 + $0x70] sm:$0xff] %vm896, -inf
          %945 = vst.msk [vmem:[%s929 + $0x78] sm:$0xff] %vm896, -inf
          %s946 = scalar_lea.vmem [#allocation3], 128
          %947 = vst [vmem:[%s946] sm:$0xff] 0.0
          %948 = vst [vmem:[%s946 + $0x8] sm:$0xff] 0.0
          %949 = vst [vmem:[%s946 + $0x10] sm:$0xff] 0.0
          %950 = vst [vmem:[%s946 + $0x18] sm:$0xff] 0.0
          %951 = vst [vmem:[%s946 + $0x20] sm:$0xff] 0.0
          %952 = vst [vmem:[%s946 + $0x28] sm:$0xff] 0.0
          %953 = vst [vmem:[%s946 + $0x30] sm:$0xff] 0.0
          %954 = vst [vmem:[%s946 + $0x38] sm:$0xff] 0.0
          %955 = vst [vmem:[%s946 + $0x40] sm:$0xff] 0.0
          %956 = vst [vmem:[%s946 + $0x48] sm:$0xff] 0.0
          %957 = vst [vmem:[%s946 + $0x50] sm:$0xff] 0.0
          %958 = vst [vmem:[%s946 + $0x58] sm:$0xff] 0.0
          %959 = vst [vmem:[%s946 + $0x60] sm:$0xff] 0.0
          %960 = vst [vmem:[%s946 + $0x68] sm:$0xff] 0.0
          %961 = vst [vmem:[%s946 + $0x70] sm:$0xff] 0.0
          %962 = vst [vmem:[%s946 + $0x78] sm:$0xff] 0.0
        $region188: #{tpu_custom_call.1} parent=167 // pred_fallthru
          _
        %s963 = smul.u32 %s30, 2
        %s964 = sadd.s32 %s963, %s31
        %s965 = sld [smem:[#allocation5 + %s964]]
        %p966 = scmp.gt.s32.totalorder %s965, 0
        // Predicated region
        $region189: #{tpu_custom_call.1} parent=167 // pred_check
          %p967 = pneg %p966
        $region190: #{tpu_custom_call.1} parent=167 // pred_check_branch
          %969 = sbr.rel (%p967) target = $region192
        $region191: #{tpu_custom_call.1} parent=167 // pred_region
          %v970 = vld [vmem:[%s842] sm:$0xff]
          %v971 = vld [vmem:[%s842 + $0x8] sm:$0xff]
          %v972 = vld [vmem:[%s842 + $0x10] sm:$0xff]
          %v973 = vld [vmem:[%s842 + $0x18] sm:$0xff]
          %v974 = vld [vmem:[%s842 + $0x20] sm:$0xff]
          %v975 = vld [vmem:[%s842 + $0x28] sm:$0xff]
          %v976 = vld [vmem:[%s842 + $0x30] sm:$0xff]
          %v977 = vld [vmem:[%s842 + $0x38] sm:$0xff]
          %vm978 = vnez %v970
          %vm979 = vnez %v971
          %vm980 = vnez %v972
          %vm981 = vnez %v973
          %vm982 = vnez %v974
          %vm983 = vnez %v975
          %vm984 = vnez %v976
          %vm985 = vnez %v977
          %v986 = vld [vmem:[%s821] sm:$0xff]
          %v987 = vld [vmem:[%s821 + $0x8] sm:$0xff]
          %v988 = vld [vmem:[%s821 + $0x10] sm:$0xff]
          %v989 = vld [vmem:[%s821 + $0x18] sm:$0xff]
          %v990 = vld [vmem:[%s821 + $0x20] sm:$0xff]
          %v991 = vld [vmem:[%s821 + $0x28] sm:$0xff]
          %v992 = vld [vmem:[%s821 + $0x30] sm:$0xff]
          %v993 = vld [vmem:[%s821 + $0x38] sm:$0xff]
          %v994 = vld [vmem:[%s821 + $0x40] sm:$0xff]
          %v995 = vld [vmem:[%s821 + $0x48] sm:$0xff]
          %v996 = vld [vmem:[%s821 + $0x50] sm:$0xff]
          %v997 = vld [vmem:[%s821 + $0x58] sm:$0xff]
          %v998 = vld [vmem:[%s821 + $0x60] sm:$0xff]
          %v999 = vld [vmem:[%s821 + $0x68] sm:$0xff]
          %v1000 = vld [vmem:[%s821 + $0x70] sm:$0xff]
          %v1001 = vld [vmem:[%s821 + $0x78] sm:$0xff]
          %v1002 = vld [vmem:[%s828] sm:$0x3]
          %1004 = vset.pattern.permute.xlu0 0
          %1005 = vperm.xlu0 %1004, %v986
          %v1006 = vpop.permute.xlu0 %1005
          %1009 = vset.pattern.permute.xlu0 0
          %1010 = vperm.xlu0 %1009, %v987
          %v1011 = vpop.permute.xlu0 %1010
          %1014 = vset.pattern.permute.xlu0 0
          %1015 = vperm.xlu0 %1014, %v988
          %v1016 = vpop.permute.xlu0 %1015
          %1019 = vset.pattern.permute.xlu0 0
          %1020 = vperm.xlu0 %1019, %v989
          %v1021 = vpop.permute.xlu0 %1020
          %1024 = vset.pattern.permute.xlu0 0
          %1025 = vperm.xlu0 %1024, %v990
          %v1026 = vpop.permute.xlu0 %1025
          %1029 = vset.pattern.permute.xlu0 0
          %1030 = vperm.xlu0 %1029, %v991
          %v1031 = vpop.permute.xlu0 %1030
          %1034 = vset.pattern.permute.xlu0 0
          %1035 = vperm.xlu0 %1034, %v992
          %v1036 = vpop.permute.xlu0 %1035
          %1039 = vset.pattern.permute.xlu0 0
          %1040 = vperm.xlu0 %1039, %v993
          %v1041 = vpop.permute.xlu0 %1040
          %1044 = vset.pattern.permute.xlu0 0
          %1045 = vperm.xlu0 %1044, %v994
          %v1046 = vpop.permute.xlu0 %1045
          %1049 = vset.pattern.permute.xlu0 0
          %1050 = vperm.xlu0 %1049, %v995
          %v1051 = vpop.permute.xlu0 %1050
          %1054 = vset.pattern.permute.xlu0 0
          %1055 = vperm.xlu0 %1054, %v996
          %v1056 = vpop.permute.xlu0 %1055
          %1059 = vset.pattern.permute.xlu0 0
          %1060 = vperm.xlu0 %1059, %v997
          %v1061 = vpop.permute.xlu0 %1060
          %1064 = vset.pattern.permute.xlu0 0
          %1065 = vperm.xlu0 %1064, %v998
          %v1066 = vpop.permute.xlu0 %1065
          %1069 = vset.pattern.permute.xlu0 0
          %1070 = vperm.xlu0 %1069, %v999
          %v1071 = vpop.permute.xlu0 %1070
          %1074 = vset.pattern.permute.xlu0 0
          %1075 = vperm.xlu0 %1074, %v1000
          %v1076 = vpop.permute.xlu0 %1075
          %1079 = vset.pattern.permute.xlu0 0
          %1080 = vperm.xlu0 %1079, %v1001
          %v1081 = vpop.permute.xlu0 %1080
          %v1084 = vlaneseq
          %v1085 = vshrl.u32 %v1084, 7
          %v1086 = vsub.s32 0, %v1085
          %v1087 = vrot.slane %v1002, %v1086
          %v1088 = vlaneseq
          %v1089 = vshrl.u32 %v1088, 7
          %v1090 = vsub.s32 1, %v1089
          %v1091 = vrot.slane %v1002, %v1090
          %v1094 = vadd.f32 %v1006, %v1087
          %v1095 = vadd.f32 %v1006, %v1091
          %v1096 = vadd.f32 %v1011, %v1087
          %v1097 = vadd.f32 %v1011, %v1091
          %v1098 = vadd.f32 %v1016, %v1087
          %v1099 = vadd.f32 %v1016, %v1091
          %v1100 = vadd.f32 %v1021, %v1087
          %v1101 = vadd.f32 %v1021, %v1091
          %v1102 = vadd.f32 %v1026, %v1087
          %v1103 = vadd.f32 %v1026, %v1091
          %v1104 = vadd.f32 %v1031, %v1087
          %v1105 = vadd.f32 %v1031, %v1091
          %v1106 = vadd.f32 %v1036, %v1087
          %v1107 = vadd.f32 %v1036, %v1091
          %v1108 = vadd.f32 %v1041, %v1087
          %v1109 = vadd.f32 %v1041, %v1091
          %v1110 = vadd.f32 %v1046, %v1087
          %v1111 = vadd.f32 %v1046, %v1091
          %v1112 = vadd.f32 %v1051, %v1087
          %v1113 = vadd.f32 %v1051, %v1091
          %v1114 = vadd.f32 %v1056, %v1087
          %v1115 = vadd.f32 %v1056, %v1091
          %v1116 = vadd.f32 %v1061, %v1087
          %v1117 = vadd.f32 %v1061, %v1091
          %v1118 = vadd.f32 %v1066, %v1087
          %v1119 = vadd.f32 %v1066, %v1091
          %v1120 = vadd.f32 %v1071, %v1087
          %v1121 = vadd.f32 %v1071, %v1091
          %v1122 = vadd.f32 %v1076, %v1087
          %v1123 = vadd.f32 %v1076, %v1091
          %v1124 = vadd.f32 %v1081, %v1087
          %v1125 = vadd.f32 %v1081, %v1091
          %v1126 = vmul.f32 %v1094, 0.2
          %v1127 = vmul.f32 %v1095, 0.2
          %v1128 = vmul.f32 %v1096, 0.2
          %v1129 = vmul.f32 %v1097, 0.2
          %v1130 = vmul.f32 %v1098, 0.2
          %v1131 = vmul.f32 %v1099, 0.2
          %v1132 = vmul.f32 %v1100, 0.2
          %v1133 = vmul.f32 %v1101, 0.2
          %v1134 = vmul.f32 %v1102, 0.2
          %v1135 = vmul.f32 %v1103, 0.2
          %v1136 = vmul.f32 %v1104, 0.2
          %v1137 = vmul.f32 %v1105, 0.2
          %v1138 = vmul.f32 %v1106, 0.2
          %v1139 = vmul.f32 %v1107, 0.2
          %v1140 = vmul.f32 %v1108, 0.2
          %v1141 = vmul.f32 %v1109, 0.2
          %v1142 = vmul.f32 %v1110, 0.2
          %v1143 = vmul.f32 %v1111, 0.2
          %v1144 = vmul.f32 %v1112, 0.2
          %v1145 = vmul.f32 %v1113, 0.2
          %v1146 = vmul.f32 %v1114, 0.2
          %v1147 = vmul.f32 %v1115, 0.2
          %v1148 = vmul.f32 %v1116, 0.2
          %v1149 = vmul.f32 %v1117, 0.2
          %v1150 = vmul.f32 %v1118, 0.2
          %v1151 = vmul.f32 %v1119, 0.2
          %v1152 = vmul.f32 %v1120, 0.2
          %v1153 = vmul.f32 %v1121, 0.2
          %v1154 = vmul.f32 %v1122, 0.2
          %v1155 = vmul.f32 %v1123, 0.2
          %v1156 = vmul.f32 %v1124, 0.2
          %v1157 = vmul.f32 %v1125, 0.2
          %v1158 = vmax.f32 %v1094, %v1126
          %v1159 = vmax.f32 %v1095, %v1127
          %v1160 = vmax.f32 %v1096, %v1128
          %v1161 = vmax.f32 %v1097, %v1129
          %v1162 = vmax.f32 %v1098, %v1130
          %v1163 = vmax.f32 %v1099, %v1131
          %v1164 = vmax.f32 %v1100, %v1132
          %v1165 = vmax.f32 %v1101, %v1133
          %v1166 = vmax.f32 %v1102, %v1134
          %v1167 = vmax.f32 %v1103, %v1135
          %v1168 = vmax.f32 %v1104, %v1136
          %v1169 = vmax.f32 %v1105, %v1137
          %v1170 = vmax.f32 %v1106, %v1138
          %v1171 = vmax.f32 %v1107, %v1139
          %v1172 = vmax.f32 %v1108, %v1140
          %v1173 = vmax.f32 %v1109, %v1141
          %v1174 = vmax.f32 %v1110, %v1142
          %v1175 = vmax.f32 %v1111, %v1143
          %v1176 = vmax.f32 %v1112, %v1144
          %v1177 = vmax.f32 %v1113, %v1145
          %v1178 = vmax.f32 %v1114, %v1146
          %v1179 = vmax.f32 %v1115, %v1147
          %v1180 = vmax.f32 %v1116, %v1148
          %v1181 = vmax.f32 %v1117, %v1149
          %v1182 = vmax.f32 %v1118, %v1150
          %v1183 = vmax.f32 %v1119, %v1151
          %v1184 = vmax.f32 %v1120, %v1152
          %v1185 = vmax.f32 %v1121, %v1153
          %v1186 = vmax.f32 %v1122, %v1154
          %v1187 = vmax.f32 %v1123, %v1155
          %v1188 = vmax.f32 %v1124, %v1156
          %v1189 = vmax.f32 %v1125, %v1157
          %v1190 = vsel %vm978, 16843009, 0
          %v1191 = vsel %vm979, 16843009, 0
          %v1192 = vsel %vm980, 16843009, 0
          %v1193 = vsel %vm981, 16843009, 0
          %v1194 = vsel %vm982, 16843009, 0
          %v1195 = vsel %vm983, 16843009, 0
          %v1196 = vsel %vm984, 16843009, 0
          %v1197 = vsel %vm985, 16843009, 0
          %v1198 = vunpack.c.0.s8 %v1190
          %v1199 = vunpack.c.0.s8 %v1191
          %v1200 = vunpack.c.1.s8 %v1190
          %v1201 = vunpack.c.1.s8 %v1191
          %v1202 = vunpack.c.2.s8 %v1190
          %v1203 = vunpack.c.2.s8 %v1191
          %v1204 = vunpack.c.3.s8 %v1190
          %v1205 = vunpack.c.3.s8 %v1191
          %v1206 = vunpack.c.0.s8 %v1192
          %v1207 = vunpack.c.0.s8 %v1193
          %v1208 = vunpack.c.1.s8 %v1192
          %v1209 = vunpack.c.1.s8 %v1193
          %v1210 = vunpack.c.2.s8 %v1192
          %v1211 = vunpack.c.2.s8 %v1193
          %v1212 = vunpack.c.3.s8 %v1192
          %v1213 = vunpack.c.3.s8 %v1193
          %v1214 = vunpack.c.0.s8 %v1194
          %v1215 = vunpack.c.0.s8 %v1195
          %v1216 = vunpack.c.1.s8 %v1194
          %v1217 = vunpack.c.1.s8 %v1195
          %v1218 = vunpack.c.2.s8 %v1194
          %v1219 = vunpack.c.2.s8 %v1195
          %v1220 = vunpack.c.3.s8 %v1194
          %v1221 = vunpack.c.3.s8 %v1195
          %v1222 = vunpack.c.0.s8 %v1196
          %v1223 = vunpack.c.0.s8 %v1197
          %v1224 = vunpack.c.1.s8 %v1196
          %v1225 = vunpack.c.1.s8 %v1197
          %v1226 = vunpack.c.2.s8 %v1196
          %v1227 = vunpack.c.2.s8 %v1197
          %v1228 = vunpack.c.3.s8 %v1196
          %v1229 = vunpack.c.3.s8 %v1197
          %v1230 = vpack.c.b16 %v1199, %v1198
          %v1231 = vpack.c.b8 %v1230, %v1230
          %v1232 = vpack.c.b16 %v1201, %v1200
          %v1233 = vpack.c.b8 %v1232, %v1232
          %v1234 = vpack.c.b16 %v1203, %v1202
          %v1235 = vpack.c.b8 %v1234, %v1234
          %v1236 = vpack.c.b16 %v1205, %v1204
          %v1237 = vpack.c.b8 %v1236, %v1236
          %v1238 = vpack.c.b16 %v1207, %v1206
          %v1239 = vpack.c.b8 %v1238, %v1238
          %v1240 = vpack.c.b16 %v1209, %v1208
          %v1241 = vpack.c.b8 %v1240, %v1240
          %v1242 = vpack.c.b16 %v1211, %v1210
          %v1243 = vpack.c.b8 %v1242, %v1242
          %v1244 = vpack.c.b16 %v1213, %v1212
          %v1245 = vpack.c.b8 %v1244, %v1244
          %v1246 = vpack.c.b16 %v1215, %v1214
          %v1247 = vpack.c.b8 %v1246, %v1246
          %v1248 = vpack.c.b16 %v1217, %v1216
          %v1249 = vpack.c.b8 %v1248, %v1248
          %v1250 = vpack.c.b16 %v1219, %v1218
          %v1251 = vpack.c.b8 %v1250, %v1250
          %v1252 = vpack.c.b16 %v1221, %v1220
          %v1253 = vpack.c.b8 %v1252, %v1252
          %v1254 = vpack.c.b16 %v1223, %v1222
          %v1255 = vpack.c.b8 %v1254, %v1254
          %v1256 = vpack.c.b16 %v1225, %v1224
          %v1257 = vpack.c.b8 %v1256, %v1256
          %v1258 = vpack.c.b16 %v1227, %v1226
          %v1259 = vpack.c.b8 %v1258, %v1258
          %v1260 = vpack.c.b16 %v1229, %v1228
          %v1261 = vpack.c.b8 %v1260, %v1260
          %vm1262 = vnez %v1231
          %vm1263 = vnez %v1233
          %vm1264 = vnez %v1235
          %vm1265 = vnez %v1237
          %vm1266 = vnez %v1239
          %vm1267 = vnez %v1241
          %vm1268 = vnez %v1243
          %vm1269 = vnez %v1245
          %vm1270 = vnez %v1247
          %vm1271 = vnez %v1249
          %vm1272 = vnez %v1251
          %vm1273 = vnez %v1253
          %vm1274 = vnez %v1255
          %vm1275 = vnez %v1257
          %vm1276 = vnez %v1259
          %vm1277 = vnez %v1261
          %v1278 = vsel %vm1262, 16843009, 0
          %v1279 = vsel %vm1263, 16843009, 0
          %v1280 = vsel %vm1264, 16843009, 0
          %v1281 = vsel %vm1265, 16843009, 0
          %v1282 = vsel %vm1266, 16843009, 0
          %v1283 = vsel %vm1267, 16843009, 0
          %v1284 = vsel %vm1268, 16843009, 0
          %v1285 = vsel %vm1269, 16843009, 0
          %v1286 = vsel %vm1270, 16843009, 0
          %v1287 = vsel %vm1271, 16843009, 0
          %v1288 = vsel %vm1272, 16843009, 0
          %v1289 = vsel %vm1273, 16843009, 0
          %v1290 = vsel %vm1274, 16843009, 0
          %v1291 = vsel %vm1275, 16843009, 0
          %v1292 = vsel %vm1276, 16843009, 0
          %v1293 = vsel %vm1277, 16843009, 0
          %v1294 = vunpack.c.0.s8 %v1278
          %v1295 = vunpack.c.1.s8 %v1278
          %v1296 = vunpack.c.0.s8 %v1279
          %v1297 = vunpack.c.1.s8 %v1279
          %v1298 = vunpack.c.0.s8 %v1280
          %v1299 = vunpack.c.1.s8 %v1280
          %v1300 = vunpack.c.0.s8 %v1281
          %v1301 = vunpack.c.1.s8 %v1281
          %v1302 = vunpack.c.0.s8 %v1282
          %v1303 = vunpack.c.1.s8 %v1282
          %v1304 = vunpack.c.0.s8 %v1283
          %v1305 = vunpack.c.1.s8 %v1283
          %v1306 = vunpack.c.0.s8 %v1284
          %v1307 = vunpack.c.1.s8 %v1284
          %v1308 = vunpack.c.0.s8 %v1285
          %v1309 = vunpack.c.1.s8 %v1285
          %v1310 = vunpack.c.0.s8 %v1286
          %v1311 = vunpack.c.1.s8 %v1286
          %v1312 = vunpack.c.0.s8 %v1287
          %v1313 = vunpack.c.1.s8 %v1287
          %v1314 = vunpack.c.0.s8 %v1288
          %v1315 = vunpack.c.1.s8 %v1288
          %v1316 = vunpack.c.0.s8 %v1289
          %v1317 = vunpack.c.1.s8 %v1289
          %v1318 = vunpack.c.0.s8 %v1290
          %v1319 = vunpack.c.1.s8 %v1290
          %v1320 = vunpack.c.0.s8 %v1291
          %v1321 = vunpack.c.1.s8 %v1291
          %v1322 = vunpack.c.0.s8 %v1292
          %v1323 = vunpack.c.1.s8 %v1292
          %v1324 = vunpack.c.0.s8 %v1293
          %v1325 = vunpack.c.1.s8 %v1293
          %vm1326 = vcmp.ne.s32.totalorder %v1294, 0
          %vm1327 = vcmp.ne.s32.totalorder %v1295, 0
          %vm1328 = vcmp.ne.s32.totalorder %v1296, 0
          %vm1329 = vcmp.ne.s32.totalorder %v1297, 0
          %vm1330 = vcmp.ne.s32.totalorder %v1298, 0
          %vm1331 = vcmp.ne.s32.totalorder %v1299, 0
          %vm1332 = vcmp.ne.s32.totalorder %v1300, 0
          %vm1333 = vcmp.ne.s32.totalorder %v1301, 0
          %vm1334 = vcmp.ne.s32.totalorder %v1302, 0
          %vm1335 = vcmp.ne.s32.totalorder %v1303, 0
          %vm1336 = vcmp.ne.s32.totalorder %v1304, 0
          %vm1337 = vcmp.ne.s32.totalorder %v1305, 0
          %vm1338 = vcmp.ne.s32.totalorder %v1306, 0
          %vm1339 = vcmp.ne.s32.totalorder %v1307, 0
          %vm1340 = vcmp.ne.s32.totalorder %v1308, 0
          %vm1341 = vcmp.ne.s32.totalorder %v1309, 0
          %vm1342 = vcmp.ne.s32.totalorder %v1310, 0
          %vm1343 = vcmp.ne.s32.totalorder %v1311, 0
          %vm1344 = vcmp.ne.s32.totalorder %v1312, 0
          %vm1345 = vcmp.ne.s32.totalorder %v1313, 0
          %vm1346 = vcmp.ne.s32.totalorder %v1314, 0
          %vm1347 = vcmp.ne.s32.totalorder %v1315, 0
          %vm1348 = vcmp.ne.s32.totalorder %v1316, 0
          %vm1349 = vcmp.ne.s32.totalorder %v1317, 0
          %vm1350 = vcmp.ne.s32.totalorder %v1318, 0
          %vm1351 = vcmp.ne.s32.totalorder %v1319, 0
          %vm1352 = vcmp.ne.s32.totalorder %v1320, 0
          %vm1353 = vcmp.ne.s32.totalorder %v1321, 0
          %vm1354 = vcmp.ne.s32.totalorder %v1322, 0
          %vm1355 = vcmp.ne.s32.totalorder %v1323, 0
          %vm1356 = vcmp.ne.s32.totalorder %v1324, 0
          %vm1357 = vcmp.ne.s32.totalorder %v1325, 0
          %v1358 = vsel %vm1326, %v1158, -1e+30
          %v1359 = vsel %vm1327, %v1159, -1e+30
          %v1360 = vsel %vm1328, %v1160, -1e+30
          %v1361 = vsel %vm1329, %v1161, -1e+30
          %v1362 = vsel %vm1330, %v1162, -1e+30
          %v1363 = vsel %vm1331, %v1163, -1e+30
          %v1364 = vsel %vm1332, %v1164, -1e+30
          %v1365 = vsel %vm1333, %v1165, -1e+30
          %v1366 = vsel %vm1334, %v1166, -1e+30
          %v1367 = vsel %vm1335, %v1167, -1e+30
          %v1368 = vsel %vm1336, %v1168, -1e+30
          %v1369 = vsel %vm1337, %v1169, -1e+30
          %v1370 = vsel %vm1338, %v1170, -1e+30
          %v1371 = vsel %vm1339, %v1171, -1e+30
          %v1372 = vsel %vm1340, %v1172, -1e+30
          %v1373 = vsel %vm1341, %v1173, -1e+30
          %v1374 = vsel %vm1342, %v1174, -1e+30
          %v1375 = vsel %vm1343, %v1175, -1e+30
          %v1376 = vsel %vm1344, %v1176, -1e+30
          %v1377 = vsel %vm1345, %v1177, -1e+30
          %v1378 = vsel %vm1346, %v1178, -1e+30
          %v1379 = vsel %vm1347, %v1179, -1e+30
          %v1380 = vsel %vm1348, %v1180, -1e+30
          %v1381 = vsel %vm1349, %v1181, -1e+30
          %v1382 = vsel %vm1350, %v1182, -1e+30
          %v1383 = vsel %vm1351, %v1183, -1e+30
          %v1384 = vsel %vm1352, %v1184, -1e+30
          %v1385 = vsel %vm1353, %v1185, -1e+30
          %v1386 = vsel %vm1354, %v1186, -1e+30
          %v1387 = vsel %vm1355, %v1187, -1e+30
          %v1388 = vsel %vm1356, %v1188, -1e+30
          %v1389 = vsel %vm1357, %v1189, -1e+30
          %v1390 = vld [vmem:[#allocation2] sm:$0xff]
          %v1391 = vld [vmem:[#allocation2 + $0x8] sm:$0xff]
          %v1392 = vld [vmem:[#allocation2 + $0x10] sm:$0xff]
          %v1393 = vld [vmem:[#allocation2 + $0x18] sm:$0xff]
          %v1394 = vld [vmem:[#allocation2 + $0x20] sm:$0xff]
          %v1395 = vld [vmem:[#allocation2 + $0x28] sm:$0xff]
          %v1396 = vld [vmem:[#allocation2 + $0x30] sm:$0xff]
          %v1397 = vld [vmem:[#allocation2 + $0x38] sm:$0xff]
          %v1398 = vld [vmem:[#allocation2 + $0x40] sm:$0xff]
          %v1399 = vld [vmem:[#allocation2 + $0x48] sm:$0xff]
          %v1400 = vld [vmem:[#allocation2 + $0x50] sm:$0xff]
          %v1401 = vld [vmem:[#allocation2 + $0x58] sm:$0xff]
          %v1402 = vld [vmem:[#allocation2 + $0x60] sm:$0xff]
          %v1403 = vld [vmem:[#allocation2 + $0x68] sm:$0xff]
          %v1404 = vld [vmem:[#allocation2 + $0x70] sm:$0xff]
          %v1405 = vld [vmem:[#allocation2 + $0x78] sm:$0xff]
          %v1406 = vmax.f32 %v1358, %v1359
          %1407 = vmax.xlane.f32.xlu0 %v1406
          %v1408 = vpop.xlane.xlu0 %1407
          %v1409 = vmax.f32 %v1360, %v1361
          %1410 = vmax.xlane.f32.xlu0 %v1409
          %v1411 = vpop.xlane.xlu0 %1410
          %v1412 = vmax.f32 %v1362, %v1363
          %1413 = vmax.xlane.f32.xlu0 %v1412
          %v1414 = vpop.xlane.xlu0 %1413
          %v1415 = vmax.f32 %v1364, %v1365
          %1416 = vmax.xlane.f32.xlu0 %v1415
          %v1417 = vpop.xlane.xlu0 %1416
          %v1418 = vmax.f32 %v1366, %v1367
          %1419 = vmax.xlane.f32.xlu0 %v1418
          %v1420 = vpop.xlane.xlu0 %1419
          %v1421 = vmax.f32 %v1368, %v1369
          %1422 = vmax.xlane.f32.xlu0 %v1421
          %v1423 = vpop.xlane.xlu0 %1422
          %v1424 = vmax.f32 %v1370, %v1371
          %1425 = vmax.xlane.f32.xlu0 %v1424
          %v1426 = vpop.xlane.xlu0 %1425
          %v1427 = vmax.f32 %v1372, %v1373
          %1428 = vmax.xlane.f32.xlu0 %v1427
          %v1429 = vpop.xlane.xlu0 %1428
          %v1430 = vmax.f32 %v1374, %v1375
          %1431 = vmax.xlane.f32.xlu0 %v1430
          %v1432 = vpop.xlane.xlu0 %1431
          %v1433 = vmax.f32 %v1376, %v1377
          %1434 = vmax.xlane.f32.xlu0 %v1433
          %v1435 = vpop.xlane.xlu0 %1434
          %v1436 = vmax.f32 %v1378, %v1379
          %1437 = vmax.xlane.f32.xlu0 %v1436
          %v1438 = vpop.xlane.xlu0 %1437
          %v1439 = vmax.f32 %v1380, %v1381
          %1440 = vmax.xlane.f32.xlu0 %v1439
          %v1441 = vpop.xlane.xlu0 %1440
          %v1442 = vmax.f32 %v1382, %v1383
          %1443 = vmax.xlane.f32.xlu0 %v1442
          %v1444 = vpop.xlane.xlu0 %1443
          %v1445 = vmax.f32 %v1384, %v1385
          %1446 = vmax.xlane.f32.xlu0 %v1445
          %v1447 = vpop.xlane.xlu0 %1446
          %v1448 = vmax.f32 %v1386, %v1387
          %1449 = vmax.xlane.f32.xlu0 %v1448
          %v1450 = vpop.xlane.xlu0 %1449
          %v1451 = vmax.f32 %v1388, %v1389
          %1452 = vmax.xlane.f32.xlu0 %v1451
          %v1453 = vpop.xlane.xlu0 %1452
          %v1454 = vmax.f32 %v1390, %v1408
          %v1455 = vmax.f32 %v1391, %v1411
          %v1456 = vmax.f32 %v1392, %v1414
          %v1457 = vmax.f32 %v1393, %v1417
          %v1458 = vmax.f32 %v1394, %v1420
          %v1459 = vmax.f32 %v1395, %v1423
          %v1460 = vmax.f32 %v1396, %v1426
          %v1461 = vmax.f32 %v1397, %v1429
          %v1462 = vmax.f32 %v1398, %v1432
          %v1463 = vmax.f32 %v1399, %v1435
          %v1464 = vmax.f32 %v1400, %v1438
          %v1465 = vmax.f32 %v1401, %v1441
          %v1466 = vmax.f32 %v1402, %v1444
          %v1467 = vmax.f32 %v1403, %v1447
          %v1468 = vmax.f32 %v1404, %v1450
          %v1469 = vmax.f32 %v1405, %v1453
          %v1470 = vsub.f32 %v1390, %v1454
          %v1471 = vsub.f32 %v1391, %v1455
          %v1472 = vsub.f32 %v1392, %v1456
          %v1473 = vsub.f32 %v1393, %v1457
          %v1474 = vsub.f32 %v1394, %v1458
          %v1475 = vsub.f32 %v1395, %v1459
          %v1476 = vsub.f32 %v1396, %v1460
          %v1477 = vsub.f32 %v1397, %v1461
          %v1478 = vsub.f32 %v1398, %v1462
          %v1479 = vsub.f32 %v1399, %v1463
          %v1480 = vsub.f32 %v1400, %v1464
          %v1481 = vsub.f32 %v1401, %v1465
          %v1482 = vsub.f32 %v1402, %v1466
          %v1483 = vsub.f32 %v1403, %v1467
          %v1484 = vsub.f32 %v1404, %v1468
          %v1485 = vsub.f32 %v1405, %v1469
          %v1486 = vmul.f32 %v1470, 1.442695
          %v1487 = vpow.pop %v1486
          %v1488 = vmul.f32 %v1471, 1.442695
          %v1489 = vpow.pop %v1488
          %v1490 = vmul.f32 %v1472, 1.442695
          %v1491 = vpow.pop %v1490
          %v1492 = vmul.f32 %v1473, 1.442695
          %v1493 = vpow.pop %v1492
          %v1494 = vmul.f32 %v1474, 1.442695
          %v1495 = vpow.pop %v1494
          %v1496 = vmul.f32 %v1475, 1.442695
          %v1497 = vpow.pop %v1496
          %v1498 = vmul.f32 %v1476, 1.442695
          %v1499 = vpow.pop %v1498
          %v1500 = vmul.f32 %v1477, 1.442695
          %v1501 = vpow.pop %v1500
          %v1502 = vmul.f32 %v1478, 1.442695
          %v1503 = vpow.pop %v1502
          %v1504 = vmul.f32 %v1479, 1.442695
          %v1505 = vpow.pop %v1504
          %v1506 = vmul.f32 %v1480, 1.442695
          %v1507 = vpow.pop %v1506
          %v1508 = vmul.f32 %v1481, 1.442695
          %v1509 = vpow.pop %v1508
          %v1510 = vmul.f32 %v1482, 1.442695
          %v1511 = vpow.pop %v1510
          %v1512 = vmul.f32 %v1483, 1.442695
          %v1513 = vpow.pop %v1512
          %v1514 = vmul.f32 %v1484, 1.442695
          %v1515 = vpow.pop %v1514
          %v1516 = vmul.f32 %v1485, 1.442695
          %v1517 = vpow.pop %v1516
          %1519 = vset.pattern.permute.xlu0 0
          %1520 = vperm.xlu0 %1519, %v1454
          %v1521 = vpop.permute.xlu0 %1520
          %1524 = vset.pattern.permute.xlu0 0
          %1525 = vperm.xlu0 %1524, %v1455
          %v1526 = vpop.permute.xlu0 %1525
          %1529 = vset.pattern.permute.xlu0 0
          %1530 = vperm.xlu0 %1529, %v1456
          %v1531 = vpop.permute.xlu0 %1530
          %1534 = vset.pattern.permute.xlu0 0
          %1535 = vperm.xlu0 %1534, %v1457
          %v1536 = vpop.permute.xlu0 %1535
          %1539 = vset.pattern.permute.xlu0 0
          %1540 = vperm.xlu0 %1539, %v1458
          %v1541 = vpop.permute.xlu0 %1540
          %1544 = vset.pattern.permute.xlu0 0
          %1545 = vperm.xlu0 %1544, %v1459
          %v1546 = vpop.permute.xlu0 %1545
          %1549 = vset.pattern.permute.xlu0 0
          %1550 = vperm.xlu0 %1549, %v1460
          %v1551 = vpop.permute.xlu0 %1550
          %1554 = vset.pattern.permute.xlu0 0
          %1555 = vperm.xlu0 %1554, %v1461
          %v1556 = vpop.permute.xlu0 %1555
          %1559 = vset.pattern.permute.xlu0 0
          %1560 = vperm.xlu0 %1559, %v1462
          %v1561 = vpop.permute.xlu0 %1560
          %1564 = vset.pattern.permute.xlu0 0
          %1565 = vperm.xlu0 %1564, %v1463
          %v1566 = vpop.permute.xlu0 %1565
          %1569 = vset.pattern.permute.xlu0 0
          %1570 = vperm.xlu0 %1569, %v1464
          %v1571 = vpop.permute.xlu0 %1570
          %1574 = vset.pattern.permute.xlu0 0
          %1575 = vperm.xlu0 %1574, %v1465
          %v1576 = vpop.permute.xlu0 %1575
          %1579 = vset.pattern.permute.xlu0 0
          %1580 = vperm.xlu0 %1579, %v1466
          %v1581 = vpop.permute.xlu0 %1580
          %1584 = vset.pattern.permute.xlu0 0
          %1585 = vperm.xlu0 %1584, %v1467
          %v1586 = vpop.permute.xlu0 %1585
          %1589 = vset.pattern.permute.xlu0 0
          %1590 = vperm.xlu0 %1589, %v1468
          %v1591 = vpop.permute.xlu0 %1590
          %1594 = vset.pattern.permute.xlu0 0
          %1595 = vperm.xlu0 %1594, %v1469
          %v1596 = vpop.permute.xlu0 %1595
          %v1598 = vsub.f32 %v1358, %v1521
          %v1599 = vsub.f32 %v1359, %v1521
          %v1600 = vsub.f32 %v1360, %v1526
          %v1601 = vsub.f32 %v1361, %v1526
          %v1602 = vsub.f32 %v1362, %v1531
          %v1603 = vsub.f32 %v1363, %v1531
          %v1604 = vsub.f32 %v1364, %v1536
          %v1605 = vsub.f32 %v1365, %v1536
          %v1606 = vsub.f32 %v1366, %v1541
          %v1607 = vsub.f32 %v1367, %v1541
          %v1608 = vsub.f32 %v1368, %v1546
          %v1609 = vsub.f32 %v1369, %v1546
          %v1610 = vsub.f32 %v1370, %v1551
          %v1611 = vsub.f32 %v1371, %v1551
          %v1612 = vsub.f32 %v1372, %v1556
          %v1613 = vsub.f32 %v1373, %v1556
          %v1614 = vsub.f32 %v1374, %v1561
          %v1615 = vsub.f32 %v1375, %v1561
          %v1616 = vsub.f32 %v1376, %v1566
          %v1617 = vsub.f32 %v1377, %v1566
          %v1618 = vsub.f32 %v1378, %v1571
          %v1619 = vsub.f32 %v1379, %v1571
          %v1620 = vsub.f32 %v1380, %v1576
          %v1621 = vsub.f32 %v1381, %v1576
          %v1622 = vsub.f32 %v1382, %v1581
          %v1623 = vsub.f32 %v1383, %v1581
          %v1624 = vsub.f32 %v1384, %v1586
          %v1625 = vsub.f32 %v1385, %v1586
          %v1626 = vsub.f32 %v1386, %v1591
          %v1627 = vsub.f32 %v1387, %v1591
          %v1628 = vsub.f32 %v1388, %v1596
          %v1629 = vsub.f32 %v1389, %v1596
          %v1630 = vmul.f32 %v1598, 1.442695
          %v1631 = vpow.pop %v1630
          %v1632 = vmul.f32 %v1599, 1.442695
          %v1633 = vpow.pop %v1632
          %v1634 = vmul.f32 %v1600, 1.442695
          %v1635 = vpow.pop %v1634
          %v1636 = vmul.f32 %v1601, 1.442695
          %v1637 = vpow.pop %v1636
          %v1638 = vmul.f32 %v1602, 1.442695
          %v1639 = vpow.pop %v1638
          %v1640 = vmul.f32 %v1603, 1.442695
          %v1641 = vpow.pop %v1640
          %v1642 = vmul.f32 %v1604, 1.442695
          %v1643 = vpow.pop %v1642
          %v1644 = vmul.f32 %v1605, 1.442695
          %v1645 = vpow.pop %v1644
          %v1646 = vmul.f32 %v1606, 1.442695
          %v1647 = vpow.pop %v1646
          %v1648 = vmul.f32 %v1607, 1.442695
          %v1649 = vpow.pop %v1648
          %v1650 = vmul.f32 %v1608, 1.442695
          %v1651 = vpow.pop %v1650
          %v1652 = vmul.f32 %v1609, 1.442695
          %v1653 = vpow.pop %v1652
          %v1654 = vmul.f32 %v1610, 1.442695
          %v1655 = vpow.pop %v1654
          %v1656 = vmul.f32 %v1611, 1.442695
          %v1657 = vpow.pop %v1656
          %v1658 = vmul.f32 %v1612, 1.442695
          %v1659 = vpow.pop %v1658
          %v1660 = vmul.f32 %v1613, 1.442695
          %v1661 = vpow.pop %v1660
          %v1662 = vmul.f32 %v1614, 1.442695
          %v1663 = vpow.pop %v1662
          %v1664 = vmul.f32 %v1615, 1.442695
          %v1665 = vpow.pop %v1664
          %v1666 = vmul.f32 %v1616, 1.442695
          %v1667 = vpow.pop %v1666
          %v1668 = vmul.f32 %v1617, 1.442695
          %v1669 = vpow.pop %v1668
          %v1670 = vmul.f32 %v1618, 1.442695
          %v1671 = vpow.pop %v1670
          %v1672 = vmul.f32 %v1619, 1.442695
          %v1673 = vpow.pop %v1672
          %v1674 = vmul.f32 %v1620, 1.442695
          %v1675 = vpow.pop %v1674
          %v1676 = vmul.f32 %v1621, 1.442695
          %v1677 = vpow.pop %v1676
          %v1678 = vmul.f32 %v1622, 1.442695
          %v1679 = vpow.pop %v1678
          %v1680 = vmul.f32 %v1623, 1.442695
          %v1681 = vpow.pop %v1680
          %v1682 = vmul.f32 %v1624, 1.442695
          %v1683 = vpow.pop %v1682
          %v1684 = vmul.f32 %v1625, 1.442695
          %v1685 = vpow.pop %v1684
          %v1686 = vmul.f32 %v1626, 1.442695
          %v1687 = vpow.pop %v1686
          %v1688 = vmul.f32 %v1627, 1.442695
          %v1689 = vpow.pop %v1688
          %v1690 = vmul.f32 %v1628, 1.442695
          %v1691 = vpow.pop %v1690
          %v1692 = vmul.f32 %v1629, 1.442695
          %v1693 = vpow.pop %v1692
          %v1694 = vpack.c.bf16 %v1635, %v1631
          %v1695 = vpack.c.bf16 %v1637, %v1633
          %v1696 = vpack.c.bf16 %v1643, %v1639
          %v1697 = vpack.c.bf16 %v1645, %v1641
          %v1698 = vpack.c.bf16 %v1651, %v1647
          %v1699 = vpack.c.bf16 %v1653, %v1649
          %v1700 = vpack.c.bf16 %v1659, %v1655
          %v1701 = vpack.c.bf16 %v1661, %v1657
          %v1702 = vpack.c.bf16 %v1667, %v1663
          %v1703 = vpack.c.bf16 %v1669, %v1665
          %v1704 = vpack.c.bf16 %v1675, %v1671
          %v1705 = vpack.c.bf16 %v1677, %v1673
          %v1706 = vpack.c.bf16 %v1683, %v1679
          %v1707 = vpack.c.bf16 %v1685, %v1681
          %v1708 = vpack.c.bf16 %v1691, %v1687
          %v1709 = vpack.c.bf16 %v1693, %v1689
          %v1710 = vld [vmem:[#allocation3] sm:$0xff]
          %v1711 = vld [vmem:[#allocation3 + $0x8] sm:$0xff]
          %v1712 = vld [vmem:[#allocation3 + $0x10] sm:$0xff]
          %v1713 = vld [vmem:[#allocation3 + $0x18] sm:$0xff]
          %v1714 = vld [vmem:[#allocation3 + $0x20] sm:$0xff]
          %v1715 = vld [vmem:[#allocation3 + $0x28] sm:$0xff]
          %v1716 = vld [vmem:[#allocation3 + $0x30] sm:$0xff]
          %v1717 = vld [vmem:[#allocation3 + $0x38] sm:$0xff]
          %v1718 = vld [vmem:[#allocation3 + $0x40] sm:$0xff]
          %v1719 = vld [vmem:[#allocation3 + $0x48] sm:$0xff]
          %v1720 = vld [vmem:[#allocation3 + $0x50] sm:$0xff]
          %v1721 = vld [vmem:[#allocation3 + $0x58] sm:$0xff]
          %v1722 = vld [vmem:[#allocation3 + $0x60] sm:$0xff]
          %v1723 = vld [vmem:[#allocation3 + $0x68] sm:$0xff]
          %v1724 = vld [vmem:[#allocation3 + $0x70] sm:$0xff]
          %v1725 = vld [vmem:[#allocation3 + $0x78] sm:$0xff]
          %1727 = vset.pattern.permute.xlu0 0
          %1728 = vperm.xlu0 %1727, %v1487
          %v1729 = vpop.permute.xlu0 %1728
          %1732 = vset.pattern.permute.xlu0 0
          %1733 = vperm.xlu0 %1732, %v1489
          %v1734 = vpop.permute.xlu0 %1733
          %1737 = vset.pattern.permute.xlu0 0
          %1738 = vperm.xlu0 %1737, %v1491
          %v1739 = vpop.permute.xlu0 %1738
          %1742 = vset.pattern.permute.xlu0 0
          %1743 = vperm.xlu0 %1742, %v1493
          %v1744 = vpop.permute.xlu0 %1743
          %1747 = vset.pattern.permute.xlu0 0
          %1748 = vperm.xlu0 %1747, %v1495
          %v1749 = vpop.permute.xlu0 %1748
          %1752 = vset.pattern.permute.xlu0 0
          %1753 = vperm.xlu0 %1752, %v1497
          %v1754 = vpop.permute.xlu0 %1753
          %1757 = vset.pattern.permute.xlu0 0
          %1758 = vperm.xlu0 %1757, %v1499
          %v1759 = vpop.permute.xlu0 %1758
          %1762 = vset.pattern.permute.xlu0 0
          %1763 = vperm.xlu0 %1762, %v1501
          %v1764 = vpop.permute.xlu0 %1763
          %1767 = vset.pattern.permute.xlu0 0
          %1768 = vperm.xlu0 %1767, %v1503
          %v1769 = vpop.permute.xlu0 %1768
          %1772 = vset.pattern.permute.xlu0 0
          %1773 = vperm.xlu0 %1772, %v1505
          %v1774 = vpop.permute.xlu0 %1773
          %1777 = vset.pattern.permute.xlu0 0
          %1778 = vperm.xlu0 %1777, %v1507
          %v1779 = vpop.permute.xlu0 %1778
          %1782 = vset.pattern.permute.xlu0 0
          %1783 = vperm.xlu0 %1782, %v1509
          %v1784 = vpop.permute.xlu0 %1783
          %1787 = vset.pattern.permute.xlu0 0
          %1788 = vperm.xlu0 %1787, %v1511
          %v1789 = vpop.permute.xlu0 %1788
          %1792 = vset.pattern.permute.xlu0 0
          %1793 = vperm.xlu0 %1792, %v1513
          %v1794 = vpop.permute.xlu0 %1793
          %1797 = vset.pattern.permute.xlu0 0
          %1798 = vperm.xlu0 %1797, %v1515
          %v1799 = vpop.permute.xlu0 %1798
          %1802 = vset.pattern.permute.xlu0 0
          %1803 = vperm.xlu0 %1802, %v1517
          %v1804 = vpop.permute.xlu0 %1803
          %v1806 = vmul.f32 %v1729, %v1710
          %v1807 = vmul.f32 %v1734, %v1711
          %v1808 = vmul.f32 %v1739, %v1712
          %v1809 = vmul.f32 %v1744, %v1713
          %v1810 = vmul.f32 %v1749, %v1714
          %v1811 = vmul.f32 %v1754, %v1715
          %v1812 = vmul.f32 %v1759, %v1716
          %v1813 = vmul.f32 %v1764, %v1717
          %v1814 = vmul.f32 %v1769, %v1718
          %v1815 = vmul.f32 %v1774, %v1719
          %v1816 = vmul.f32 %v1779, %v1720
          %v1817 = vmul.f32 %v1784, %v1721
          %v1818 = vmul.f32 %v1789, %v1722
          %v1819 = vmul.f32 %v1794, %v1723
          %v1820 = vmul.f32 %v1799, %v1724
          %v1821 = vmul.f32 %v1804, %v1725
          %v1822 = vld [vmem:[%s835] sm:$0xf]
          %v1823 = vld [vmem:[%s835 + $0x4] sm:$0xf]
          %v1824 = vld [vmem:[%s835 + $0x8] sm:$0xf]
          %v1825 = vld [vmem:[%s835 + $0xc] sm:$0xf]
          %v1826 = vld [vmem:[%s835 + $0x10] sm:$0xf]
          %v1827 = vld [vmem:[%s835 + $0x14] sm:$0xf]
          %v1828 = vld [vmem:[%s835 + $0x18] sm:$0xf]
          %v1829 = vld [vmem:[%s835 + $0x1c] sm:$0xf]
          %v1830 = vld [vmem:[%s835 + $0x20] sm:$0xf]
          %v1831 = vld [vmem:[%s835 + $0x24] sm:$0xf]
          %v1832 = vld [vmem:[%s835 + $0x28] sm:$0xf]
          %v1833 = vld [vmem:[%s835 + $0x2c] sm:$0xf]
          %v1834 = vld [vmem:[%s835 + $0x30] sm:$0xf]
          %v1835 = vld [vmem:[%s835 + $0x34] sm:$0xf]
          %v1836 = vld [vmem:[%s835 + $0x38] sm:$0xf]
          %v1837 = vld [vmem:[%s835 + $0x3c] sm:$0xf]
          %v1838 = vld [vmem:[%s835 + $0x40] sm:$0xf]
          %v1839 = vld [vmem:[%s835 + $0x44] sm:$0xf]
          %v1840 = vld [vmem:[%s835 + $0x48] sm:$0xf]
          %v1841 = vld [vmem:[%s835 + $0x4c] sm:$0xf]
          %v1842 = vld [vmem:[%s835 + $0x50] sm:$0xf]
          %v1843 = vld [vmem:[%s835 + $0x54] sm:$0xf]
          %v1844 = vld [vmem:[%s835 + $0x58] sm:$0xf]
          %v1845 = vld [vmem:[%s835 + $0x5c] sm:$0xf]
          %v1846 = vld [vmem:[%s835 + $0x60] sm:$0xf]
          %v1847 = vld [vmem:[%s835 + $0x64] sm:$0xf]
          %v1848 = vld [vmem:[%s835 + $0x68] sm:$0xf]
          %v1849 = vld [vmem:[%s835 + $0x6c] sm:$0xf]
          %v1850 = vld [vmem:[%s835 + $0x70] sm:$0xf]
          %v1851 = vld [vmem:[%s835 + $0x74] sm:$0xf]
          %v1852 = vld [vmem:[%s835 + $0x78] sm:$0xf]
          %v1853 = vld [vmem:[%s835 + $0x7c] sm:$0xf]
          %v1886 = vunpack.c.l.b16 %v1822
          %v1887 = vunpack.c.l.b16 %v1823
          %v1888 = vunpack.c.l.b16 %v1824
          %v1889 = vunpack.c.l.b16 %v1825
          %v1890 = vunpack.c.l.b16 %v1826
          %v1891 = vunpack.c.l.b16 %v1827
          %v1892 = vunpack.c.l.b16 %v1828
          %v1893 = vunpack.c.l.b16 %v1829
          %v1894 = vunpack.c.l.b16 %v1830
          %v1895 = vunpack.c.l.b16 %v1831
          %v1896 = vunpack.c.l.b16 %v1832
          %v1897 = vunpack.c.l.b16 %v1833
          %v1898 = vunpack.c.l.b16 %v1834
          %v1899 = vunpack.c.l.b16 %v1835
          %v1900 = vunpack.c.l.b16 %v1836
          %v1901 = vunpack.c.l.b16 %v1837
          %v1902 = vunpack.c.l.b16 %v1838
          %v1903 = vunpack.c.l.b16 %v1839
          %v1904 = vunpack.c.l.b16 %v1840
          %v1905 = vunpack.c.l.b16 %v1841
          %v1906 = vunpack.c.l.b16 %v1842
          %v1907 = vunpack.c.l.b16 %v1843
          %v1908 = vunpack.c.l.b16 %v1844
          %v1909 = vunpack.c.l.b16 %v1845
          %v1910 = vunpack.c.l.b16 %v1846
          %v1911 = vunpack.c.l.b16 %v1847
          %v1912 = vunpack.c.l.b16 %v1848
          %v1913 = vunpack.c.l.b16 %v1849
          %v1914 = vunpack.c.l.b16 %v1850
          %v1915 = vunpack.c.l.b16 %v1851
          %v1916 = vunpack.c.l.b16 %v1852
          %v1917 = vunpack.c.l.b16 %v1853
          %v1918 = vpack.c.b16 %v1887, %v1886
          %v1919 = vpack.c.b16 %v1889, %v1888
          %v1920 = vpack.c.b16 %v1891, %v1890
          %v1921 = vpack.c.b16 %v1893, %v1892
          %v1922 = vpack.c.b16 %v1895, %v1894
          %v1923 = vpack.c.b16 %v1897, %v1896
          %v1924 = vpack.c.b16 %v1899, %v1898
          %v1925 = vpack.c.b16 %v1901, %v1900
          %v1926 = vpack.c.b16 %v1903, %v1902
          %v1927 = vpack.c.b16 %v1905, %v1904
          %v1928 = vpack.c.b16 %v1907, %v1906
          %v1929 = vpack.c.b16 %v1909, %v1908
          %v1930 = vpack.c.b16 %v1911, %v1910
          %v1931 = vpack.c.b16 %v1913, %v1912
          %v1932 = vpack.c.b16 %v1915, %v1914
          %v1933 = vpack.c.b16 %v1917, %v1916
          %1950 = vmatprep.subr.bf16.mxu0 0
          %1951 = vmatpush1.bf16.msra.mxu0 %v1918
          %1952 = vmatprep.subr.bf16.mxu0 0
          %1953 = vmatpush1.bf16.msra.mxu0 %v1919
          %1954 = vmatprep.subr.bf16.mxu0 0
          %1955 = vmatpush1.bf16.msra.mxu0 %v1920
          %1956 = vmatprep.subr.bf16.mxu0 0
          %1957 = vmatpush1.bf16.msra.mxu0 %v1921
          %1958 = vmatprep.subr.bf16.mxu0 0
          %1959 = vmatpush1.bf16.msra.mxu0 %v1922
          %1960 = vmatprep.subr.bf16.mxu0 0
          %1961 = vmatpush1.bf16.msra.mxu0 %v1923
          %1962 = vmatprep.subr.bf16.mxu0 0
          %1963 = vmatpush1.bf16.msra.mxu0 %v1924
          %1964 = vmatprep.subr.bf16.mxu0 0
          %1965 = vmatpush1.bf16.msra.mxu0 %v1925
          %1966 = vmatprep.subr.bf16.mxu0 0
          %1967 = vmatpush1.bf16.msra.mxu0 %v1926
          %1968 = vmatprep.subr.bf16.mxu0 0
          %1969 = vmatpush1.bf16.msra.mxu0 %v1927
          %1970 = vmatprep.subr.bf16.mxu0 0
          %1971 = vmatpush1.bf16.msra.mxu0 %v1928
          %1972 = vmatprep.subr.bf16.mxu0 0
          %1973 = vmatpush1.bf16.msra.mxu0 %v1929
          %1974 = vmatprep.subr.bf16.mxu0 0
          %1975 = vmatpush1.bf16.msra.mxu0 %v1930
          %1976 = vmatprep.subr.bf16.mxu0 0
          %1977 = vmatpush1.bf16.msra.mxu0 %v1931
          %1978 = vmatprep.subr.bf16.mxu0 0
          %1979 = vmatpush1.bf16.msra.mxu0 %v1932
          %1980 = vmatprep.subr.bf16.mxu0 0
          %1981 = vmatpush1.bf16.msra.mxu0 %v1933
          %1982 = vmatprep.mubr.bf16.mxu0 %v1695
          %1983 = vmatmul.mubr.bf16.gmra.mrb[0].mxu0 %v1694
          %v1984 = vpop.f32.mrb[0].mxu0
          %v1985 = vadd.f32 0.0, %v1984
          %v1986 = vpop.f32.mrb[0].mxu0
          %v1987 = vpop.f32.mrb[0].mxu0
          %v1988 = vadd.f32 0.0, %v1987
          %v1989 = vpop.f32.mrb[0].mxu0
          %1990 = vmatprep.mubr.bf16.mxu0 %v1697
          %1991 = vmatmul.mubr.bf16.gmra.mrb[0].mxu0 %v1696
          %v1992 = vpop.f32.mrb[0].mxu0
          %v1993 = vadd.f32 0.0, %v1992
          %v1994 = vpop.f32.mrb[0].mxu0
          %v1995 = vpop.f32.mrb[0].mxu0
          %v1996 = vadd.f32 0.0, %v1995
          %v1997 = vpop.f32.mrb[0].mxu0
          %1998 = vmatprep.mubr.bf16.mxu0 %v1699
          %1999 = vmatmul.mubr.bf16.gmra.mrb[0].mxu0 %v1698
          %v2000 = vpop.f32.mrb[0].mxu0
          %v2001 = vadd.f32 0.0, %v2000
          %v2002 = vpop.f32.mrb[0].mxu0
          %v2003 = vpop.f32.mrb[0].mxu0
          %v2004 = vadd.f32 0.0, %v2003
          %v2005 = vpop.f32.mrb[0].mxu0
          %2006 = vmatprep.mubr.bf16.mxu0 %v1701
          %2007 = vmatmul.mubr.bf16.gmra.mrb[0].mxu0 %v1700
          %v2008 = vpop.f32.mrb[0].mxu0
          %v2009 = vadd.f32 0.0, %v2008
          %v2010 = vpop.f32.mrb[0].mxu0
          %v2011 = vpop.f32.mrb[0].mxu0
          %v2012 = vadd.f32 0.0, %v2011
          %v2013 = vpop.f32.mrb[0].mxu0
          %2014 = vmatprep.mubr.bf16.mxu0 %v1703
          %2015 = vmatmul.mubr.bf16.gmra.mrb[0].mxu0 %v1702
          %v2016 = vpop.f32.mrb[0].mxu0
          %v2017 = vadd.f32 0.0, %v2016
          %v2018 = vpop.f32.mrb[0].mxu0
          %v2019 = vpop.f32.mrb[0].mxu0
          %v2020 = vadd.f32 0.0, %v2019
          %v2021 = vpop.f32.mrb[0].mxu0
          %2022 = vmatprep.mubr.bf16.mxu0 %v1705
          %2023 = vmatmul.mubr.bf16.gmra.mrb[0].mxu0 %v1704
          %v2024 = vpop.f32.mrb[0].mxu0
          %v2025 = vadd.f32 0.0, %v2024
          %v2026 = vpop.f32.mrb[0].mxu0
          %v2027 = vpop.f32.mrb[0].mxu0
          %v2028 = vadd.f32 0.0, %v2027
          %v2029 = vpop.f32.mrb[0].mxu0
          %2030 = vmatprep.mubr.bf16.mxu0 %v1707
          %2031 = vmatmul.mubr.bf16.gmra.mrb[0].mxu0 %v1706
          %v2032 = vpop.f32.mrb[0].mxu0
          %v2033 = vadd.f32 0.0, %v2032
          %v2034 = vpop.f32.mrb[0].mxu0
          %v2035 = vpop.f32.mrb[0].mxu0
          %v2036 = vadd.f32 0.0, %v2035
          %v2037 = vpop.f32.mrb[0].mxu0
          %2038 = vmatprep.mubr.bf16.mxu0 %v1709
          %2039 = vmatmul.mubr.bf16.gmra.mrb[0].mxu0 %v1708
          %v2040 = vpop.f32.mrb[0].mxu0
          %v2041 = vadd.f32 0.0, %v2040
          %v2042 = vpop.f32.mrb[0].mxu0
          %v2043 = vpop.f32.mrb[0].mxu0
          %v2044 = vadd.f32 0.0, %v2043
          %v2045 = vpop.f32.mrb[0].mxu0
          %2046 = vdwg.mxu0
          %v2047 = vadd.f32 %v1806, %v1985
          %v2048 = vadd.f32 %v1807, %v1988
          %v2049 = vadd.f32 %v1808, %v1993
          %v2050 = vadd.f32 %v1809, %v1996
          %v2051 = vadd.f32 %v1810, %v2001
          %v2052 = vadd.f32 %v1811, %v2004
          %v2053 = vadd.f32 %v1812, %v2009
          %v2054 = vadd.f32 %v1813, %v2012
          %v2055 = vadd.f32 %v1814, %v2017
          %v2056 = vadd.f32 %v1815, %v2020
          %v2057 = vadd.f32 %v1816, %v2025
          %v2058 = vadd.f32 %v1817, %v2028
          %v2059 = vadd.f32 %v1818, %v2033
          %v2060 = vadd.f32 %v1819, %v2036
          %v2061 = vadd.f32 %v1820, %v2041
          %v2062 = vadd.f32 %v1821, %v2044
          %2063 = vst [vmem:[#allocation3] sm:$0xff] %v2047
          %2064 = vst [vmem:[#allocation3 + $0x8] sm:$0xff] %v2048
          %2065 = vst [vmem:[#allocation3 + $0x10] sm:$0xff] %v2049
          %2066 = vst [vmem:[#allocation3 + $0x18] sm:$0xff] %v2050
          %2067 = vst [vmem:[#allocation3 + $0x20] sm:$0xff] %v2051
          %2068 = vst [vmem:[#allocation3 + $0x28] sm:$0xff] %v2052
          %2069 = vst [vmem:[#allocation3 + $0x30] sm:$0xff] %v2053
          %2070 = vst [vmem:[#allocation3 + $0x38] sm:$0xff] %v2054
          %2071 = vst [vmem:[#allocation3 + $0x40] sm:$0xff] %v2055
          %2072 = vst [vmem:[#allocation3 + $0x48] sm:$0xff] %v2056
          %2073 = vst [vmem:[#allocation3 + $0x50] sm:$0xff] %v2057
          %2074 = vst [vmem:[#allocation3 + $0x58] sm:$0xff] %v2058
          %2075 = vst [vmem:[#allocation3 + $0x60] sm:$0xff] %v2059
          %2076 = vst [vmem:[#allocation3 + $0x68] sm:$0xff] %v2060
          %2077 = vst [vmem:[#allocation3 + $0x70] sm:$0xff] %v2061
          %2078 = vst [vmem:[#allocation3 + $0x78] sm:$0xff] %v2062
          %vm2079 = vcmask 7168
          %2080 = vst.msk [vmem:[#allocation2] sm:$0xff] %vm2079, %v1454
          %2081 = vst.msk [vmem:[#allocation2 + $0x8] sm:$0xff] %vm2079, %v1455
          %2082 = vst.msk [vmem:[#allocation2 + $0x10] sm:$0xff] %vm2079, %v1456
          %2083 = vst.msk [vmem:[#allocation2 + $0x18] sm:$0xff] %vm2079, %v1457
          %2084 = vst.msk [vmem:[#allocation2 + $0x20] sm:$0xff] %vm2079, %v1458
          %2085 = vst.msk [vmem:[#allocation2 + $0x28] sm:$0xff] %vm2079, %v1459
          %2086 = vst.msk [vmem:[#allocation2 + $0x30] sm:$0xff] %vm2079, %v1460
          %2087 = vst.msk [vmem:[#allocation2 + $0x38] sm:$0xff] %vm2079, %v1461
          %2088 = vst.msk [vmem:[#allocation2 + $0x40] sm:$0xff] %vm2079, %v1462
          %2089 = vst.msk [vmem:[#allocation2 + $0x48] sm:$0xff] %vm2079, %v1463
          %2090 = vst.msk [vmem:[#allocation2 + $0x50] sm:$0xff] %vm2079, %v1464
          %2091 = vst.msk [vmem:[#allocation2 + $0x58] sm:$0xff] %vm2079, %v1465
          %2092 = vst.msk [vmem:[#allocation2 + $0x60] sm:$0xff] %vm2079, %v1466
          %2093 = vst.msk [vmem:[#allocation2 + $0x68] sm:$0xff] %vm2079, %v1467
          %2094 = vst.msk [vmem:[#allocation2 + $0x70] sm:$0xff] %vm2079, %v1468
          %2095 = vst.msk [vmem:[#allocation2 + $0x78] sm:$0xff] %vm2079, %v1469
          %s2096 = scalar_lea.vmem %s821, 128 [#allocation6]
          %v2097 = vld [vmem:[%s2096] sm:$0xff]
          %v2098 = vld [vmem:[%s2096 + $0x8] sm:$0xff]
          %v2099 = vld [vmem:[%s2096 + $0x10] sm:$0xff]
          %v2100 = vld [vmem:[%s2096 + $0x18] sm:$0xff]
          %v2101 = vld [vmem:[%s2096 + $0x20] sm:$0xff]
          %v2102 = vld [vmem:[%s2096 + $0x28] sm:$0xff]
          %v2103 = vld [vmem:[%s2096 + $0x30] sm:$0xff]
          %v2104 = vld [vmem:[%s2096 + $0x38] sm:$0xff]
          %v2105 = vld [vmem:[%s2096 + $0x40] sm:$0xff]
          %v2106 = vld [vmem:[%s2096 + $0x48] sm:$0xff]
          %v2107 = vld [vmem:[%s2096 + $0x50] sm:$0xff]
          %v2108 = vld [vmem:[%s2096 + $0x58] sm:$0xff]
          %v2109 = vld [vmem:[%s2096 + $0x60] sm:$0xff]
          %v2110 = vld [vmem:[%s2096 + $0x68] sm:$0xff]
          %v2111 = vld [vmem:[%s2096 + $0x70] sm:$0xff]
          %v2112 = vld [vmem:[%s2096 + $0x78] sm:$0xff]
          %s2113 = scalar_lea.vmem %s828, 2 [#allocation7]
          %v2114 = vld [vmem:[%s2113] sm:$0x3]
          %2116 = vset.pattern.permute.xlu0 0
          %2117 = vperm.xlu0 %2116, %v2097
          %v2118 = vpop.permute.xlu0 %2117
          %2121 = vset.pattern.permute.xlu0 0
          %2122 = vperm.xlu0 %2121, %v2098
          %v2123 = vpop.permute.xlu0 %2122
          %2126 = vset.pattern.permute.xlu0 0
          %2127 = vperm.xlu0 %2126, %v2099
          %v2128 = vpop.permute.xlu0 %2127
          %2131 = vset.pattern.permute.xlu0 0
          %2132 = vperm.xlu0 %2131, %v2100
          %v2133 = vpop.permute.xlu0 %2132
          %2136 = vset.pattern.permute.xlu0 0
          %2137 = vperm.xlu0 %2136, %v2101
          %v2138 = vpop.permute.xlu0 %2137
          %2141 = vset.pattern.permute.xlu0 0
          %2142 = vperm.xlu0 %2141, %v2102
          %v2143 = vpop.permute.xlu0 %2142
          %2146 = vset.pattern.permute.xlu0 0
          %2147 = vperm.xlu0 %2146, %v2103
          %v2148 = vpop.permute.xlu0 %2147
          %2151 = vset.pattern.permute.xlu0 0
          %2152 = vperm.xlu0 %2151, %v2104
          %v2153 = vpop.permute.xlu0 %2152
          %2156 = vset.pattern.permute.xlu0 0
          %2157 = vperm.xlu0 %2156, %v2105
          %v2158 = vpop.permute.xlu0 %2157
          %2161 = vset.pattern.permute.xlu0 0
          %2162 = vperm.xlu0 %2161, %v2106
          %v2163 = vpop.permute.xlu0 %2162
          %2166 = vset.pattern.permute.xlu0 0
          %2167 = vperm.xlu0 %2166, %v2107
          %v2168 = vpop.permute.xlu0 %2167
          %2171 = vset.pattern.permute.xlu0 0
          %2172 = vperm.xlu0 %2171, %v2108
          %v2173 = vpop.permute.xlu0 %2172
          %2176 = vset.pattern.permute.xlu0 0
          %2177 = vperm.xlu0 %2176, %v2109
          %v2178 = vpop.permute.xlu0 %2177
          %2181 = vset.pattern.permute.xlu0 0
          %2182 = vperm.xlu0 %2181, %v2110
          %v2183 = vpop.permute.xlu0 %2182
          %2186 = vset.pattern.permute.xlu0 0
          %2187 = vperm.xlu0 %2186, %v2111
          %v2188 = vpop.permute.xlu0 %2187
          %2191 = vset.pattern.permute.xlu0 0
          %2192 = vperm.xlu0 %2191, %v2112
          %v2193 = vpop.permute.xlu0 %2192
          %v2196 = vlaneseq
          %v2197 = vshrl.u32 %v2196, 7
          %v2198 = vsub.s32 0, %v2197
          %v2199 = vrot.slane %v2114, %v2198
          %v2200 = vlaneseq
          %v2201 = vshrl.u32 %v2200, 7
          %v2202 = vsub.s32 1, %v2201
          %v2203 = vrot.slane %v2114, %v2202
          %v2206 = vadd.f32 %v2118, %v2199
          %v2207 = vadd.f32 %v2118, %v2203
          %v2208 = vadd.f32 %v2123, %v2199
          %v2209 = vadd.f32 %v2123, %v2203
          %v2210 = vadd.f32 %v2128, %v2199
          %v2211 = vadd.f32 %v2128, %v2203
          %v2212 = vadd.f32 %v2133, %v2199
          %v2213 = vadd.f32 %v2133, %v2203
          %v2214 = vadd.f32 %v2138, %v2199
          %v2215 = vadd.f32 %v2138, %v2203
          %v2216 = vadd.f32 %v2143, %v2199
          %v2217 = vadd.f32 %v2143, %v2203
          %v2218 = vadd.f32 %v2148, %v2199
          %v2219 = vadd.f32 %v2148, %v2203
          %v2220 = vadd.f32 %v2153, %v2199
          %v2221 = vadd.f32 %v2153, %v2203
          %v2222 = vadd.f32 %v2158, %v2199
          %v2223 = vadd.f32 %v2158, %v2203
          %v2224 = vadd.f32 %v2163, %v2199
          %v2225 = vadd.f32 %v2163, %v2203
          %v2226 = vadd.f32 %v2168, %v2199
          %v2227 = vadd.f32 %v2168, %v2203
          %v2228 = vadd.f32 %v2173, %v2199
          %v2229 = vadd.f32 %v2173, %v2203
          %v2230 = vadd.f32 %v2178, %v2199
          %v2231 = vadd.f32 %v2178, %v2203
          %v2232 = vadd.f32 %v2183, %v2199
          %v2233 = vadd.f32 %v2183, %v2203
          %v2234 = vadd.f32 %v2188, %v2199
          %v2235 = vadd.f32 %v2188, %v2203
          %v2236 = vadd.f32 %v2193, %v2199
          %v2237 = vadd.f32 %v2193, %v2203
          %v2238 = vmul.f32 %v2206, 0.2
          %v2239 = vmul.f32 %v2207, 0.2
          %v2240 = vmul.f32 %v2208, 0.2
          %v2241 = vmul.f32 %v2209, 0.2
          %v2242 = vmul.f32 %v2210, 0.2
          %v2243 = vmul.f32 %v2211, 0.2
          %v2244 = vmul.f32 %v2212, 0.2
          %v2245 = vmul.f32 %v2213, 0.2
          %v2246 = vmul.f32 %v2214, 0.2
          %v2247 = vmul.f32 %v2215, 0.2
          %v2248 = vmul.f32 %v2216, 0.2
          %v2249 = vmul.f32 %v2217, 0.2
          %v2250 = vmul.f32 %v2218, 0.2
          %v2251 = vmul.f32 %v2219, 0.2
          %v2252 = vmul.f32 %v2220, 0.2
          %v2253 = vmul.f32 %v2221, 0.2
          %v2254 = vmul.f32 %v2222, 0.2
          %v2255 = vmul.f32 %v2223, 0.2
          %v2256 = vmul.f32 %v2224, 0.2
          %v2257 = vmul.f32 %v2225, 0.2
          %v2258 = vmul.f32 %v2226, 0.2
          %v2259 = vmul.f32 %v2227, 0.2
          %v2260 = vmul.f32 %v2228, 0.2
          %v2261 = vmul.f32 %v2229, 0.2
          %v2262 = vmul.f32 %v2230, 0.2
          %v2263 = vmul.f32 %v2231, 0.2
          %v2264 = vmul.f32 %v2232, 0.2
          %v2265 = vmul.f32 %v2233, 0.2
          %v2266 = vmul.f32 %v2234, 0.2
          %v2267 = vmul.f32 %v2235, 0.2
          %v2268 = vmul.f32 %v2236, 0.2
          %v2269 = vmul.f32 %v2237, 0.2
          %v2270 = vmax.f32 %v2206, %v2238
          %v2271 = vmax.f32 %v2207, %v2239
          %v2272 = vmax.f32 %v2208, %v2240
          %v2273 = vmax.f32 %v2209, %v2241
          %v2274 = vmax.f32 %v2210, %v2242
          %v2275 = vmax.f32 %v2211, %v2243
          %v2276 = vmax.f32 %v2212, %v2244
          %v2277 = vmax.f32 %v2213, %v2245
          %v2278 = vmax.f32 %v2214, %v2246
          %v2279 = vmax.f32 %v2215, %v2247
          %v2280 = vmax.f32 %v2216, %v2248
          %v2281 = vmax.f32 %v2217, %v2249
          %v2282 = vmax.f32 %v2218, %v2250
          %v2283 = vmax.f32 %v2219, %v2251
          %v2284 = vmax.f32 %v2220, %v2252
          %v2285 = vmax.f32 %v2221, %v2253
          %v2286 = vmax.f32 %v2222, %v2254
          %v2287 = vmax.f32 %v2223, %v2255
          %v2288 = vmax.f32 %v2224, %v2256
          %v2289 = vmax.f32 %v2225, %v2257
          %v2290 = vmax.f32 %v2226, %v2258
          %v2291 = vmax.f32 %v2227, %v2259
          %v2292 = vmax.f32 %v2228, %v2260
          %v2293 = vmax.f32 %v2229, %v2261
          %v2294 = vmax.f32 %v2230, %v2262
          %v2295 = vmax.f32 %v2231, %v2263
          %v2296 = vmax.f32 %v2232, %v2264
          %v2297 = vmax.f32 %v2233, %v2265
          %v2298 = vmax.f32 %v2234, %v2266
          %v2299 = vmax.f32 %v2235, %v2267
          %v2300 = vmax.f32 %v2236, %v2268
          %v2301 = vmax.f32 %v2237, %v2269
          %v2302 = vsel %vm1326, %v2270, -1e+30
          %v2303 = vsel %vm1327, %v2271, -1e+30
          %v2304 = vsel %vm1328, %v2272, -1e+30
          %v2305 = vsel %vm1329, %v2273, -1e+30
          %v2306 = vsel %vm1330, %v2274, -1e+30
          %v2307 = vsel %vm1331, %v2275, -1e+30
          %v2308 = vsel %vm1332, %v2276, -1e+30
          %v2309 = vsel %vm1333, %v2277, -1e+30
          %v2310 = vsel %vm1334, %v2278, -1e+30
          %v2311 = vsel %vm1335, %v2279, -1e+30
          %v2312 = vsel %vm1336, %v2280, -1e+30
          %v2313 = vsel %vm1337, %v2281, -1e+30
          %v2314 = vsel %vm1338, %v2282, -1e+30
          %v2315 = vsel %vm1339, %v2283, -1e+30
          %v2316 = vsel %vm1340, %v2284, -1e+30
          %v2317 = vsel %vm1341, %v2285, -1e+30
          %v2318 = vsel %vm1342, %v2286, -1e+30
          %v2319 = vsel %vm1343, %v2287, -1e+30
          %v2320 = vsel %vm1344, %v2288, -1e+30
          %v2321 = vsel %vm1345, %v2289, -1e+30
          %v2322 = vsel %vm1346, %v2290, -1e+30
          %v2323 = vsel %vm1347, %v2291, -1e+30
          %v2324 = vsel %vm1348, %v2292, -1e+30
          %v2325 = vsel %vm1349, %v2293, -1e+30
          %v2326 = vsel %vm1350, %v2294, -1e+30
          %v2327 = vsel %vm1351, %v2295, -1e+30
          %v2328 = vsel %vm1352, %v2296, -1e+30
          %v2329 = vsel %vm1353, %v2297, -1e+30
          %v2330 = vsel %vm1354, %v2298, -1e+30
          %v2331 = vsel %vm1355, %v2299, -1e+30
          %v2332 = vsel %vm1356, %v2300, -1e+30
          %v2333 = vsel %vm1357, %v2301, -1e+30
          %s2334 = scalar_lea.vmem [#allocation2], 128
          %v2335 = vld [vmem:[%s2334] sm:$0xff]
          %v2336 = vld [vmem:[%s2334 + $0x8] sm:$0xff]
          %v2337 = vld [vmem:[%s2334 + $0x10] sm:$0xff]
          %v2338 = vld [vmem:[%s2334 + $0x18] sm:$0xff]
          %v2339 = vld [vmem:[%s2334 + $0x20] sm:$0xff]
          %v2340 = vld [vmem:[%s2334 + $0x28] sm:$0xff]
          %v2341 = vld [vmem:[%s2334 + $0x30] sm:$0xff]
          %v2342 = vld [vmem:[%s2334 + $0x38] sm:$0xff]
          %v2343 = vld [vmem:[%s2334 + $0x40] sm:$0xff]
          %v2344 = vld [vmem:[%s2334 + $0x48] sm:$0xff]
          %v2345 = vld [vmem:[%s2334 + $0x50] sm:$0xff]
          %v2346 = vld [vmem:[%s2334 + $0x58] sm:$0xff]
          %v2347 = vld [vmem:[%s2334 + $0x60] sm:$0xff]
          %v2348 = vld [vmem:[%s2334 + $0x68] sm:$0xff]
          %v2349 = vld [vmem:[%s2334 + $0x70] sm:$0xff]
          %v2350 = vld [vmem:[%s2334 + $0x78] sm:$0xff]
          %v2351 = vmax.f32 %v2302, %v2303
          %2352 = vmax.xlane.f32.xlu0 %v2351
          %v2353 = vpop.xlane.xlu0 %2352
          %v2354 = vmax.f32 %v2304, %v2305
          %2355 = vmax.xlane.f32.xlu0 %v2354
          %v2356 = vpop.xlane.xlu0 %2355
          %v2357 = vmax.f32 %v2306, %v2307
          %2358 = vmax.xlane.f32.xlu0 %v2357
          %v2359 = vpop.xlane.xlu0 %2358
          %v2360 = vmax.f32 %v2308, %v2309
          %2361 = vmax.xlane.f32.xlu0 %v2360
          %v2362 = vpop.xlane.xlu0 %2361
          %v2363 = vmax.f32 %v2310, %v2311
          %2364 = vmax.xlane.f32.xlu0 %v2363
          %v2365 = vpop.xlane.xlu0 %2364
          %v2366 = vmax.f32 %v2312, %v2313
          %2367 = vmax.xlane.f32.xlu0 %v2366
          %v2368 = vpop.xlane.xlu0 %2367
          %v2369 = vmax.f32 %v2314, %v2315
          %2370 = vmax.xlane.f32.xlu0 %v2369
          %v2371 = vpop.xlane.xlu0 %2370
          %v2372 = vmax.f32 %v2316, %v2317
          %2373 = vmax.xlane.f32.xlu0 %v2372
          %v2374 = vpop.xlane.xlu0 %2373
          %v2375 = vmax.f32 %v2318, %v2319
          %2376 = vmax.xlane.f32.xlu0 %v2375
          %v2377 = vpop.xlane.xlu0 %2376
          %v2378 = vmax.f32 %v2320, %v2321
          %2379 = vmax.xlane.f32.xlu0 %v2378
          %v2380 = vpop.xlane.xlu0 %2379
          %v2381 = vmax.f32 %v2322, %v2323
          %2382 = vmax.xlane.f32.xlu0 %v2381
          %v2383 = vpop.xlane.xlu0 %2382
          %v2384 = vmax.f32 %v2324, %v2325
          %2385 = vmax.xlane.f32.xlu0 %v2384
          %v2386 = vpop.xlane.xlu0 %2385
          %v2387 = vmax.f32 %v2326, %v2327
          %2388 = vmax.xlane.f32.xlu0 %v2387
          %v2389 = vpop.xlane.xlu0 %2388
          %v2390 = vmax.f32 %v2328, %v2329
          %2391 = vmax.xlane.f32.xlu0 %v2390
          %v2392 = vpop.xlane.xlu0 %2391
          %v2393 = vmax.f32 %v2330, %v2331
          %2394 = vmax.xlane.f32.xlu0 %v2393
          %v2395 = vpop.xlane.xlu0 %2394
          %v2396 = vmax.f32 %v2332, %v2333
          %2397 = vmax.xlane.f32.xlu0 %v2396
          %v2398 = vpop.xlane.xlu0 %2397
          %v2399 = vmax.f32 %v2335, %v2353
          %v2400 = vmax.f32 %v2336, %v2356
          %v2401 = vmax.f32 %v2337, %v2359
          %v2402 = vmax.f32 %v2338, %v2362
          %v2403 = vmax.f32 %v2339, %v2365
          %v2404 = vmax.f32 %v2340, %v2368
          %v2405 = vmax.f32 %v2341, %v2371
          %v2406 = vmax.f32 %v2342, %v2374
          %v2407 = vmax.f32 %v2343, %v2377
          %v2408 = vmax.f32 %v2344, %v2380
          %v2409 = vmax.f32 %v2345, %v2383
          %v2410 = vmax.f32 %v2346, %v2386
          %v2411 = vmax.f32 %v2347, %v2389
          %v2412 = vmax.f32 %v2348, %v2392
          %v2413 = vmax.f32 %v2349, %v2395
          %v2414 = vmax.f32 %v2350, %v2398
          %v2415 = vsub.f32 %v2335, %v2399
          %v2416 = vsub.f32 %v2336, %v2400
          %v2417 = vsub.f32 %v2337, %v2401
          %v2418 = vsub.f32 %v2338, %v2402
          %v2419 = vsub.f32 %v2339, %v2403
          %v2420 = vsub.f32 %v2340, %v2404
          %v2421 = vsub.f32 %v2341, %v2405
          %v2422 = vsub.f32 %v2342, %v2406
          %v2423 = vsub.f32 %v2343, %v2407
          %v2424 = vsub.f32 %v2344, %v2408
          %v2425 = vsub.f32 %v2345, %v2409
          %v2426 = vsub.f32 %v2346, %v2410
          %v2427 = vsub.f32 %v2347, %v2411
          %v2428 = vsub.f32 %v2348, %v2412
          %v2429 = vsub.f32 %v2349, %v2413
          %v2430 = vsub.f32 %v2350, %v2414
          %v2431 = vmul.f32 %v2415, 1.442695
          %v2432 = vpow.pop %v2431
          %v2433 = vmul.f32 %v2416, 1.442695
          %v2434 = vpow.pop %v2433
          %v2435 = vmul.f32 %v2417, 1.442695
          %v2436 = vpow.pop %v2435
          %v2437 = vmul.f32 %v2418, 1.442695
          %v2438 = vpow.pop %v2437
          %v2439 = vmul.f32 %v2419, 1.442695
          %v2440 = vpow.pop %v2439
          %v2441 = vmul.f32 %v2420, 1.442695
          %v2442 = vpow.pop %v2441
          %v2443 = vmul.f32 %v2421, 1.442695
          %v2444 = vpow.pop %v2443
          %v2445 = vmul.f32 %v2422, 1.442695
          %v2446 = vpow.pop %v2445
          %v2447 = vmul.f32 %v2423, 1.442695
          %v2448 = vpow.pop %v2447
          %v2449 = vmul.f32 %v2424, 1.442695
          %v2450 = vpow.pop %v2449
          %v2451 = vmul.f32 %v2425, 1.442695
          %v2452 = vpow.pop %v2451
          %v2453 = vmul.f32 %v2426, 1.442695
          %v2454 = vpow.pop %v2453
          %v2455 = vmul.f32 %v2427, 1.442695
          %v2456 = vpow.pop %v2455
          %v2457 = vmul.f32 %v2428, 1.442695
          %v2458 = vpow.pop %v2457
          %v2459 = vmul.f32 %v2429, 1.442695
          %v2460 = vpow.pop %v2459
          %v2461 = vmul.f32 %v2430, 1.442695
          %v2462 = vpow.pop %v2461
          %2464 = vset.pattern.permute.xlu0 0
          %2465 = vperm.xlu0 %2464, %v2399
          %v2466 = vpop.permute.xlu0 %2465
          %2469 = vset.pattern.permute.xlu0 0
          %2470 = vperm.xlu0 %2469, %v2400
          %v2471 = vpop.permute.xlu0 %2470
          %2474 = vset.pattern.permute.xlu0 0
          %2475 = vperm.xlu0 %2474, %v2401
          %v2476 = vpop.permute.xlu0 %2475
          %2479 = vset.pattern.permute.xlu0 0
          %2480 = vperm.xlu0 %2479, %v2402
          %v2481 = vpop.permute.xlu0 %2480
          %2484 = vset.pattern.permute.xlu0 0
          %2485 = vperm.xlu0 %2484, %v2403
          %v2486 = vpop.permute.xlu0 %2485
          %2489 = vset.pattern.permute.xlu0 0
          %2490 = vperm.xlu0 %2489, %v2404
          %v2491 = vpop.permute.xlu0 %2490
          %2494 = vset.pattern.permute.xlu0 0
          %2495 = vperm.xlu0 %2494, %v2405
          %v2496 = vpop.permute.xlu0 %2495
          %2499 = vset.pattern.permute.xlu0 0
          %2500 = vperm.xlu0 %2499, %v2406
          %v2501 = vpop.permute.xlu0 %2500
          %2504 = vset.pattern.permute.xlu0 0
          %2505 = vperm.xlu0 %2504, %v2407
          %v2506 = vpop.permute.xlu0 %2505
          %2509 = vset.pattern.permute.xlu0 0
          %2510 = vperm.xlu0 %2509, %v2408
          %v2511 = vpop.permute.xlu0 %2510
          %2514 = vset.pattern.permute.xlu0 0
          %2515 = vperm.xlu0 %2514, %v2409
          %v2516 = vpop.permute.xlu0 %2515
          %2519 = vset.pattern.permute.xlu0 0
          %2520 = vperm.xlu0 %2519, %v2410
          %v2521 = vpop.permute.xlu0 %2520
          %2524 = vset.pattern.permute.xlu0 0
          %2525 = vperm.xlu0 %2524, %v2411
          %v2526 = vpop.permute.xlu0 %2525
          %2529 = vset.pattern.permute.xlu0 0
          %2530 = vperm.xlu0 %2529, %v2412
          %v2531 = vpop.permute.xlu0 %2530
          %2534 = vset.pattern.permute.xlu0 0
          %2535 = vperm.xlu0 %2534, %v2413
          %v2536 = vpop.permute.xlu0 %2535
          %2539 = vset.pattern.permute.xlu0 0
          %2540 = vperm.xlu0 %2539, %v2414
          %v2541 = vpop.permute.xlu0 %2540
          %v2543 = vsub.f32 %v2302, %v2466
          %v2544 = vsub.f32 %v2303, %v2466
          %v2545 = vsub.f32 %v2304, %v2471
          %v2546 = vsub.f32 %v2305, %v2471
          %v2547 = vsub.f32 %v2306, %v2476
          %v2548 = vsub.f32 %v2307, %v2476
          %v2549 = vsub.f32 %v2308, %v2481
          %v2550 = vsub.f32 %v2309, %v2481
          %v2551 = vsub.f32 %v2310, %v2486
          %v2552 = vsub.f32 %v2311, %v2486
          %v2553 = vsub.f32 %v2312, %v2491
          %v2554 = vsub.f32 %v2313, %v2491
          %v2555 = vsub.f32 %v2314, %v2496
          %v2556 = vsub.f32 %v2315, %v2496
          %v2557 = vsub.f32 %v2316, %v2501
          %v2558 = vsub.f32 %v2317, %v2501
          %v2559 = vsub.f32 %v2318, %v2506
          %v2560 = vsub.f32 %v2319, %v2506
          %v2561 = vsub.f32 %v2320, %v2511
          %v2562 = vsub.f32 %v2321, %v2511
          %v2563 = vsub.f32 %v2322, %v2516
          %v2564 = vsub.f32 %v2323, %v2516
          %v2565 = vsub.f32 %v2324, %v2521
          %v2566 = vsub.f32 %v2325, %v2521
          %v2567 = vsub.f32 %v2326, %v2526
          %v2568 = vsub.f32 %v2327, %v2526
          %v2569 = vsub.f32 %v2328, %v2531
          %v2570 = vsub.f32 %v2329, %v2531
          %v2571 = vsub.f32 %v2330, %v2536
          %v2572 = vsub.f32 %v2331, %v2536
          %v2573 = vsub.f32 %v2332, %v2541
          %v2574 = vsub.f32 %v2333, %v2541
          %v2575 = vmul.f32 %v2543, 1.442695
          %v2576 = vpow.pop %v2575
          %v2577 = vmul.f32 %v2544, 1.442695
          %v2578 = vpow.pop %v2577
          %v2579 = vmul.f32 %v2545, 1.442695
          %v2580 = vpow.pop %v2579
          %v2581 = vmul.f32 %v2546, 1.442695
          %v2582 = vpow.pop %v2581
          %v2583 = vmul.f32 %v2547, 1.442695
          %v2584 = vpow.pop %v2583
          %v2585 = vmul.f32 %v2548, 1.442695
          %v2586 = vpow.pop %v2585
          %v2587 = vmul.f32 %v2549, 1.442695
          %v2588 = vpow.pop %v2587
          %v2589 = vmul.f32 %v2550, 1.442695
          %v2590 = vpow.pop %v2589
          %v2591 = vmul.f32 %v2551, 1.442695
          %v2592 = vpow.pop %v2591
          %v2593 = vmul.f32 %v2552, 1.442695
          %v2594 = vpow.pop %v2593
          %v2595 = vmul.f32 %v2553, 1.442695
          %v2596 = vpow.pop %v2595
          %v2597 = vmul.f32 %v2554, 1.442695
          %v2598 = vpow.pop %v2597
          %v2599 = vmul.f32 %v2555, 1.442695
          %v2600 = vpow.pop %v2599
          %v2601 = vmul.f32 %v2556, 1.442695
          %v2602 = vpow.pop %v2601
          %v2603 = vmul.f32 %v2557, 1.442695
          %v2604 = vpow.pop %v2603
          %v2605 = vmul.f32 %v2558, 1.442695
          %v2606 = vpow.pop %v2605
          %v2607 = vmul.f32 %v2559, 1.442695
          %v2608 = vpow.pop %v2607
          %v2609 = vmul.f32 %v2560, 1.442695
          %v2610 = vpow.pop %v2609
          %v2611 = vmul.f32 %v2561, 1.442695
          %v2612 = vpow.pop %v2611
          %v2613 = vmul.f32 %v2562, 1.442695
          %v2614 = vpow.pop %v2613
          %v2615 = vmul.f32 %v2563, 1.442695
          %v2616 = vpow.pop %v2615
          %v2617 = vmul.f32 %v2564, 1.442695
          %v2618 = vpow.pop %v2617
          %v2619 = vmul.f32 %v2565, 1.442695
          %v2620 = vpow.pop %v2619
          %v2621 = vmul.f32 %v2566, 1.442695
          %v2622 = vpow.pop %v2621
          %v2623 = vmul.f32 %v2567, 1.442695
          %v2624 = vpow.pop %v2623
          %v2625 = vmul.f32 %v2568, 1.442695
          %v2626 = vpow.pop %v2625
          %v2627 = vmul.f32 %v2569, 1.442695
          %v2628 = vpow.pop %v2627
          %v2629 = vmul.f32 %v2570, 1.442695
          %v2630 = vpow.pop %v2629
          %v2631 = vmul.f32 %v2571, 1.442695
          %v2632 = vpow.pop %v2631
          %v2633 = vmul.f32 %v2572, 1.442695
          %v2634 = vpow.pop %v2633
          %v2635 = vmul.f32 %v2573, 1.442695
          %v2636 = vpow.pop %v2635
          %v2637 = vmul.f32 %v2574, 1.442695
          %v2638 = vpow.pop %v2637
          %v2639 = vpack.c.bf16 %v2580, %v2576
          %v2640 = vpack.c.bf16 %v2582, %v2578
          %v2641 = vpack.c.bf16 %v2588, %v2584
          %v2642 = vpack.c.bf16 %v2590, %v2586
          %v2643 = vpack.c.bf16 %v2596, %v2592
          %v2644 = vpack.c.bf16 %v2598, %v2594
          %v2645 = vpack.c.bf16 %v2604, %v2600
          %v2646 = vpack.c.bf16 %v2606, %v2602
          %v2647 = vpack.c.bf16 %v2612, %v2608
          %v2648 = vpack.c.bf16 %v2614, %v2610
          %v2649 = vpack.c.bf16 %v2620, %v2616
          %v2650 = vpack.c.bf16 %v2622, %v2618
          %v2651 = vpack.c.bf16 %v2628, %v2624
          %v2652 = vpack.c.bf16 %v2630, %v2626
          %v2653 = vpack.c.bf16 %v2636, %v2632
          %v2654 = vpack.c.bf16 %v2638, %v2634
          %s2655 = scalar_lea.vmem [#allocation3], 128
          %v2656 = vld [vmem:[%s2655] sm:$0xff]
          %v2657 = vld [vmem:[%s2655 + $0x8] sm:$0xff]
          %v2658 = vld [vmem:[%s2655 + $0x10] sm:$0xff]
          %v2659 = vld [vmem:[%s2655 + $0x18] sm:$0xff]
          %v2660 = vld [vmem:[%s2655 + $0x20] sm:$0xff]
          %v2661 = vld [vmem:[%s2655 + $0x28] sm:$0xff]
          %v2662 = vld [vmem:[%s2655 + $0x30] sm:$0xff]
          %v2663 = vld [vmem:[%s2655 + $0x38] sm:$0xff]
          %v2664 = vld [vmem:[%s2655 + $0x40] sm:$0xff]
          %v2665 = vld [vmem:[%s2655 + $0x48] sm:$0xff]
          %v2666 = vld [vmem:[%s2655 + $0x50] sm:$0xff]
          %v2667 = vld [vmem:[%s2655 + $0x58] sm:$0xff]
          %v2668 = vld [vmem:[%s2655 + $0x60] sm:$0xff]
          %v2669 = vld [vmem:[%s2655 + $0x68] sm:$0xff]
          %v2670 = vld [vmem:[%s2655 + $0x70] sm:$0xff]
          %v2671 = vld [vmem:[%s2655 + $0x78] sm:$0xff]
          %2673 = vset.pattern.permute.xlu0 0
          %2674 = vperm.xlu0 %2673, %v2432
          %v2675 = vpop.permute.xlu0 %2674
          %2678 = vset.pattern.permute.xlu0 0
          %2679 = vperm.xlu0 %2678, %v2434
          %v2680 = vpop.permute.xlu0 %2679
          %2683 = vset.pattern.permute.xlu0 0
          %2684 = vperm.xlu0 %2683, %v2436
          %v2685 = vpop.permute.xlu0 %2684
          %2688 = vset.pattern.permute.xlu0 0
          %2689 = vperm.xlu0 %2688, %v2438
          %v2690 = vpop.permute.xlu0 %2689
          %2693 = vset.pattern.permute.xlu0 0
          %2694 = vperm.xlu0 %2693, %v2440
          %v2695 = vpop.permute.xlu0 %2694
          %2698 = vset.pattern.permute.xlu0 0
          %2699 = vperm.xlu0 %2698, %v2442
          %v2700 = vpop.permute.xlu0 %2699
          %2703 = vset.pattern.permute.xlu0 0
          %2704 = vperm.xlu0 %2703, %v2444
          %v2705 = vpop.permute.xlu0 %2704
          %2708 = vset.pattern.permute.xlu0 0
          %2709 = vperm.xlu0 %2708, %v2446
          %v2710 = vpop.permute.xlu0 %2709
          %2713 = vset.pattern.permute.xlu0 0
          %2714 = vperm.xlu0 %2713, %v2448
          %v2715 = vpop.permute.xlu0 %2714
          %2718 = vset.pattern.permute.xlu0 0
          %2719 = vperm.xlu0 %2718, %v2450
          %v2720 = vpop.permute.xlu0 %2719
          %2723 = vset.pattern.permute.xlu0 0
          %2724 = vperm.xlu0 %2723, %v2452
          %v2725 = vpop.permute.xlu0 %2724
          %2728 = vset.pattern.permute.xlu0 0
          %2729 = vperm.xlu0 %2728, %v2454
          %v2730 = vpop.permute.xlu0 %2729
          %2733 = vset.pattern.permute.xlu0 0
          %2734 = vperm.xlu0 %2733, %v2456
          %v2735 = vpop.permute.xlu0 %2734
          %2738 = vset.pattern.permute.xlu0 0
          %2739 = vperm.xlu0 %2738, %v2458
          %v2740 = vpop.permute.xlu0 %2739
          %2743 = vset.pattern.permute.xlu0 0
          %2744 = vperm.xlu0 %2743, %v2460
          %v2745 = vpop.permute.xlu0 %2744
          %2748 = vset.pattern.permute.xlu0 0
          %2749 = vperm.xlu0 %2748, %v2462
          %v2750 = vpop.permute.xlu0 %2749
          %v2752 = vmul.f32 %v2675, %v2656
          %v2753 = vmul.f32 %v2680, %v2657
          %v2754 = vmul.f32 %v2685, %v2658
          %v2755 = vmul.f32 %v2690, %v2659
          %v2756 = vmul.f32 %v2695, %v2660
          %v2757 = vmul.f32 %v2700, %v2661
          %v2758 = vmul.f32 %v2705, %v2662
          %v2759 = vmul.f32 %v2710, %v2663
          %v2760 = vmul.f32 %v2715, %v2664
          %v2761 = vmul.f32 %v2720, %v2665
          %v2762 = vmul.f32 %v2725, %v2666
          %v2763 = vmul.f32 %v2730, %v2667
          %v2764 = vmul.f32 %v2735, %v2668
          %v2765 = vmul.f32 %v2740, %v2669
          %v2766 = vmul.f32 %v2745, %v2670
          %v2767 = vmul.f32 %v2750, %v2671
          %s2768 = scalar_lea.vmem %s835, 128 [#allocation8]
          %v2769 = vld [vmem:[%s2768] sm:$0xf]
          %v2770 = vld [vmem:[%s2768 + $0x4] sm:$0xf]
          %v2771 = vld [vmem:[%s2768 + $0x8] sm:$0xf]
          %v2772 = vld [vmem:[%s2768 + $0xc] sm:$0xf]
          %v2773 = vld [vmem:[%s2768 + $0x10] sm:$0xf]
          %v2774 = vld [vmem:[%s2768 + $0x14] sm:$0xf]
          %v2775 = vld [vmem:[%s2768 + $0x18] sm:$0xf]
          %v2776 = vld [vmem:[%s2768 + $0x1c] sm:$0xf]
          %v2777 = vld [vmem:[%s2768 + $0x20] sm:$0xf]
          %v2778 = vld [vmem:[%s2768 + $0x24] sm:$0xf]
          %v2779 = vld [vmem:[%s2768 + $0x28] sm:$0xf]
          %v2780 = vld [vmem:[%s2768 + $0x2c] sm:$0xf]
          %v2781 = vld [vmem:[%s2768 + $0x30] sm:$0xf]
          %v2782 = vld [vmem:[%s2768 + $0x34] sm:$0xf]
          %v2783 = vld [vmem:[%s2768 + $0x38] sm:$0xf]
          %v2784 = vld [vmem:[%s2768 + $0x3c] sm:$0xf]
          %v2785 = vld [vmem:[%s2768 + $0x40] sm:$0xf]
          %v2786 = vld [vmem:[%s2768 + $0x44] sm:$0xf]
          %v2787 = vld [vmem:[%s2768 + $0x48] sm:$0xf]
          %v2788 = vld [vmem:[%s2768 + $0x4c] sm:$0xf]
          %v2789 = vld [vmem:[%s2768 + $0x50] sm:$0xf]
          %v2790 = vld [vmem:[%s2768 + $0x54] sm:$0xf]
          %v2791 = vld [vmem:[%s2768 + $0x58] sm:$0xf]
          %v2792 = vld [vmem:[%s2768 + $0x5c] sm:$0xf]
          %v2793 = vld [vmem:[%s2768 + $0x60] sm:$0xf]
          %v2794 = vld [vmem:[%s2768 + $0x64] sm:$0xf]
          %v2795 = vld [vmem:[%s2768 + $0x68] sm:$0xf]
          %v2796 = vld [vmem:[%s2768 + $0x6c] sm:$0xf]
          %v2797 = vld [vmem:[%s2768 + $0x70] sm:$0xf]
          %v2798 = vld [vmem:[%s2768 + $0x74] sm:$0xf]
          %v2799 = vld [vmem:[%s2768 + $0x78] sm:$0xf]
          %v2800 = vld [vmem:[%s2768 + $0x7c] sm:$0xf]
          %v2833 = vunpack.c.l.b16 %v2769
          %v2834 = vunpack.c.l.b16 %v2770
          %v2835 = vunpack.c.l.b16 %v2771
          %v2836 = vunpack.c.l.b16 %v2772
          %v2837 = vunpack.c.l.b16 %v2773
          %v2838 = vunpack.c.l.b16 %v2774
          %v2839 = vunpack.c.l.b16 %v2775
          %v2840 = vunpack.c.l.b16 %v2776
          %v2841 = vunpack.c.l.b16 %v2777
          %v2842 = vunpack.c.l.b16 %v2778
          %v2843 = vunpack.c.l.b16 %v2779
          %v2844 = vunpack.c.l.b16 %v2780
          %v2845 = vunpack.c.l.b16 %v2781
          %v2846 = vunpack.c.l.b16 %v2782
          %v2847 = vunpack.c.l.b16 %v2783
          %v2848 = vunpack.c.l.b16 %v2784
          %v2849 = vunpack.c.l.b16 %v2785
          %v2850 = vunpack.c.l.b16 %v2786
          %v2851 = vunpack.c.l.b16 %v2787
          %v2852 = vunpack.c.l.b16 %v2788
          %v2853 = vunpack.c.l.b16 %v2789
          %v2854 = vunpack.c.l.b16 %v2790
          %v2855 = vunpack.c.l.b16 %v2791
          %v2856 = vunpack.c.l.b16 %v2792
          %v2857 = vunpack.c.l.b16 %v2793
          %v2858 = vunpack.c.l.b16 %v2794
          %v2859 = vunpack.c.l.b16 %v2795
          %v2860 = vunpack.c.l.b16 %v2796
          %v2861 = vunpack.c.l.b16 %v2797
          %v2862 = vunpack.c.l.b16 %v2798
          %v2863 = vunpack.c.l.b16 %v2799
          %v2864 = vunpack.c.l.b16 %v2800
          %v2865 = vpack.c.b16 %v2834, %v2833
          %v2866 = vpack.c.b16 %v2836, %v2835
          %v2867 = vpack.c.b16 %v2838, %v2837
          %v2868 = vpack.c.b16 %v2840, %v2839
          %v2869 = vpack.c.b16 %v2842, %v2841
          %v2870 = vpack.c.b16 %v2844, %v2843
          %v2871 = vpack.c.b16 %v2846, %v2845
          %v2872 = vpack.c.b16 %v2848, %v2847
          %v2873 = vpack.c.b16 %v2850, %v2849
          %v2874 = vpack.c.b16 %v2852, %v2851
          %v2875 = vpack.c.b16 %v2854, %v2853
          %v2876 = vpack.c.b16 %v2856, %v2855
          %v2877 = vpack.c.b16 %v2858, %v2857
          %v2878 = vpack.c.b16 %v2860, %v2859
          %v2879 = vpack.c.b16 %v2862, %v2861
          %v2880 = vpack.c.b16 %v2864, %v2863
          %2897 = vmatprep.subr.bf16.mxu0 0
          %2898 = vmatpush1.bf16.msra.mxu0 %v2865
          %2899 = vmatprep.subr.bf16.mxu0 0
          %2900 = vmatpush1.bf16.msra.mxu0 %v2866
          %2901 = vmatprep.subr.bf16.mxu0 0
          %2902 = vmatpush1.bf16.msra.mxu0 %v2867
          %2903 = vmatprep.subr.bf16.mxu0 0
          %2904 = vmatpush1.bf16.msra.mxu0 %v2868
          %2905 = vmatprep.subr.bf16.mxu0 0
          %2906 = vmatpush1.bf16.msra.mxu0 %v2869
          %2907 = vmatprep.subr.bf16.mxu0 0
          %2908 = vmatpush1.bf16.msra.mxu0 %v2870
          %2909 = vmatprep.subr.bf16.mxu0 0
          %2910 = vmatpush1.bf16.msra.mxu0 %v2871
          %2911 = vmatprep.subr.bf16.mxu0 0
          %2912 = vmatpush1.bf16.msra.mxu0 %v2872
          %2913 = vmatprep.subr.bf16.mxu0 0
          %2914 = vmatpush1.bf16.msra.mxu0 %v2873
          %2915 = vmatprep.subr.bf16.mxu0 0
          %2916 = vmatpush1.bf16.msra.mxu0 %v2874
          %2917 = vmatprep.subr.bf16.mxu0 0
          %2918 = vmatpush1.bf16.msra.mxu0 %v2875
          %2919 = vmatprep.subr.bf16.mxu0 0
          %2920 = vmatpush1.bf16.msra.mxu0 %v2876
          %2921 = vmatprep.subr.bf16.mxu0 0
          %2922 = vmatpush1.bf16.msra.mxu0 %v2877
          %2923 = vmatprep.subr.bf16.mxu0 0
          %2924 = vmatpush1.bf16.msra.mxu0 %v2878
          %2925 = vmatprep.subr.bf16.mxu0 0
          %2926 = vmatpush1.bf16.msra.mxu0 %v2879
          %2927 = vmatprep.subr.bf16.mxu0 0
          %2928 = vmatpush1.bf16.msra.mxu0 %v2880
          %2929 = vmatprep.mubr.bf16.mxu0 %v2640
          %2930 = vmatmul.mubr.bf16.gmra.mrb[0].mxu0 %v2639
          %v2931 = vpop.f32.mrb[0].mxu0
          %v2932 = vadd.f32 0.0, %v2931
          %v2933 = vpop.f32.mrb[0].mxu0
          %v2934 = vpop.f32.mrb[0].mxu0
          %v2935 = vadd.f32 0.0, %v2934
          %v2936 = vpop.f32.mrb[0].mxu0
          %2937 = vmatprep.mubr.bf16.mxu0 %v2642
          %2938 = vmatmul.mubr.bf16.gmra.mrb[0].mxu0 %v2641
          %v2939 = vpop.f32.mrb[0].mxu0
          %v2940 = vadd.f32 0.0, %v2939
          %v2941 = vpop.f32.mrb[0].mxu0
          %v2942 = vpop.f32.mrb[0].mxu0
          %v2943 = vadd.f32 0.0, %v2942
          %v2944 = vpop.f32.mrb[0].mxu0
          %2945 = vmatprep.mubr.bf16.mxu0 %v2644
          %2946 = vmatmul.mubr.bf16.gmra.mrb[0].mxu0 %v2643
          %v2947 = vpop.f32.mrb[0].mxu0
          %v2948 = vadd.f32 0.0, %v2947
          %v2949 = vpop.f32.mrb[0].mxu0
          %v2950 = vpop.f32.mrb[0].mxu0
          %v2951 = vadd.f32 0.0, %v2950
          %v2952 = vpop.f32.mrb[0].mxu0
          %2953 = vmatprep.mubr.bf16.mxu0 %v2646
          %2954 = vmatmul.mubr.bf16.gmra.mrb[0].mxu0 %v2645
          %v2955 = vpop.f32.mrb[0].mxu0
          %v2956 = vadd.f32 0.0, %v2955
          %v2957 = vpop.f32.mrb[0].mxu0
          %v2958 = vpop.f32.mrb[0].mxu0
          %v2959 = vadd.f32 0.0, %v2958
          %v2960 = vpop.f32.mrb[0].mxu0
          %2961 = vmatprep.mubr.bf16.mxu0 %v2648
          %2962 = vmatmul.mubr.bf16.gmra.mrb[0].mxu0 %v2647
          %v2963 = vpop.f32.mrb[0].mxu0
          %v2964 = vadd.f32 0.0, %v2963
          %v2965 = vpop.f32.mrb[0].mxu0
          %v2966 = vpop.f32.mrb[0].mxu0
          %v2967 = vadd.f32 0.0, %v2966
          %v2968 = vpop.f32.mrb[0].mxu0
          %2969 = vmatprep.mubr.bf16.mxu0 %v2650
          %2970 = vmatmul.mubr.bf16.gmra.mrb[0].mxu0 %v2649
          %v2971 = vpop.f32.mrb[0].mxu0
          %v2972 = vadd.f32 0.0, %v2971
          %v2973 = vpop.f32.mrb[0].mxu0
          %v2974 = vpop.f32.mrb[0].mxu0
          %v2975 = vadd.f32 0.0, %v2974
          %v2976 = vpop.f32.mrb[0].mxu0
          %2977 = vmatprep.mubr.bf16.mxu0 %v2652
          %2978 = vmatmul.mubr.bf16.gmra.mrb[0].mxu0 %v2651
          %v2979 = vpop.f32.mrb[0].mxu0
          %v2980 = vadd.f32 0.0, %v2979
          %v2981 = vpop.f32.mrb[0].mxu0
          %v2982 = vpop.f32.mrb[0].mxu0
          %v2983 = vadd.f32 0.0, %v2982
          %v2984 = vpop.f32.mrb[0].mxu0
          %2985 = vmatprep.mubr.bf16.mxu0 %v2654
          %2986 = vmatmul.mubr.bf16.gmra.mrb[0].mxu0 %v2653
          %v2987 = vpop.f32.mrb[0].mxu0
          %v2988 = vadd.f32 0.0, %v2987
          %v2989 = vpop.f32.mrb[0].mxu0
          %v2990 = vpop.f32.mrb[0].mxu0
          %v2991 = vadd.f32 0.0, %v2990
          %v2992 = vpop.f32.mrb[0].mxu0
          %2993 = vdwg.mxu0
          %v2994 = vadd.f32 %v2752, %v2932
          %v2995 = vadd.f32 %v2753, %v2935
          %v2996 = vadd.f32 %v2754, %v2940
          %v2997 = vadd.f32 %v2755, %v2943
          %v2998 = vadd.f32 %v2756, %v2948
          %v2999 = vadd.f32 %v2757, %v2951
          %v3000 = vadd.f32 %v2758, %v2956
          %v3001 = vadd.f32 %v2759, %v2959
          %v3002 = vadd.f32 %v2760, %v2964
          %v3003 = vadd.f32 %v2761, %v2967
          %v3004 = vadd.f32 %v2762, %v2972
          %v3005 = vadd.f32 %v2763, %v2975
          %v3006 = vadd.f32 %v2764, %v2980
          %v3007 = vadd.f32 %v2765, %v2983
          %v3008 = vadd.f32 %v2766, %v2988
          %v3009 = vadd.f32 %v2767, %v2991
          %3010 = vst [vmem:[%s2655] sm:$0xff] %v2994
          %3011 = vst [vmem:[%s2655 + $0x8] sm:$0xff] %v2995
          %3012 = vst [vmem:[%s2655 + $0x10] sm:$0xff] %v2996
          %3013 = vst [vmem:[%s2655 + $0x18] sm:$0xff] %v2997
          %3014 = vst [vmem:[%s2655 + $0x20] sm:$0xff] %v2998
          %3015 = vst [vmem:[%s2655 + $0x28] sm:$0xff] %v2999
          %3016 = vst [vmem:[%s2655 + $0x30] sm:$0xff] %v3000
          %3017 = vst [vmem:[%s2655 + $0x38] sm:$0xff] %v3001
          %3018 = vst [vmem:[%s2655 + $0x40] sm:$0xff] %v3002
          %3019 = vst [vmem:[%s2655 + $0x48] sm:$0xff] %v3003
          %3020 = vst [vmem:[%s2655 + $0x50] sm:$0xff] %v3004
          %3021 = vst [vmem:[%s2655 + $0x58] sm:$0xff] %v3005
          %3022 = vst [vmem:[%s2655 + $0x60] sm:$0xff] %v3006
          %3023 = vst [vmem:[%s2655 + $0x68] sm:$0xff] %v3007
          %3024 = vst [vmem:[%s2655 + $0x70] sm:$0xff] %v3008
          %3025 = vst [vmem:[%s2655 + $0x78] sm:$0xff] %v3009
          %3026 = vst.msk [vmem:[%s2334] sm:$0xff] %vm2079, %v2399
          %3027 = vst.msk [vmem:[%s2334 + $0x8] sm:$0xff] %vm2079, %v2400
          %3028 = vst.msk [vmem:[%s2334 + $0x10] sm:$0xff] %vm2079, %v2401
          %3029 = vst.msk [vmem:[%s2334 + $0x18] sm:$0xff] %vm2079, %v2402
          %3030 = vst.msk [vmem:[%s2334 + $0x20] sm:$0xff] %vm2079, %v2403
          %3031 = vst.msk [vmem:[%s2334 + $0x28] sm:$0xff] %vm2079, %v2404
          %3032 = vst.msk [vmem:[%s2334 + $0x30] sm:$0xff] %vm2079, %v2405
          %3033 = vst.msk [vmem:[%s2334 + $0x38] sm:$0xff] %vm2079, %v2406
          %3034 = vst.msk [vmem:[%s2334 + $0x40] sm:$0xff] %vm2079, %v2407
          %3035 = vst.msk [vmem:[%s2334 + $0x48] sm:$0xff] %vm2079, %v2408
          %3036 = vst.msk [vmem:[%s2334 + $0x50] sm:$0xff] %vm2079, %v2409
          %3037 = vst.msk [vmem:[%s2334 + $0x58] sm:$0xff] %vm2079, %v2410
          %3038 = vst.msk [vmem:[%s2334 + $0x60] sm:$0xff] %vm2079, %v2411
          %3039 = vst.msk [vmem:[%s2334 + $0x68] sm:$0xff] %vm2079, %v2412
          %3040 = vst.msk [vmem:[%s2334 + $0x70] sm:$0xff] %vm2079, %v2413
          %3041 = vst.msk [vmem:[%s2334 + $0x78] sm:$0xff] %vm2079, %v2414
        $region192: #{tpu_custom_call.1} parent=167 // pred_fallthru
          _
        %p3042 = scmp.eq.s32.totalorder %s31, 1
        // Predicated region
        $region193: #{tpu_custom_call.1} parent=167 // pred_check
          %p3043 = pneg %p3042
        $region194: #{tpu_custom_call.1} parent=167 // pred_check_branch
          %3045 = sbr.rel (%p3043) target = $region196
        $region195: #{tpu_custom_call.1} parent=167 // pred_region
          %v3046 = vld [vmem:[#allocation3] sm:$0xff]
          %v3047 = vld [vmem:[#allocation3 + $0x8] sm:$0xff]
          %v3048 = vld [vmem:[#allocation3 + $0x10] sm:$0xff]
          %v3049 = vld [vmem:[#allocation3 + $0x18] sm:$0xff]
          %v3050 = vld [vmem:[#allocation3 + $0x20] sm:$0xff]
          %v3051 = vld [vmem:[#allocation3 + $0x28] sm:$0xff]
          %v3052 = vld [vmem:[#allocation3 + $0x30] sm:$0xff]
          %v3053 = vld [vmem:[#allocation3 + $0x38] sm:$0xff]
          %v3054 = vld [vmem:[#allocation3 + $0x40] sm:$0xff]
          %v3055 = vld [vmem:[#allocation3 + $0x48] sm:$0xff]
          %v3056 = vld [vmem:[#allocation3 + $0x50] sm:$0xff]
          %v3057 = vld [vmem:[#allocation3 + $0x58] sm:$0xff]
          %v3058 = vld [vmem:[#allocation3 + $0x60] sm:$0xff]
          %v3059 = vld [vmem:[#allocation3 + $0x68] sm:$0xff]
          %v3060 = vld [vmem:[#allocation3 + $0x70] sm:$0xff]
          %v3061 = vld [vmem:[#allocation3 + $0x78] sm:$0xff]
          %v3062 = vld [vmem:[#allocation2] sm:$0xff]
          %v3063 = vld [vmem:[#allocation2 + $0x8] sm:$0xff]
          %v3064 = vld [vmem:[#allocation2 + $0x10] sm:$0xff]
          %v3065 = vld [vmem:[#allocation2 + $0x18] sm:$0xff]
          %v3066 = vld [vmem:[#allocation2 + $0x20] sm:$0xff]
          %v3067 = vld [vmem:[#allocation2 + $0x28] sm:$0xff]
          %v3068 = vld [vmem:[#allocation2 + $0x30] sm:$0xff]
          %v3069 = vld [vmem:[#allocation2 + $0x38] sm:$0xff]
          %v3070 = vld [vmem:[#allocation2 + $0x40] sm:$0xff]
          %v3071 = vld [vmem:[#allocation2 + $0x48] sm:$0xff]
          %v3072 = vld [vmem:[#allocation2 + $0x50] sm:$0xff]
          %v3073 = vld [vmem:[#allocation2 + $0x58] sm:$0xff]
          %v3074 = vld [vmem:[#allocation2 + $0x60] sm:$0xff]
          %v3075 = vld [vmem:[#allocation2 + $0x68] sm:$0xff]
          %v3076 = vld [vmem:[#allocation2 + $0x70] sm:$0xff]
          %v3077 = vld [vmem:[#allocation2 + $0x78] sm:$0xff]
          %vm3078 = vcmp.gt.f32.partialorder %v3062, -1e+29
          %vm3079 = vcmp.gt.f32.partialorder %v3063, -1e+29
          %vm3080 = vcmp.gt.f32.partialorder %v3064, -1e+29
          %vm3081 = vcmp.gt.f32.partialorder %v3065, -1e+29
          %vm3082 = vcmp.gt.f32.partialorder %v3066, -1e+29
          %vm3083 = vcmp.gt.f32.partialorder %v3067, -1e+29
          %vm3084 = vcmp.gt.f32.partialorder %v3068, -1e+29
          %vm3085 = vcmp.gt.f32.partialorder %v3069, -1e+29
          %vm3086 = vcmp.gt.f32.partialorder %v3070, -1e+29
          %vm3087 = vcmp.gt.f32.partialorder %v3071, -1e+29
          %vm3088 = vcmp.gt.f32.partialorder %v3072, -1e+29
          %vm3089 = vcmp.gt.f32.partialorder %v3073, -1e+29
          %vm3090 = vcmp.gt.f32.partialorder %v3074, -1e+29
          %vm3091 = vcmp.gt.f32.partialorder %v3075, -1e+29
          %vm3092 = vcmp.gt.f32.partialorder %v3076, -1e+29
          %vm3093 = vcmp.gt.f32.partialorder %v3077, -1e+29
          %v3094 = vmax.f32 %v3046, 1e-20
          %v3095 = vmax.f32 %v3047, 1e-20
          %v3096 = vmax.f32 %v3048, 1e-20
          %v3097 = vmax.f32 %v3049, 1e-20
          %v3098 = vmax.f32 %v3050, 1e-20
          %v3099 = vmax.f32 %v3051, 1e-20
          %v3100 = vmax.f32 %v3052, 1e-20
          %v3101 = vmax.f32 %v3053, 1e-20
          %v3102 = vmax.f32 %v3054, 1e-20
          %v3103 = vmax.f32 %v3055, 1e-20
          %v3104 = vmax.f32 %v3056, 1e-20
          %v3105 = vmax.f32 %v3057, 1e-20
          %v3106 = vmax.f32 %v3058, 1e-20
          %v3107 = vmax.f32 %v3059, 1e-20
          %v3108 = vmax.f32 %v3060, 1e-20
          %v3109 = vmax.f32 %v3061, 1e-20
          %v3110 = vrcp.pop %v3094
          %v3111 = vrcp.pop %v3095
          %v3112 = vrcp.pop %v3096
          %v3113 = vrcp.pop %v3097
          %v3114 = vrcp.pop %v3098
          %v3115 = vrcp.pop %v3099
          %v3116 = vrcp.pop %v3100
          %v3117 = vrcp.pop %v3101
          %v3118 = vrcp.pop %v3102
          %v3119 = vrcp.pop %v3103
          %v3120 = vrcp.pop %v3104
          %v3121 = vrcp.pop %v3105
          %v3122 = vrcp.pop %v3106
          %v3123 = vrcp.pop %v3107
          %v3124 = vrcp.pop %v3108
          %v3125 = vrcp.pop %v3109
          %3142 = vrot.lane.b32.xlu0 %v3110, 64
          %v3143 = vpop.permute.xlu0 %3142
          %3144 = vrot.lane.b32.xlu0 %v3111, 64
          %v3145 = vpop.permute.xlu0 %3144
          %3146 = vrot.lane.b32.xlu0 %v3112, 64
          %v3147 = vpop.permute.xlu0 %3146
          %3148 = vrot.lane.b32.xlu0 %v3113, 64
          %v3149 = vpop.permute.xlu0 %3148
          %3150 = vrot.lane.b32.xlu0 %v3114, 64
          %v3151 = vpop.permute.xlu0 %3150
          %3152 = vrot.lane.b32.xlu0 %v3115, 64
          %v3153 = vpop.permute.xlu0 %3152
          %3154 = vrot.lane.b32.xlu0 %v3116, 64
          %v3155 = vpop.permute.xlu0 %3154
          %3156 = vrot.lane.b32.xlu0 %v3117, 64
          %v3157 = vpop.permute.xlu0 %3156
          %3158 = vrot.lane.b32.xlu0 %v3118, 64
          %v3159 = vpop.permute.xlu0 %3158
          %3160 = vrot.lane.b32.xlu0 %v3119, 64
          %v3161 = vpop.permute.xlu0 %3160
          %3162 = vrot.lane.b32.xlu0 %v3120, 64
          %v3163 = vpop.permute.xlu0 %3162
          %3164 = vrot.lane.b32.xlu0 %v3121, 64
          %v3165 = vpop.permute.xlu0 %3164
          %3166 = vrot.lane.b32.xlu0 %v3122, 64
          %v3167 = vpop.permute.xlu0 %3166
          %3168 = vrot.lane.b32.xlu0 %v3123, 64
          %v3169 = vpop.permute.xlu0 %3168
          %3170 = vrot.lane.b32.xlu0 %v3124, 64
          %v3171 = vpop.permute.xlu0 %3170
          %3172 = vrot.lane.b32.xlu0 %v3125, 64
          %v3173 = vpop.permute.xlu0 %3172
          %v3190 = vsel %vm3078, %v3143, 0.0
          %v3191 = vsel %vm3079, %v3145, 0.0
          %v3192 = vsel %vm3080, %v3147, 0.0
          %v3193 = vsel %vm3081, %v3149, 0.0
          %v3194 = vsel %vm3082, %v3151, 0.0
          %v3195 = vsel %vm3083, %v3153, 0.0
          %v3196 = vsel %vm3084, %v3155, 0.0
          %v3197 = vsel %vm3085, %v3157, 0.0
          %v3198 = vsel %vm3086, %v3159, 0.0
          %v3199 = vsel %vm3087, %v3161, 0.0
          %v3200 = vsel %vm3088, %v3163, 0.0
          %v3201 = vsel %vm3089, %v3165, 0.0
          %v3202 = vsel %vm3090, %v3167, 0.0
          %v3203 = vsel %vm3091, %v3169, 0.0
          %v3204 = vsel %vm3092, %v3171, 0.0
          %v3205 = vsel %vm3093, %v3173, 0.0
          %3207 = vset.pattern.permute.xlu0 0
          %3208 = vperm.xlu0 %3207, %v3190
          %v3209 = vpop.permute.xlu0 %3208
          %3212 = vset.pattern.permute.xlu0 0
          %3213 = vperm.xlu0 %3212, %v3191
          %v3214 = vpop.permute.xlu0 %3213
          %3217 = vset.pattern.permute.xlu0 0
          %3218 = vperm.xlu0 %3217, %v3192
          %v3219 = vpop.permute.xlu0 %3218
          %3222 = vset.pattern.permute.xlu0 0
          %3223 = vperm.xlu0 %3222, %v3193
          %v3224 = vpop.permute.xlu0 %3223
          %3227 = vset.pattern.permute.xlu0 0
          %3228 = vperm.xlu0 %3227, %v3194
          %v3229 = vpop.permute.xlu0 %3228
          %3232 = vset.pattern.permute.xlu0 0
          %3233 = vperm.xlu0 %3232, %v3195
          %v3234 = vpop.permute.xlu0 %3233
          %3237 = vset.pattern.permute.xlu0 0
          %3238 = vperm.xlu0 %3237, %v3196
          %v3239 = vpop.permute.xlu0 %3238
          %3242 = vset.pattern.permute.xlu0 0
          %3243 = vperm.xlu0 %3242, %v3197
          %v3244 = vpop.permute.xlu0 %3243
          %3247 = vset.pattern.permute.xlu0 0
          %3248 = vperm.xlu0 %3247, %v3198
          %v3249 = vpop.permute.xlu0 %3248
          %3252 = vset.pattern.permute.xlu0 0
          %3253 = vperm.xlu0 %3252, %v3199
          %v3254 = vpop.permute.xlu0 %3253
          %3257 = vset.pattern.permute.xlu0 0
          %3258 = vperm.xlu0 %3257, %v3200
          %v3259 = vpop.permute.xlu0 %3258
          %3262 = vset.pattern.permute.xlu0 0
          %3263 = vperm.xlu0 %3262, %v3201
          %v3264 = vpop.permute.xlu0 %3263
          %3267 = vset.pattern.permute.xlu0 0
          %3268 = vperm.xlu0 %3267, %v3202
          %v3269 = vpop.permute.xlu0 %3268
          %3272 = vset.pattern.permute.xlu0 0
          %3273 = vperm.xlu0 %3272, %v3203
          %v3274 = vpop.permute.xlu0 %3273
          %3277 = vset.pattern.permute.xlu0 0
          %3278 = vperm.xlu0 %3277, %v3204
          %v3279 = vpop.permute.xlu0 %3278
          %3282 = vset.pattern.permute.xlu0 0
          %3283 = vperm.xlu0 %3282, %v3205
          %v3284 = vpop.permute.xlu0 %3283
          %v3286 = vmul.f32 %v3046, %v3209
          %v3287 = vmul.f32 %v3047, %v3214
          %v3288 = vmul.f32 %v3048, %v3219
          %v3289 = vmul.f32 %v3049, %v3224
          %v3290 = vmul.f32 %v3050, %v3229
          %v3291 = vmul.f32 %v3051, %v3234
          %v3292 = vmul.f32 %v3052, %v3239
          %v3293 = vmul.f32 %v3053, %v3244
          %v3294 = vmul.f32 %v3054, %v3249
          %v3295 = vmul.f32 %v3055, %v3254
          %v3296 = vmul.f32 %v3056, %v3259
          %v3297 = vmul.f32 %v3057, %v3264
          %v3298 = vmul.f32 %v3058, %v3269
          %v3299 = vmul.f32 %v3059, %v3274
          %v3300 = vmul.f32 %v3060, %v3279
          %v3301 = vmul.f32 %v3061, %v3284
          %s3302 = scalar_lea.vmem [#allocation3], 128
          %v3303 = vld [vmem:[%s3302] sm:$0xff]
          %v3304 = vld [vmem:[%s3302 + $0x8] sm:$0xff]
          %v3305 = vld [vmem:[%s3302 + $0x10] sm:$0xff]
          %v3306 = vld [vmem:[%s3302 + $0x18] sm:$0xff]
          %v3307 = vld [vmem:[%s3302 + $0x20] sm:$0xff]
          %v3308 = vld [vmem:[%s3302 + $0x28] sm:$0xff]
          %v3309 = vld [vmem:[%s3302 + $0x30] sm:$0xff]
          %v3310 = vld [vmem:[%s3302 + $0x38] sm:$0xff]
          %v3311 = vld [vmem:[%s3302 + $0x40] sm:$0xff]
          %v3312 = vld [vmem:[%s3302 + $0x48] sm:$0xff]
          %v3313 = vld [vmem:[%s3302 + $0x50] sm:$0xff]
          %v3314 = vld [vmem:[%s3302 + $0x58] sm:$0xff]
          %v3315 = vld [vmem:[%s3302 + $0x60] sm:$0xff]
          %v3316 = vld [vmem:[%s3302 + $0x68] sm:$0xff]
          %v3317 = vld [vmem:[%s3302 + $0x70] sm:$0xff]
          %v3318 = vld [vmem:[%s3302 + $0x78] sm:$0xff]
          %s3319 = scalar_lea.vmem [#allocation2], 128
          %v3320 = vld [vmem:[%s3319] sm:$0xff]
          %v3321 = vld [vmem:[%s3319 + $0x8] sm:$0xff]
          %v3322 = vld [vmem:[%s3319 + $0x10] sm:$0xff]
          %v3323 = vld [vmem:[%s3319 + $0x18] sm:$0xff]
          %v3324 = vld [vmem:[%s3319 + $0x20] sm:$0xff]
          %v3325 = vld [vmem:[%s3319 + $0x28] sm:$0xff]
          %v3326 = vld [vmem:[%s3319 + $0x30] sm:$0xff]
          %v3327 = vld [vmem:[%s3319 + $0x38] sm:$0xff]
          %v3328 = vld [vmem:[%s3319 + $0x40] sm:$0xff]
          %v3329 = vld [vmem:[%s3319 + $0x48] sm:$0xff]
          %v3330 = vld [vmem:[%s3319 + $0x50] sm:$0xff]
          %v3331 = vld [vmem:[%s3319 + $0x58] sm:$0xff]
          %v3332 = vld [vmem:[%s3319 + $0x60] sm:$0xff]
          %v3333 = vld [vmem:[%s3319 + $0x68] sm:$0xff]
          %v3334 = vld [vmem:[%s3319 + $0x70] sm:$0xff]
          %v3335 = vld [vmem:[%s3319 + $0x78] sm:$0xff]
          %vm3336 = vcmp.gt.f32.partialorder %v3320, -1e+29
          %vm3337 = vcmp.gt.f32.partialorder %v3321, -1e+29
          %vm3338 = vcmp.gt.f32.partialorder %v3322, -1e+29
          %vm3339 = vcmp.gt.f32.partialorder %v3323, -1e+29
          %vm3340 = vcmp.gt.f32.partialorder %v3324, -1e+29
          %vm3341 = vcmp.gt.f32.partialorder %v3325, -1e+29
          %vm3342 = vcmp.gt.f32.partialorder %v3326, -1e+29
          %vm3343 = vcmp.gt.f32.partialorder %v3327, -1e+29
          %vm3344 = vcmp.gt.f32.partialorder %v3328, -1e+29
          %vm3345 = vcmp.gt.f32.partialorder %v3329, -1e+29
          %vm3346 = vcmp.gt.f32.partialorder %v3330, -1e+29
          %vm3347 = vcmp.gt.f32.partialorder %v3331, -1e+29
          %vm3348 = vcmp.gt.f32.partialorder %v3332, -1e+29
          %vm3349 = vcmp.gt.f32.partialorder %v3333, -1e+29
          %vm3350 = vcmp.gt.f32.partialorder %v3334, -1e+29
          %vm3351 = vcmp.gt.f32.partialorder %v3335, -1e+29
          %v3352 = vmax.f32 %v3303, 1e-20
          %v3353 = vmax.f32 %v3304, 1e-20
          %v3354 = vmax.f32 %v3305, 1e-20
          %v3355 = vmax.f32 %v3306, 1e-20
          %v3356 = vmax.f32 %v3307, 1e-20
          %v3357 = vmax.f32 %v3308, 1e-20
          %v3358 = vmax.f32 %v3309, 1e-20
          %v3359 = vmax.f32 %v3310, 1e-20
          %v3360 = vmax.f32 %v3311, 1e-20
          %v3361 = vmax.f32 %v3312, 1e-20
          %v3362 = vmax.f32 %v3313, 1e-20
          %v3363 = vmax.f32 %v3314, 1e-20
          %v3364 = vmax.f32 %v3315, 1e-20
          %v3365 = vmax.f32 %v3316, 1e-20
          %v3366 = vmax.f32 %v3317, 1e-20
          %v3367 = vmax.f32 %v3318, 1e-20
          %v3368 = vrcp.pop %v3352
          %v3369 = vrcp.pop %v3353
          %v3370 = vrcp.pop %v3354
          %v3371 = vrcp.pop %v3355
          %v3372 = vrcp.pop %v3356
          %v3373 = vrcp.pop %v3357
          %v3374 = vrcp.pop %v3358
          %v3375 = vrcp.pop %v3359
          %v3376 = vrcp.pop %v3360
          %v3377 = vrcp.pop %v3361
          %v3378 = vrcp.pop %v3362
          %v3379 = vrcp.pop %v3363
          %v3380 = vrcp.pop %v3364
          %v3381 = vrcp.pop %v3365
          %v3382 = vrcp.pop %v3366
          %v3383 = vrcp.pop %v3367
          %3400 = vrot.lane.b32.xlu0 %v3368, 64
          %v3401 = vpop.permute.xlu0 %3400
          %3402 = vrot.lane.b32.xlu0 %v3369, 64
          %v3403 = vpop.permute.xlu0 %3402
          %3404 = vrot.lane.b32.xlu0 %v3370, 64
          %v3405 = vpop.permute.xlu0 %3404
          %3406 = vrot.lane.b32.xlu0 %v3371, 64
          %v3407 = vpop.permute.xlu0 %3406
          %3408 = vrot.lane.b32.xlu0 %v3372, 64
          %v3409 = vpop.permute.xlu0 %3408
          %3410 = vrot.lane.b32.xlu0 %v3373, 64
          %v3411 = vpop.permute.xlu0 %3410
          %3412 = vrot.lane.b32.xlu0 %v3374, 64
          %v3413 = vpop.permute.xlu0 %3412
          %3414 = vrot.lane.b32.xlu0 %v3375, 64
          %v3415 = vpop.permute.xlu0 %3414
          %3416 = vrot.lane.b32.xlu0 %v3376, 64
          %v3417 = vpop.permute.xlu0 %3416
          %3418 = vrot.lane.b32.xlu0 %v3377, 64
          %v3419 = vpop.permute.xlu0 %3418
          %3420 = vrot.lane.b32.xlu0 %v3378, 64
          %v3421 = vpop.permute.xlu0 %3420
          %3422 = vrot.lane.b32.xlu0 %v3379, 64
          %v3423 = vpop.permute.xlu0 %3422
          %3424 = vrot.lane.b32.xlu0 %v3380, 64
          %v3425 = vpop.permute.xlu0 %3424
          %3426 = vrot.lane.b32.xlu0 %v3381, 64
          %v3427 = vpop.permute.xlu0 %3426
          %3428 = vrot.lane.b32.xlu0 %v3382, 64
          %v3429 = vpop.permute.xlu0 %3428
          %3430 = vrot.lane.b32.xlu0 %v3383, 64
          %v3431 = vpop.permute.xlu0 %3430
          %v3448 = vsel %vm3336, %v3401, 0.0
          %v3449 = vsel %vm3337, %v3403, 0.0
          %v3450 = vsel %vm3338, %v3405, 0.0
          %v3451 = vsel %vm3339, %v3407, 0.0
          %v3452 = vsel %vm3340, %v3409, 0.0
          %v3453 = vsel %vm3341, %v3411, 0.0
          %v3454 = vsel %vm3342, %v3413, 0.0
          %v3455 = vsel %vm3343, %v3415, 0.0
          %v3456 = vsel %vm3344, %v3417, 0.0
          %v3457 = vsel %vm3345, %v3419, 0.0
          %v3458 = vsel %vm3346, %v3421, 0.0
          %v3459 = vsel %vm3347, %v3423, 0.0
          %v3460 = vsel %vm3348, %v3425, 0.0
          %v3461 = vsel %vm3349, %v3427, 0.0
          %v3462 = vsel %vm3350, %v3429, 0.0
          %v3463 = vsel %vm3351, %v3431, 0.0
          %3465 = vset.pattern.permute.xlu0 0
          %3466 = vperm.xlu0 %3465, %v3448
          %v3467 = vpop.permute.xlu0 %3466
          %3470 = vset.pattern.permute.xlu0 0
          %3471 = vperm.xlu0 %3470, %v3449
          %v3472 = vpop.permute.xlu0 %3471
          %3475 = vset.pattern.permute.xlu0 0
          %3476 = vperm.xlu0 %3475, %v3450
          %v3477 = vpop.permute.xlu0 %3476
          %3480 = vset.pattern.permute.xlu0 0
          %3481 = vperm.xlu0 %3480, %v3451
          %v3482 = vpop.permute.xlu0 %3481
          %3485 = vset.pattern.permute.xlu0 0
          %3486 = vperm.xlu0 %3485, %v3452
          %v3487 = vpop.permute.xlu0 %3486
          %3490 = vset.pattern.permute.xlu0 0
          %3491 = vperm.xlu0 %3490, %v3453
          %v3492 = vpop.permute.xlu0 %3491
          %3495 = vset.pattern.permute.xlu0 0
          %3496 = vperm.xlu0 %3495, %v3454
          %v3497 = vpop.permute.xlu0 %3496
          %3500 = vset.pattern.permute.xlu0 0
          %3501 = vperm.xlu0 %3500, %v3455
          %v3502 = vpop.permute.xlu0 %3501
          %3505 = vset.pattern.permute.xlu0 0
          %3506 = vperm.xlu0 %3505, %v3456
          %v3507 = vpop.permute.xlu0 %3506
          %3510 = vset.pattern.permute.xlu0 0
          %3511 = vperm.xlu0 %3510, %v3457
          %v3512 = vpop.permute.xlu0 %3511
          %3515 = vset.pattern.permute.xlu0 0
          %3516 = vperm.xlu0 %3515, %v3458
          %v3517 = vpop.permute.xlu0 %3516
          %3520 = vset.pattern.permute.xlu0 0
          %3521 = vperm.xlu0 %3520, %v3459
          %v3522 = vpop.permute.xlu0 %3521
          %3525 = vset.pattern.permute.xlu0 0
          %3526 = vperm.xlu0 %3525, %v3460
          %v3527 = vpop.permute.xlu0 %3526
          %3530 = vset.pattern.permute.xlu0 0
          %3531 = vperm.xlu0 %3530, %v3461
          %v3532 = vpop.permute.xlu0 %3531
          %3535 = vset.pattern.permute.xlu0 0
          %3536 = vperm.xlu0 %3535, %v3462
          %v3537 = vpop.permute.xlu0 %3536
          %3540 = vset.pattern.permute.xlu0 0
          %3541 = vperm.xlu0 %3540, %v3463
          %v3542 = vpop.permute.xlu0 %3541
          %v3544 = vmul.f32 %v3303, %v3467
          %v3545 = vmul.f32 %v3304, %v3472
          %v3546 = vmul.f32 %v3305, %v3477
          %v3547 = vmul.f32 %v3306, %v3482
          %v3548 = vmul.f32 %v3307, %v3487
          %v3549 = vmul.f32 %v3308, %v3492
          %v3550 = vmul.f32 %v3309, %v3497
          %v3551 = vmul.f32 %v3310, %v3502
          %v3552 = vmul.f32 %v3311, %v3507
          %v3553 = vmul.f32 %v3312, %v3512
          %v3554 = vmul.f32 %v3313, %v3517
          %v3555 = vmul.f32 %v3314, %v3522
          %v3556 = vmul.f32 %v3315, %v3527
          %v3557 = vmul.f32 %v3316, %v3532
          %v3558 = vmul.f32 %v3317, %v3537
          %v3559 = vmul.f32 %v3318, %v3542
          %3576 = vrot.lane.b32.xlu0 %v3544, 64
          %v3577 = vpop.permute.xlu0 %3576
          %3578 = vrot.lane.b32.xlu0 %v3545, 64
          %v3579 = vpop.permute.xlu0 %3578
          %3580 = vrot.lane.b32.xlu0 %v3546, 64
          %v3581 = vpop.permute.xlu0 %3580
          %3582 = vrot.lane.b32.xlu0 %v3547, 64
          %v3583 = vpop.permute.xlu0 %3582
          %3584 = vrot.lane.b32.xlu0 %v3548, 64
          %v3585 = vpop.permute.xlu0 %3584
          %3586 = vrot.lane.b32.xlu0 %v3549, 64
          %v3587 = vpop.permute.xlu0 %3586
          %3588 = vrot.lane.b32.xlu0 %v3550, 64
          %v3589 = vpop.permute.xlu0 %3588
          %3590 = vrot.lane.b32.xlu0 %v3551, 64
          %v3591 = vpop.permute.xlu0 %3590
          %3592 = vrot.lane.b32.xlu0 %v3552, 64
          %v3593 = vpop.permute.xlu0 %3592
          %3594 = vrot.lane.b32.xlu0 %v3553, 64
          %v3595 = vpop.permute.xlu0 %3594
          %3596 = vrot.lane.b32.xlu0 %v3554, 64
          %v3597 = vpop.permute.xlu0 %3596
          %3598 = vrot.lane.b32.xlu0 %v3555, 64
          %v3599 = vpop.permute.xlu0 %3598
          %3600 = vrot.lane.b32.xlu0 %v3556, 64
          %v3601 = vpop.permute.xlu0 %3600
          %3602 = vrot.lane.b32.xlu0 %v3557, 64
          %v3603 = vpop.permute.xlu0 %3602
          %3604 = vrot.lane.b32.xlu0 %v3558, 64
          %v3605 = vpop.permute.xlu0 %3604
          %3606 = vrot.lane.b32.xlu0 %v3559, 64
          %v3607 = vpop.permute.xlu0 %3606
          %vm3624 = vcmask 523264
          %v3625 = vsel %vm3624, %v3286, %v3577
          %v3626 = vsel %vm3624, %v3287, %v3579
          %v3627 = vsel %vm3624, %v3288, %v3581
          %v3628 = vsel %vm3624, %v3289, %v3583
          %v3629 = vsel %vm3624, %v3290, %v3585
          %v3630 = vsel %vm3624, %v3291, %v3587
          %v3631 = vsel %vm3624, %v3292, %v3589
          %v3632 = vsel %vm3624, %v3293, %v3591
          %v3633 = vsel %vm3624, %v3294, %v3593
          %v3634 = vsel %vm3624, %v3295, %v3595
          %v3635 = vsel %vm3624, %v3296, %v3597
          %v3636 = vsel %vm3624, %v3297, %v3599
          %v3637 = vsel %vm3624, %v3298, %v3601
          %v3638 = vsel %vm3624, %v3299, %v3603
          %v3639 = vsel %vm3624, %v3300, %v3605
          %v3640 = vsel %vm3624, %v3301, %v3607
          %v3641 = vld [vmem:[%s5] sm:$0x1]
          %v3643 = vlaneseq
          %v3644 = vshrl.u32 %v3643, 7
          %v3645 = vsub.s32 0, %v3644
          %v3646 = vrot.slane %v3641, %v3645
          %v3648 = vadd.f32 %v3625, %v3646
          %v3649 = vadd.f32 %v3626, %v3646
          %v3650 = vadd.f32 %v3627, %v3646
          %v3651 = vadd.f32 %v3628, %v3646
          %v3652 = vadd.f32 %v3629, %v3646
          %v3653 = vadd.f32 %v3630, %v3646
          %v3654 = vadd.f32 %v3631, %v3646
          %v3655 = vadd.f32 %v3632, %v3646
          %v3656 = vadd.f32 %v3633, %v3646
          %v3657 = vadd.f32 %v3634, %v3646
          %v3658 = vadd.f32 %v3635, %v3646
          %v3659 = vadd.f32 %v3636, %v3646
          %v3660 = vadd.f32 %v3637, %v3646
          %v3661 = vadd.f32 %v3638, %v3646
          %v3662 = vadd.f32 %v3639, %v3646
          %v3663 = vadd.f32 %v3640, %v3646
          %3664 = vadd.xlane.f32.xlu0 %v3648
          %v3665 = vpop.xlane.xlu0 %3664
          %3666 = vadd.xlane.f32.xlu0 %v3649
          %v3667 = vpop.xlane.xlu0 %3666
          %3668 = vadd.xlane.f32.xlu0 %v3650
          %v3669 = vpop.xlane.xlu0 %3668
          %3670 = vadd.xlane.f32.xlu0 %v3651
          %v3671 = vpop.xlane.xlu0 %3670
          %3672 = vadd.xlane.f32.xlu0 %v3652
          %v3673 = vpop.xlane.xlu0 %3672
          %3674 = vadd.xlane.f32.xlu0 %v3653
          %v3675 = vpop.xlane.xlu0 %3674
          %3676 = vadd.xlane.f32.xlu0 %v3654
          %v3677 = vpop.xlane.xlu0 %3676
          %3678 = vadd.xlane.f32.xlu0 %v3655
          %v3679 = vpop.xlane.xlu0 %3678
          %3680 = vadd.xlane.f32.xlu0 %v3656
          %v3681 = vpop.xlane.xlu0 %3680
          %3682 = vadd.xlane.f32.xlu0 %v3657
          %v3683 = vpop.xlane.xlu0 %3682
          %3684 = vadd.xlane.f32.xlu0 %v3658
          %v3685 = vpop.xlane.xlu0 %3684
          %3686 = vadd.xlane.f32.xlu0 %v3659
          %v3687 = vpop.xlane.xlu0 %3686
          %3688 = vadd.xlane.f32.xlu0 %v3660
          %v3689 = vpop.xlane.xlu0 %3688
          %3690 = vadd.xlane.f32.xlu0 %v3661
          %v3691 = vpop.xlane.xlu0 %3690
          %3692 = vadd.xlane.f32.xlu0 %v3662
          %v3693 = vpop.xlane.xlu0 %3692
          %3694 = vadd.xlane.f32.xlu0 %v3663
          %v3695 = vpop.xlane.xlu0 %3694
          %v3696 = vrcp.pop 128.0
          %v3697 = vmul.f32 %v3665, %v3696
          %v3698 = vmul.f32 %v3667, %v3696
          %v3699 = vmul.f32 %v3669, %v3696
          %v3700 = vmul.f32 %v3671, %v3696
          %v3701 = vmul.f32 %v3673, %v3696
          %v3702 = vmul.f32 %v3675, %v3696
          %v3703 = vmul.f32 %v3677, %v3696
          %v3704 = vmul.f32 %v3679, %v3696
          %v3705 = vmul.f32 %v3681, %v3696
          %v3706 = vmul.f32 %v3683, %v3696
          %v3707 = vmul.f32 %v3685, %v3696
          %v3708 = vmul.f32 %v3687, %v3696
          %v3709 = vmul.f32 %v3689, %v3696
          %v3710 = vmul.f32 %v3691, %v3696
          %v3711 = vmul.f32 %v3693, %v3696
          %v3712 = vmul.f32 %v3695, %v3696
          %v3713 = vsub.f32 %v3648, %v3697
          %v3714 = vsub.f32 %v3649, %v3698
          %v3715 = vsub.f32 %v3650, %v3699
          %v3716 = vsub.f32 %v3651, %v3700
          %v3717 = vsub.f32 %v3652, %v3701
          %v3718 = vsub.f32 %v3653, %v3702
          %v3719 = vsub.f32 %v3654, %v3703
          %v3720 = vsub.f32 %v3655, %v3704
          %v3721 = vsub.f32 %v3656, %v3705
          %v3722 = vsub.f32 %v3657, %v3706
          %v3723 = vsub.f32 %v3658, %v3707
          %v3724 = vsub.f32 %v3659, %v3708
          %v3725 = vsub.f32 %v3660, %v3709
          %v3726 = vsub.f32 %v3661, %v3710
          %v3727 = vsub.f32 %v3662, %v3711
          %v3728 = vsub.f32 %v3663, %v3712
          %v3729 = vmul.f32 %v3713, %v3713
          %v3730 = vmul.f32 %v3714, %v3714
          %v3731 = vmul.f32 %v3715, %v3715
          %v3732 = vmul.f32 %v3716, %v3716
          %v3733 = vmul.f32 %v3717, %v3717
          %v3734 = vmul.f32 %v3718, %v3718
          %v3735 = vmul.f32 %v3719, %v3719
          %v3736 = vmul.f32 %v3720, %v3720
          %v3737 = vmul.f32 %v3721, %v3721
          %v3738 = vmul.f32 %v3722, %v3722
          %v3739 = vmul.f32 %v3723, %v3723
          %v3740 = vmul.f32 %v3724, %v3724
          %v3741 = vmul.f32 %v3725, %v3725
          %v3742 = vmul.f32 %v3726, %v3726
          %v3743 = vmul.f32 %v3727, %v3727
          %v3744 = vmul.f32 %v3728, %v3728
          %3745 = vadd.xlane.f32.xlu0 %v3729
          %v3746 = vpop.xlane.xlu0 %3745
          %3747 = vadd.xlane.f32.xlu0 %v3730
          %v3748 = vpop.xlane.xlu0 %3747
          %3749 = vadd.xlane.f32.xlu0 %v3731
          %v3750 = vpop.xlane.xlu0 %3749
          %3751 = vadd.xlane.f32.xlu0 %v3732
          %v3752 = vpop.xlane.xlu0 %3751
          %3753 = vadd.xlane.f32.xlu0 %v3733
          %v3754 = vpop.xlane.xlu0 %3753
          %3755 = vadd.xlane.f32.xlu0 %v3734
          %v3756 = vpop.xlane.xlu0 %3755
          %3757 = vadd.xlane.f32.xlu0 %v3735
          %v3758 = vpop.xlane.xlu0 %3757
          %3759 = vadd.xlane.f32.xlu0 %v3736
          %v3760 = vpop.xlane.xlu0 %3759
          %3761 = vadd.xlane.f32.xlu0 %v3737
          %v3762 = vpop.xlane.xlu0 %3761
          %3763 = vadd.xlane.f32.xlu0 %v3738
          %v3764 = vpop.xlane.xlu0 %3763
          %3765 = vadd.xlane.f32.xlu0 %v3739
          %v3766 = vpop.xlane.xlu0 %3765
          %3767 = vadd.xlane.f32.xlu0 %v3740
          %v3768 = vpop.xlane.xlu0 %3767
          %3769 = vadd.xlane.f32.xlu0 %v3741
          %v3770 = vpop.xlane.xlu0 %3769
          %3771 = vadd.xlane.f32.xlu0 %v3742
          %v3772 = vpop.xlane.xlu0 %3771
          %3773 = vadd.xlane.f32.xlu0 %v3743
          %v3774 = vpop.xlane.xlu0 %3773
          %3775 = vadd.xlane.f32.xlu0 %v3744
          %v3776 = vpop.xlane.xlu0 %3775
          %v3777 = vmul.f32 %v3746, %v3696
          %v3778 = vmul.f32 %v3748, %v3696
          %v3779 = vmul.f32 %v3750, %v3696
          %v3780 = vmul.f32 %v3752, %v3696
          %v3781 = vmul.f32 %v3754, %v3696
          %v3782 = vmul.f32 %v3756, %v3696
          %v3783 = vmul.f32 %v3758, %v3696
          %v3784 = vmul.f32 %v3760, %v3696
          %v3785 = vmul.f32 %v3762, %v3696
          %v3786 = vmul.f32 %v3764, %v3696
          %v3787 = vmul.f32 %v3766, %v3696
          %v3788 = vmul.f32 %v3768, %v3696
          %v3789 = vmul.f32 %v3770, %v3696
          %v3790 = vmul.f32 %v3772, %v3696
          %v3791 = vmul.f32 %v3774, %v3696
          %v3792 = vmul.f32 %v3776, %v3696
          %v3793 = vadd.f32 %v3777, 1e-05
          %v3794 = vadd.f32 %v3778, 1e-05
          %v3795 = vadd.f32 %v3779, 1e-05
          %v3796 = vadd.f32 %v3780, 1e-05
          %v3797 = vadd.f32 %v3781, 1e-05
          %v3798 = vadd.f32 %v3782, 1e-05
          %v3799 = vadd.f32 %v3783, 1e-05
          %v3800 = vadd.f32 %v3784, 1e-05
          %v3801 = vadd.f32 %v3785, 1e-05
          %v3802 = vadd.f32 %v3786, 1e-05
          %v3803 = vadd.f32 %v3787, 1e-05
          %v3804 = vadd.f32 %v3788, 1e-05
          %v3805 = vadd.f32 %v3789, 1e-05
          %v3806 = vadd.f32 %v3790, 1e-05
          %v3807 = vadd.f32 %v3791, 1e-05
          %v3808 = vadd.f32 %v3792, 1e-05
          %v3809 = vrsqrt.pop %v3793
          %v3810 = vrsqrt.pop %v3794
          %v3811 = vrsqrt.pop %v3795
          %v3812 = vrsqrt.pop %v3796
          %v3813 = vrsqrt.pop %v3797
          %v3814 = vrsqrt.pop %v3798
          %v3815 = vrsqrt.pop %v3799
          %v3816 = vrsqrt.pop %v3800
          %v3817 = vrsqrt.pop %v3801
          %v3818 = vrsqrt.pop %v3802
          %v3819 = vrsqrt.pop %v3803
          %v3820 = vrsqrt.pop %v3804
          %v3821 = vrsqrt.pop %v3805
          %v3822 = vrsqrt.pop %v3806
          %v3823 = vrsqrt.pop %v3807
          %v3824 = vrsqrt.pop %v3808
          %v3825 = vmul.f32 %v3713, %v3809
          %v3826 = vmul.f32 %v3714, %v3810
          %v3827 = vmul.f32 %v3715, %v3811
          %v3828 = vmul.f32 %v3716, %v3812
          %v3829 = vmul.f32 %v3717, %v3813
          %v3830 = vmul.f32 %v3718, %v3814
          %v3831 = vmul.f32 %v3719, %v3815
          %v3832 = vmul.f32 %v3720, %v3816
          %v3833 = vmul.f32 %v3721, %v3817
          %v3834 = vmul.f32 %v3722, %v3818
          %v3835 = vmul.f32 %v3723, %v3819
          %v3836 = vmul.f32 %v3724, %v3820
          %v3837 = vmul.f32 %v3725, %v3821
          %v3838 = vmul.f32 %v3726, %v3822
          %v3839 = vmul.f32 %v3727, %v3823
          %v3840 = vmul.f32 %v3728, %v3824
          %v3841 = vld [vmem:[%s6] sm:$0x1]
          %v3843 = vlaneseq
          %v3844 = vshrl.u32 %v3843, 7
          %v3845 = vsub.s32 0, %v3844
          %v3846 = vrot.slane %v3841, %v3845
          %v3848 = vmul.f32 %v3825, %v3846
          %v3849 = vmul.f32 %v3826, %v3846
          %v3850 = vmul.f32 %v3827, %v3846
          %v3851 = vmul.f32 %v3828, %v3846
          %v3852 = vmul.f32 %v3829, %v3846
          %v3853 = vmul.f32 %v3830, %v3846
          %v3854 = vmul.f32 %v3831, %v3846
          %v3855 = vmul.f32 %v3832, %v3846
          %v3856 = vmul.f32 %v3833, %v3846
          %v3857 = vmul.f32 %v3834, %v3846
          %v3858 = vmul.f32 %v3835, %v3846
          %v3859 = vmul.f32 %v3836, %v3846
          %v3860 = vmul.f32 %v3837, %v3846
          %v3861 = vmul.f32 %v3838, %v3846
          %v3862 = vmul.f32 %v3839, %v3846
          %v3863 = vmul.f32 %v3840, %v3846
          %v3864 = vld [vmem:[%s7] sm:$0x1]
          %v3866 = vlaneseq
          %v3867 = vshrl.u32 %v3866, 7
          %v3868 = vsub.s32 0, %v3867
          %v3869 = vrot.slane %v3864, %v3868
          %v3871 = vadd.f32 %v3848, %v3869
          %v3872 = vadd.f32 %v3849, %v3869
          %v3873 = vadd.f32 %v3850, %v3869
          %v3874 = vadd.f32 %v3851, %v3869
          %v3875 = vadd.f32 %v3852, %v3869
          %v3876 = vadd.f32 %v3853, %v3869
          %v3877 = vadd.f32 %v3854, %v3869
          %v3878 = vadd.f32 %v3855, %v3869
          %v3879 = vadd.f32 %v3856, %v3869
          %v3880 = vadd.f32 %v3857, %v3869
          %v3881 = vadd.f32 %v3858, %v3869
          %v3882 = vadd.f32 %v3859, %v3869
          %v3883 = vadd.f32 %v3860, %v3869
          %v3884 = vadd.f32 %v3861, %v3869
          %v3885 = vadd.f32 %v3862, %v3869
          %v3886 = vadd.f32 %v3863, %v3869
          %3887 = vst [vmem:[%s882] sm:$0xff] %v3871
          %3888 = vst [vmem:[%s882 + $0x8] sm:$0xff] %v3872
          %3889 = vst [vmem:[%s882 + $0x10] sm:$0xff] %v3873
          %3890 = vst [vmem:[%s882 + $0x18] sm:$0xff] %v3874
          %3891 = vst [vmem:[%s882 + $0x20] sm:$0xff] %v3875
          %3892 = vst [vmem:[%s882 + $0x28] sm:$0xff] %v3876
          %3893 = vst [vmem:[%s882 + $0x30] sm:$0xff] %v3877
          %3894 = vst [vmem:[%s882 + $0x38] sm:$0xff] %v3878
          %3895 = vst [vmem:[%s882 + $0x40] sm:$0xff] %v3879
          %3896 = vst [vmem:[%s882 + $0x48] sm:$0xff] %v3880
          %3897 = vst [vmem:[%s882 + $0x50] sm:$0xff] %v3881
          %3898 = vst [vmem:[%s882 + $0x58] sm:$0xff] %v3882
          %3899 = vst [vmem:[%s882 + $0x60] sm:$0xff] %v3883
          %3900 = vst [vmem:[%s882 + $0x68] sm:$0xff] %v3884
          %3901 = vst [vmem:[%s882 + $0x70] sm:$0xff] %v3885
          %3902 = vst [vmem:[%s882 + $0x78] sm:$0xff] %v3886
        $region196: #{tpu_custom_call.1} parent=167 // pred_fallthru
          _
        %s3903 = sand.u32 %s215, 1
        %s3904 = scalar_lea.sflag [#allocation11], %s3903
        %s3905 = sand.u32 %s215, 1
        %s3906 = smul.addr %s3905, 128
        %s3907 = scalar_lea.vmem [#allocation10], %s3906
        // Predicated region
        $region197: #{tpu_custom_call.1} parent=167 // pred_check
          %p3908 = pneg %p225
        $region198: #{tpu_custom_call.1} parent=167 // pred_check_branch
          %3910 = sbr.rel (%p3908) target = $region200
        $region199: #{tpu_custom_call.1} parent=167 // pred_region
          %s3911 = smul.u32 16, %s30
          %s3913 = ssub.s32 2048, 2048
          %3914 = vsyncadd %s3904, %s3913
          %s3915 = smul.addr %s3911, 128
          %s3916 = scalar_lea.hbm %s8, %s3915
          %s3917 = sshll.u32 %s3907, 4
          %s3918 = int_to_ptr.vmem [resolvable:$true] %s3917
          %3923 = dma.vmem_to_hbm [thread:$0]  %s3918, 2048, %s3916, %s3904, 128, 128, 8
        $region200: #{tpu_custom_call.1} parent=167 // pred_fallthru
          _
      $region168: #{tpu_custom_call.1} parent=5 // pred_fallthru
        _
      %p3924 = scmp.le.s32.totalorder 2, %s21
      // Predicated region
      $region201: #{tpu_custom_call.1} parent=5 // pred_check
        %p3925 = pneg %p3924
      $region202: #{tpu_custom_call.1} parent=5 // pred_check_branch
        %3927 = sbr.rel (%p3925) target = $region204
      $region203: #{tpu_custom_call.1} parent=5 // pred_region
        %s3928 = ssub.s32 %s21, 2
        // Predicated region
        $region205: #{tpu_custom_call.1} parent=203 // pred_check
          %p3929 = pneg %p231
        $region206: #{tpu_custom_call.1} parent=203 // pred_check_branch
          %3931 = sbr.rel (%p3929) target = $region208
        $region207: #{tpu_custom_call.1} parent=203 // pred_region
          %s3932 = sand.u32 %s216, 1
          %s3933 = scalar_lea.sflag [#allocation11], %s3932
          %s3934 = sand.u32 %s216, 1
          %s3935 = smul.addr %s3934, 128
          %s3936 = scalar_lea.vmem [#allocation10], %s3935
          %3937 = dma.done %s3933, 2048
        $region208: #{tpu_custom_call.1} parent=203 // pred_fallthru
          _
      $region204: #{tpu_custom_call.1} parent=5 // pred_fallthru
        _
    $region6: #{tpu_custom_call.1} parent=1 // loop_footer
      %s25 = sadd.s32 1, %s21
    $region7: #{tpu_custom_call.1} parent=1 // loop_footer_branch
      %20 = sbr.rel target = $region3
    $region8: #{tpu_custom_call.1} parent=1 // loop_exit
      _
    %3938 = vsyncpa [#allocation11], 1
    %s3939 = scalar_lea.sflag [#allocation11], 1
    %3940 = vsyncpa %s3939, 1

</llo_original>
